<compile_context>
chip_gen: v6e
topology: v6e:2x2x1
jax: 0.10.0
libtpu: 0.0.40
codegen_flags: <defaults>
</compile_context>

<pallas_src>
import functools

import jax
import jax.numpy as jnp
from jax.experimental import pallas as pl
from jax.experimental.pallas import tpu as pltpu

# Full-f32 matmuls everywhere (reference, parameter fold) so the comparison
# against the Pallas kernel (which pins HIGHEST explicitly) is deterministic.
jax.config.update("jax_default_matmul_precision", "highest")

_HI = jax.lax.Precision.HIGHEST


# ---------------------------------------------------------------------------
# Kernel
# ---------------------------------------------------------------------------
def drrnn_kernel(x_ref, w01_ref, wpack_ref, bpack_ref, wl_ref, bl_ref, o_ref,
                 *, scalar_head: bool):
    """Whole MLP hot path in VMEM for one [features, batch_tile] tile.

    x_ref    : (in_N, bt)        input tile (batch on lanes)
    w01_ref  : (m, in_N)         folded Linear0 + Block1.L1 weight
    wpack_ref: (3, m, m)         [Block1.L2, Block2.L1, Block2.L2] weights
    bpack_ref: (4, m, 1)         [b01, b1b, b2a, b2b] biases (broadcast on lanes)
    wl_ref   : (m, out_N)        final Linear weight (transposed)
    bl_ref   : (out_N, 1)        final Linear bias
    o_ref    : (out_N, bt)       output tile (batch on lanes)
    """
    x = x_ref[...]                      # (in_N, bt)
    w01 = w01_ref[...]                  # (m, in_N)
    in_N = x.shape[0]

    # First layer (Linear0 folded into Block1.L1): K = in_N is tiny (2), so
    # use VPU broadcast multiply-adds (outer products of w01[:, k] with x row
    # k) instead of a K=2 MXU dot — avoids the MXU start-up bubble and the
    # <2% MXU-array utilisation of a K=2 matmul.
    z = w01[:, 0:1] * x[0:1, :] + bpack_ref[0]
    for k in range(1, in_N):
        z = z + w01[:, k:k + 1] * x[k:k + 1, :]
    t = jnp.tanh(z)

    # Block 1.L2 / Block 2.L1 / Block 2.L2 — real m x m MXU matmuls, precision
    # pinned so the pass count / accuracy is generation-independent.
    h = jnp.tanh(jnp.dot(wpack_ref[0], t, precision=_HI,
                         preferred_element_type=jnp.float32) + bpack_ref[1])
    t = jnp.tanh(jnp.dot(wpack_ref[1], h, precision=_HI,
                         preferred_element_type=jnp.float32) + bpack_ref[2])
    h = jnp.tanh(jnp.dot(wpack_ref[2], t, precision=_HI,
                         preferred_element_type=jnp.float32) + bpack_ref[3])

    # Final Linear(m, out_N), no activation.
    if scalar_head:
        # out_N == 1: VPU multiply + cross-sublane reduce (keeps MXU free,
        # lane-dense (1, bt) result instead of an M=1 matmul).
        out = jnp.sum(h * wl_ref[...], axis=0, keepdims=True) + bl_ref[...]
    else:
        out = jax.lax.dot_general(
            wl_ref[...], h, (((0,), (0,)), ((), ())), precision=_HI,
            preferred_element_type=jnp.float32) + bl_ref[...]

    o_ref[...] = out.astype(o_ref.dtype)


# ---------------------------------------------------------------------------
# Tiling policy (generation-aware)
# ---------------------------------------------------------------------------
def _tensorcores_per_chip():
    """2 TensorCores per chip on v7x; v5e/v6e expose 1."""
    try:
        kind = jax.devices()[0].device_kind.lower()
    except Exception:
        return 1
    return 2 if "v7" in kind else 1


_MAX_TILE = 16384  # lanes per grid step; ~ a few MB of VMEM at m=32


def pick_batch_tile(B, num_tc=None):
    """Pick the batch (lane) tile.

    Single-TC chips (v5e/v6e): one full-batch grid step (each extra step is
    ~0.35 us of pure pipeline overhead on a serial grid). v7x: keep the grid a
    multiple of 2 so both TensorCores get work. Tiles are a multiple of 128
    (lane-aligned) unless they span the full batch.
    """
    if num_tc is None:
        num_tc = _tensorcores_per_chip()

    if num_tc > 1 and B >= 256 and B % 256 == 0:
        tile = min(B // 2, _MAX_TILE)
        tile = (tile // 128) * 128
        while tile >= 128:
            if B % tile == 0 and (B // tile) % 2 == 0:
                return tile
            tile -= 128
        return B

    # Single TensorCore: one step over the whole batch unless it exceeds the
    # per-step cap (then use the largest 128-multiple divisor <= cap).
    if B <= _MAX_TILE or B % 128 != 0:
        return B
    tile = _MAX_TILE
    while tile >= 128:
        if B % tile == 0:
            return tile
        tile -= 128
    return B


# ---------------------------------------------------------------------------
# One-time parameter preparation (do NOT re-run per forward call)
# ---------------------------------------------------------------------------
def prepare_params(params):
    """Fold the activation-free first Linear into Block1.L1 and pack weights.

    W01 = W1a @ W0, b01 = W1a @ b0 + b1a (exact in real arithmetic; done at
    HIGHEST f32 precision so the reordering error stays ~1e-7).
    """
    W0, b0 = params["W0"], params["b0"]          # (m, in_N), (m,)
    W1a, b1a = params["W1a"], params["b1a"]      # (m, m), (m,)
    W1b, b1b = params["W1b"], params["b1b"]
    W2a, b2a = params["W2a"], params["b2a"]
    W2b, b2b = params["W2b"], params["b2b"]
    WL, bL = params["WL"], params["bL"]          # (out_N, m), (out_N,)

    W01 = jnp.dot(W1a, W0, precision=_HI)                 # (m, in_N)
    b01 = jnp.dot(W1a, b0, precision=_HI) + b1a           # (m,)

    return dict(
        W01=W01,
        wpack=jnp.stack([W1b, W2a, W2b]),                  # (3, m, m)
        bpack=jnp.stack([b01, b1b, b2a, b2b])[:, :, None],  # (4, m, 1)
        wl_t=WL.T,                                         # (m, out_N)
        bl=bL[:, None],                                    # (out_N, 1)
    )


# ---------------------------------------------------------------------------
# Forward pass
# ---------------------------------------------------------------------------
@functools.partial(jax.jit, static_argnames=("batch_tile",))
def drrnn_forward(x, packed, batch_tile=None):
    """drrnn forward pass with Pallas. x: [B, in_N] -> [B, out_N]."""
    B, in_N = x.shape
    W01 = packed["W01"]
    wpack = packed["wpack"]
    bpack = packed["bpack"]
    wl_t = packed["wl_t"]
    bl = packed["bl"]
    out_N = wl_t.shape[1]

    if batch_tile is None:
        batch_tile = pick_batch_tile(B)
    assert B % batch_tile == 0, "batch must be divisible by batch_tile"
    assert batch_tile == B or batch_tile % 128 == 0, \
        "batch_tile must be a multiple of 128 (or the whole batch)"

    # Batch-on-lanes layout. The transpose is allowed to fuse into the
    # pallas_call's input handling via allow_input_fusion (operand 0).
    x_t = x.T                                             # (in_N, B)

    grid = (B // batch_tile,)
    in_specs = [
        pl.BlockSpec((in_N, batch_tile), lambda i: (0, i)),
        pl.BlockSpec(W01.shape, lambda i: (0, 0)),
        pl.BlockSpec(wpack.shape, lambda i: (0, 0, 0)),
        pl.BlockSpec(bpack.shape, lambda i: (0, 0, 0)),
        pl.BlockSpec(wl_t.shape, lambda i: (0, 0)),
        pl.BlockSpec(bl.shape, lambda i: (0, 0)),
    ]
    out_specs = pl.BlockSpec((out_N, batch_tile), lambda i: (0, i))

    kernel = functools.partial(drrnn_kernel, scalar_head=(out_N == 1))

    out_t = pl.pallas_call(
        kernel,
        out_shape=jax.ShapeDtypeStruct((out_N, B), x.dtype),
        grid_spec=pltpu.PrefetchScalarGridSpec(
            num_scalar_prefetch=0,
            grid=grid,
            in_specs=in_specs,
            out_specs=out_specs,
        ),
        compiler_params=pltpu.CompilerParams(
            # TODO(synk): on v7x, verify in a trace that both TCs run; if not,
            # switch this axis to pltpu.CORE_PARALLEL.
            dimension_semantics=("parallel",),
            allow_input_fusion=[True, False, False, False, False, False],
        ),
    )(x_t, W01, wpack, bpack, wl_t, bl)

    if out_N == 1:
        return out_t.reshape(B, 1)   # free reshape, not a transpose
    return out_t.T                   # (B, out_N)


# ---------------------------------------------------------------------------
# Init + reference (PyTorch-equivalent)
# ---------------------------------------------------------------------------
def init_linear(key, fan_in, fan_out, dtype=jnp.float32):
    """PyTorch nn.Linear default init: U(-1/sqrt(fan_in), 1/sqrt(fan_in)).
    Weight returned in PyTorch orientation [out_features, in_features]."""
    kw, kb = jax.random.split(key)
    bound = 1.0 / jnp.sqrt(jnp.asarray(fan_in, dtype))
    w = jax.random.uniform(kw, (fan_out, fan_in), dtype, -bound, bound)
    b = jax.random.uniform(kb, (fan_out,), dtype, -bound, bound)
    return w, b


def make_params(key, in_N, m, out_N):
    keys = jax.random.split(key, 6)
    W0, b0 = init_linear(keys[0], in_N, m)       # stack[0]
    W1a, b1a = init_linear(keys[1], m, m)        # stack[1].L1
    W1b, b1b = init_linear(keys[2], m, m)        # stack[1].L2
    W2a, b2a = init_linear(keys[3], m, m)        # stack[2].L1
    W2b, b2b = init_linear(keys[4], m, m)        # stack[2].L2
    WL, bL = init_linear(keys[5], m, out_N)      # stack[3]
    return dict(W0=W0, b0=b0,
                W1a=W1a, b1a=b1a, W1b=W1b, b1b=b1b,
                W2a=W2a, b2a=b2a, W2b=W2b, b2b=b2b,
                WL=WL, bL=bL)


def drrnn_reference(x, p):
    """Pure-JAX reference matching the PyTorch module exactly (unfused)."""
    h = x @ p["W0"].T + p["b0"]
    h = jnp.tanh(jnp.tanh(h @ p["W1a"].T + p["b1a"]) @ p["W1b"].T + p["b1b"])
    h = jnp.tanh(jnp.tanh(h @ p["W2a"].T + p["b2a"]) @ p["W2b"].T + p["b2b"])
    return h @ p["WL"].T + p["bL"]


if __name__ == "__main__":
    # van der Pol / Deep Ritz setup: 2-D state, width m=32, scalar output,
    # depth=2 blocks.
    in_N, m, out_N = 2, 32, 1
    batch = 512

    key = jax.random.PRNGKey(0)
    kx, kp = jax.random.split(key)
    x = jax.random.normal(kx, (batch, in_N), dtype=jnp.float32)
    params = make_params(kp, in_N, m, out_N)

    # One-time parameter fold/pack at init (kept out of the per-call path).
    packed = prepare_params(params)
    packed = jax.tree_util.tree_map(jax.block_until_ready, packed)

    batch_tile = pick_batch_tile(batch)          # generation-aware tiling
    out = drrnn_forward(x, packed, batch_tile=batch_tile)
    out = jax.block_until_ready(out)

    ref = drrnn_reference(x, params)
    assert out.shape == (batch, out_N)
    assert jnp.allclose(out, ref, atol=1e-5, rtol=1e-5), "mismatch vs reference"

    print("KERNEL_OK")
</pallas_src>

<mosaic_0001>
module attributes {stable_mosaic.version = 11 : i64} {
  func.func @drrnn_kernel(%arg0: i32, %arg1: memref<2x512xf32, #tpu.memory_space<vmem>>, %arg2: memref<32x2xf32, #tpu.memory_space<vmem>>, %arg3: memref<3x32x32xf32, #tpu.memory_space<vmem>>, %arg4: memref<4x32x1xf32, #tpu.memory_space<vmem>>, %arg5: memref<32x1xf32, #tpu.memory_space<vmem>>, %arg6: memref<1x1xf32, #tpu.memory_space<vmem>>, %arg7: memref<1x512xf32, #tpu.memory_space<vmem>>) attributes {dimension_semantics = [#tpu.dimension_semantics<parallel>], iteration_bounds = array<i64: 1>, scalar_prefetch = 0 : i64, scratch_operands = 0 : i64, tpu.core_type = #tpu.core_type<tc>, window_params = [{transform_indices = @transform_0, window_bounds = array<i64: 2, 512>}, {pipeline_mode = #tpu.pipeline_mode<synchronous>, transform_indices = @transform_1, window_bounds = array<i64: 32, 2>}, {pipeline_mode = #tpu.pipeline_mode<synchronous>, transform_indices = @transform_2, window_bounds = array<i64: 3, 32, 32>}, {pipeline_mode = #tpu.pipeline_mode<synchronous>, transform_indices = @transform_3, window_bounds = array<i64: 4, 32, 1>}, {pipeline_mode = #tpu.pipeline_mode<synchronous>, transform_indices = @transform_4, window_bounds = array<i64: 32, 1>}, {pipeline_mode = #tpu.pipeline_mode<synchronous>, transform_indices = @transform_5, window_bounds = array<i64: 1, 1>}, {transform_indices = @transform_6, window_bounds = array<i64: 1, 512>}]} {
    %c0 = arith.constant 0 : index
    %c0_0 = arith.constant 0 : index
    %0 = vector.load %arg1[%c0, %c0_0] : memref<2x512xf32, #tpu.memory_space<vmem>>, vector<2x512xf32>
    %c0_1 = arith.constant 0 : index
    %c0_2 = arith.constant 0 : index
    %1 = vector.load %arg2[%c0_1, %c0_2] : memref<32x2xf32, #tpu.memory_space<vmem>>, vector<32x2xf32>
    %2 = vector.extract_strided_slice %1 {offsets = [0, 0], sizes = [32, 1], strides = [1, 1]} : vector<32x2xf32> to vector<32x1xf32>
    %3 = vector.extract_strided_slice %0 {offsets = [0, 0], sizes = [1, 512], strides = [1, 1]} : vector<2x512xf32> to vector<1x512xf32>
    %4 = vector.broadcast %2 : vector<32x1xf32> to vector<32x512xf32>
    %5 = vector.broadcast %3 : vector<1x512xf32> to vector<32x512xf32>
    %6 = arith.mulf %4, %5 : vector<32x512xf32>
    %c0_3 = arith.constant 0 : index
    %c0_4 = arith.constant 0 : index
    %c0_5 = arith.constant 0 : index
    %7 = vector.load %arg4[%c0_3, %c0_4, %c0_5] : memref<4x32x1xf32, #tpu.memory_space<vmem>>, vector<1x32x1xf32>
    %8 = vector.shape_cast %7 : vector<1x32x1xf32> to vector<32x1xf32>
    %9 = vector.broadcast %8 : vector<32x1xf32> to vector<32x512xf32>
    %10 = arith.addf %6, %9 : vector<32x512xf32>
    %11 = vector.extract_strided_slice %1 {offsets = [0, 1], sizes = [32, 1], strides = [1, 1]} : vector<32x2xf32> to vector<32x1xf32>
    %12 = vector.extract_strided_slice %0 {offsets = [1, 0], sizes = [1, 512], strides = [1, 1]} : vector<2x512xf32> to vector<1x512xf32>
    %13 = vector.broadcast %11 : vector<32x1xf32> to vector<32x512xf32>
    %14 = vector.broadcast %12 : vector<1x512xf32> to vector<32x512xf32>
    %15 = arith.mulf %13, %14 : vector<32x512xf32>
    %16 = arith.addf %10, %15 : vector<32x512xf32>
    %17 = math.tanh %16 : vector<32x512xf32>
    %c0_6 = arith.constant 0 : index
    %c0_7 = arith.constant 0 : index
    %c0_8 = arith.constant 0 : index
    %18 = vector.load %arg3[%c0_6, %c0_7, %c0_8] : memref<3x32x32xf32, #tpu.memory_space<vmem>>, vector<1x32x32xf32>
    %19 = vector.shape_cast %18 : vector<1x32x32xf32> to vector<32x32xf32>
    %cst = arith.constant dense<0.000000e+00> : vector<32x512xf32>
    %20 = tpu.matmul %19, %17, %cst {dimension_numbers = #tpu.dot_dimension_numbers<[1], [0], [0], [1], [0, 0, 1, 1], [], []>, precision = #tpu.contract_precision<fp32>} : vector<32x32xf32>, vector<32x512xf32>, vector<32x512xf32> -> vector<32x512xf32>
    %c1 = arith.constant 1 : index
    %c0_9 = arith.constant 0 : index
    %c0_10 = arith.constant 0 : index
    %21 = vector.load %arg4[%c1, %c0_9, %c0_10] : memref<4x32x1xf32, #tpu.memory_space<vmem>>, vector<1x32x1xf32>
    %22 = vector.shape_cast %21 : vector<1x32x1xf32> to vector<32x1xf32>
    %23 = vector.broadcast %22 : vector<32x1xf32> to vector<32x512xf32>
    %24 = arith.addf %20, %23 : vector<32x512xf32>
    %25 = math.tanh %24 : vector<32x512xf32>
    %c1_11 = arith.constant 1 : index
    %c0_12 = arith.constant 0 : index
    %c0_13 = arith.constant 0 : index
    %26 = vector.load %arg3[%c1_11, %c0_12, %c0_13] : memref<3x32x32xf32, #tpu.memory_space<vmem>>, vector<1x32x32xf32>
    %27 = vector.shape_cast %26 : vector<1x32x32xf32> to vector<32x32xf32>
    %cst_14 = arith.constant dense<0.000000e+00> : vector<32x512xf32>
    %28 = tpu.matmul %27, %25, %cst_14 {dimension_numbers = #tpu.dot_dimension_numbers<[1], [0], [0], [1], [0, 0, 1, 1], [], []>, precision = #tpu.contract_precision<fp32>} : vector<32x32xf32>, vector<32x512xf32>, vector<32x512xf32> -> vector<32x512xf32>
    %c2 = arith.constant 2 : index
    %c0_15 = arith.constant 0 : index
    %c0_16 = arith.constant 0 : index
    %29 = vector.load %arg4[%c2, %c0_15, %c0_16] : memref<4x32x1xf32, #tpu.memory_space<vmem>>, vector<1x32x1xf32>
    %30 = vector.shape_cast %29 : vector<1x32x1xf32> to vector<32x1xf32>
    %31 = vector.broadcast %30 : vector<32x1xf32> to vector<32x512xf32>
    %32 = arith.addf %28, %31 : vector<32x512xf32>
    %33 = math.tanh %32 : vector<32x512xf32>
    %c2_17 = arith.constant 2 : index
    %c0_18 = arith.constant 0 : index
    %c0_19 = arith.constant 0 : index
    %34 = vector.load %arg3[%c2_17, %c0_18, %c0_19] : memref<3x32x32xf32, #tpu.memory_space<vmem>>, vector<1x32x32xf32>
    %35 = vector.shape_cast %34 : vector<1x32x32xf32> to vector<32x32xf32>
    %cst_20 = arith.constant dense<0.000000e+00> : vector<32x512xf32>
    %36 = tpu.matmul %35, %33, %cst_20 {dimension_numbers = #tpu.dot_dimension_numbers<[1], [0], [0], [1], [0, 0, 1, 1], [], []>, precision = #tpu.contract_precision<fp32>} : vector<32x32xf32>, vector<32x512xf32>, vector<32x512xf32> -> vector<32x512xf32>
    %c3 = arith.constant 3 : index
    %c0_21 = arith.constant 0 : index
    %c0_22 = arith.constant 0 : index
    %37 = vector.load %arg4[%c3, %c0_21, %c0_22] : memref<4x32x1xf32, #tpu.memory_space<vmem>>, vector<1x32x1xf32>
    %38 = vector.shape_cast %37 : vector<1x32x1xf32> to vector<32x1xf32>
    %39 = vector.broadcast %38 : vector<32x1xf32> to vector<32x512xf32>
    %40 = arith.addf %36, %39 : vector<32x512xf32>
    %41 = math.tanh %40 : vector<32x512xf32>
    %c0_23 = arith.constant 0 : index
    %c0_24 = arith.constant 0 : index
    %42 = vector.load %arg5[%c0_23, %c0_24] : memref<32x1xf32, #tpu.memory_space<vmem>>, vector<32x1xf32>
    %43 = vector.broadcast %42 : vector<32x1xf32> to vector<32x512xf32>
    %44 = arith.mulf %41, %43 : vector<32x512xf32>
    %cst_25 = arith.constant dense<0.000000e+00> : vector<512xf32>
    %45 = vector.multi_reduction <add>, %44, %cst_25 [0] : vector<32x512xf32> to vector<512xf32>
    %46 = vector.shape_cast %45 : vector<512xf32> to vector<1x512xf32>
    %c0_26 = arith.constant 0 : index
    %c0_27 = arith.constant 0 : index
    %47 = vector.load %arg6[%c0_26, %c0_27] : memref<1x1xf32, #tpu.memory_space<vmem>>, vector<1x1xf32>
    %48 = vector.broadcast %47 : vector<1x1xf32> to vector<1x512xf32>
    %49 = arith.addf %46, %48 : vector<1x512xf32>
    %c0_28 = arith.constant 0 : index
    %c0_29 = arith.constant 0 : index
    %50 = vector.load %arg7[%c0_28, %c0_29] : memref<1x512xf32, #tpu.memory_space<vmem>>, vector<1x512xf32>
    tpu.vector_store %arg7[%c0_28, %c0_29], %49 {strides = array<i32>} : memref<1x512xf32, #tpu.memory_space<vmem>>, vector<1x512xf32>,
    return
  }
  func.func @transform_0(%arg0: i32) -> (i32, i32) {
    %c0_i32 = arith.constant 0 : i32
    %c0_i32_0 = arith.constant 0 : i32
    return %c0_i32, %arg0 : i32, i32
  }
  func.func @transform_1(%arg0: i32) -> (i32, i32) {
    %c0_i32 = arith.constant 0 : i32
    %c0_i32_0 = arith.constant 0 : i32
    %c0_i32_1 = arith.constant 0 : i32
    return %c0_i32, %c0_i32_0 : i32, i32
  }
  func.func @transform_2(%arg0: i32) -> (i32, i32, i32) {
    %c0_i32 = arith.constant 0 : i32
    %c0_i32_0 = arith.constant 0 : i32
    %c0_i32_1 = arith.constant 0 : i32
    %c0_i32_2 = arith.constant 0 : i32
    return %c0_i32, %c0_i32_0, %c0_i32_1 : i32, i32, i32
  }
  func.func @transform_3(%arg0: i32) -> (i32, i32, i32) {
    %c0_i32 = arith.constant 0 : i32
    %c0_i32_0 = arith.constant 0 : i32
    %c0_i32_1 = arith.constant 0 : i32
    %c0_i32_2 = arith.constant 0 : i32
    return %c0_i32, %c0_i32_0, %c0_i32_1 : i32, i32, i32
  }
  func.func @transform_4(%arg0: i32) -> (i32, i32) {
    %c0_i32 = arith.constant 0 : i32
    %c0_i32_0 = arith.constant 0 : i32
    %c0_i32_1 = arith.constant 0 : i32
    return %c0_i32, %c0_i32_0 : i32, i32
  }
  func.func @transform_5(%arg0: i32) -> (i32, i32) {
    %c0_i32 = arith.constant 0 : i32
    %c0_i32_0 = arith.constant 0 : i32
    %c0_i32_1 = arith.constant 0 : i32
    return %c0_i32, %c0_i32_0 : i32, i32
  }
  func.func @transform_6(%arg0: i32) -> (i32, i32) {
    %c0_i32 = arith.constant 0 : i32
    %c0_i32_0 = arith.constant 0 : i32
    return %c0_i32, %arg0 : i32, i32
  }
}

</mosaic_0001>

<llo_original>
// kernel: drrnn_forward.2
$region0: #{drrnn_forward.2}
  #allocation0 [shape = 'u32[]', space=smem, size = 0x4, offset = 0x4, fixed_abs, tag = 'smem constant byte address 0x4 - core index']
  #allocation1 [shape = 'u32[144,128]{1,0:T(1,128)}', space=vmem, size = 0x12000, scoped, tag = 'internal scratch']
  #allocation2 [shape = 'f32[1,1]{1,0:T(1,128)S(1)}', space=vmem, size = 0x200, scoped, tag = 'scoped memory for drrnn_forward.2']
  %s0 = inlined_call_operand.vmem [shape: f32[32,2], index: 0, kind: input, shape index: {}]
  %s1 = inlined_call_operand.vmem [shape: f32[3,32,32], index: 1, kind: input, shape index: {}]
  %s2 = inlined_call_operand.vmem [shape: f32[4,32,1], index: 2, kind: input, shape index: {}]
  %s3 = inlined_call_operand.vmem [shape: f32[32,1], index: 3, kind: input, shape index: {}]
  %s4 = inlined_call_operand.<no memory space> [shape: f32[1,1], index: 4, kind: input, shape index: {}]
  %s5 = inlined_call_operand.vmem [shape: f32[512,2], index: 5, kind: input, shape index: {}]
  %s6 = inlined_call_operand.hbm [shape: f32[1,512], index: 6, kind: output, shape index: {}]
  %s7 = sld [smem:[#allocation0]]
  $region34: #{drrnn_forward.2} parent=0
    _
  %s9 = ssub.s32 1, %s7
  %s10 = scalar_select 0, %s9, %s7
  %v11 = vstv %s4
  %12 = vst [vmem:[#allocation2] sm:$0x1] %v11
  $region1: #{drrnn_forward.2} parent=0
    #allocation3 [shape = 'u8[2048]{0}', space=vmem, size = 0x800, scoped, tag = 'output window, operand 0, single buffered']
    #allocation4 [shape = 's32[1]{0}', space=sflag, size = 0x4, scoped, tag = 'scoped memory for drrnn_forward.2']
    #allocation5 [shape = 'u8[4096]{0}', space=vmem, size = 0x1000, dematerialized = true, scoped, tag = 'FusionAdapter Buffer %fusion.1 = f32[2,512]{1,0:T(2,128)} fusion(%param_5.1), kind=kLoop, calls=%fused_computation.1.clone, metadata={op_name="jit(drrnn_forward)/transpose" stack_frame_id=7}']
    %13 = vsyncpa [#allocation4], 0
    // Predicated region
    $region2: #{drrnn_forward.2} parent=1 // pred_check
      _
    $region3: #{drrnn_forward.2} parent=1 // pred_check_branch
      %15 = sbr.rel (0) target = $region5
    $region4: #{drrnn_forward.2} parent=1 // pred_region
      _
    $region5: #{drrnn_forward.2} parent=1 // pred_fallthru
      _
    // Predicated region
    $region6: #{drrnn_forward.2} parent=1 // pred_check
      _
    $region7: #{drrnn_forward.2} parent=1 // pred_check_branch
      %17 = sbr.rel (0) target = $region9
    $region8: #{drrnn_forward.2} parent=1 // pred_region
      _
    $region9: #{drrnn_forward.2} parent=1 // pred_fallthru
      _
    // Predicated region
    $region10: #{drrnn_forward.2} parent=1 // pred_check
      _
    $region11: #{drrnn_forward.2} parent=1 // pred_check_branch
      %19 = sbr.rel (0) target = $region13
    $region12: #{drrnn_forward.2} parent=1 // pred_region
      _
    $region13: #{drrnn_forward.2} parent=1 // pred_fallthru
      _
    // Predicated region
    $region14: #{drrnn_forward.2} parent=1 // pred_check
      _
    $region15: #{drrnn_forward.2} parent=1 // pred_check_branch
      %21 = sbr.rel (0) target = $region17
    $region16: #{drrnn_forward.2} parent=1 // pred_region
      _
    $region17: #{drrnn_forward.2} parent=1 // pred_fallthru
      _
    // Predicated region
    $region18: #{drrnn_forward.2} parent=1 // pred_check
      _
    $region19: #{drrnn_forward.2} parent=1 // pred_check_branch
      %23 = sbr.rel (0) target = $region21
    $region20: #{drrnn_forward.2} parent=1 // pred_region
      _
    $region21: #{drrnn_forward.2} parent=1 // pred_fallthru
      _
    // Predicated region
    $region22: #{drrnn_forward.2} parent=1 // pred_check
      _
    $region23: #{drrnn_forward.2} parent=1 // pred_check_branch
      %25 = sbr.rel (0) target = $region25
    $region24: #{drrnn_forward.2} parent=1 // pred_region
      _
    $region25: #{drrnn_forward.2} parent=1 // pred_fallthru
      _
    %v26 = vld [vmem:[%s5] sm:$0x3]
    %s28 = ssub.s32 4, 1
    %29 = vst [vmem:[#allocation5] sm:%s28] %v26
    %s30 = scalar_lea.vmem %s5, 2
    %v31 = vld [vmem:[%s30] sm:$0x3]
    %s32 = scalar_lea.vmem [#allocation5], 2
    %s34 = ssub.s32 4, 1
    %35 = vst [vmem:[%s32] sm:%s34] %v31
    %s36 = scalar_lea.vmem %s5, 4
    %v37 = vld [vmem:[%s36] sm:$0x3]
    %s38 = scalar_lea.vmem [#allocation5], 4
    %s40 = ssub.s32 4, 1
    %41 = vst [vmem:[%s38] sm:%s40] %v37
    %s42 = scalar_lea.vmem %s5, 6
    %v43 = vld [vmem:[%s42] sm:$0x3]
    %s44 = scalar_lea.vmem [#allocation5], 6
    %s46 = ssub.s32 4, 1
    %47 = vst [vmem:[%s44] sm:%s46] %v43
    %v48 = vld [vmem:[#allocation5] sm:$0xff]
    %v49 = vld [vmem:[%s0] sm:$0xff]
    %v50 = vld [vmem:[%s0 + $0x8] sm:$0xff]
    %v51 = vld [vmem:[%s0 + $0x10] sm:$0xff]
    %v52 = vld [vmem:[%s0 + $0x18] sm:$0xff]
    %54 = vset.pattern.permute.xlu0 0
    %55 = vperm.xlu0 %54, %v49
    %v56 = vpop.permute.xlu0 %55
    %59 = vset.pattern.permute.xlu0 0
    %60 = vperm.xlu0 %59, %v50
    %v61 = vpop.permute.xlu0 %60
    %64 = vset.pattern.permute.xlu0 0
    %65 = vperm.xlu0 %64, %v51
    %v66 = vpop.permute.xlu0 %65
    %69 = vset.pattern.permute.xlu0 0
    %70 = vperm.xlu0 %69, %v52
    %v71 = vpop.permute.xlu0 %70
    %v74 = vlaneseq
    %v75 = vshrl.u32 %v74, 7
    %v76 = vsub.s32 0, %v75
    %v77 = vrot.slane %v48, %v76
    %v78 = vlaneseq
    %v79 = vshrl.u32 %v78, 7
    %v80 = vsub.s32 2, %v79
    %v81 = vrot.slane %v48, %v80
    %v82 = vlaneseq
    %v83 = vshrl.u32 %v82, 7
    %v84 = vsub.s32 4, %v83
    %v85 = vrot.slane %v48, %v84
    %v86 = vlaneseq
    %v87 = vshrl.u32 %v86, 7
    %v88 = vsub.s32 6, %v87
    %v89 = vrot.slane %v48, %v88
    %v94 = vlaneseq
    %v95 = vshrl.u32 %v94, 7
    %v96 = vsub.s32 0, %v95
    %v97 = vrot.slane %v77, %v96
    %v98 = vlaneseq
    %v99 = vshrl.u32 %v98, 7
    %v100 = vsub.s32 0, %v99
    %v101 = vrot.slane %v81, %v100
    %v102 = vlaneseq
    %v103 = vshrl.u32 %v102, 7
    %v104 = vsub.s32 0, %v103
    %v105 = vrot.slane %v85, %v104
    %v106 = vlaneseq
    %v107 = vshrl.u32 %v106, 7
    %v108 = vsub.s32 0, %v107
    %v109 = vrot.slane %v89, %v108
    %v110 = vmul.f32 %v56, %v97
    %v111 = vmul.f32 %v56, %v101
    %v112 = vmul.f32 %v56, %v105
    %v113 = vmul.f32 %v56, %v109
    %v114 = vmul.f32 %v61, %v97
    %v115 = vmul.f32 %v61, %v101
    %v116 = vmul.f32 %v61, %v105
    %v117 = vmul.f32 %v61, %v109
    %v118 = vmul.f32 %v66, %v97
    %v119 = vmul.f32 %v66, %v101
    %v120 = vmul.f32 %v66, %v105
    %v121 = vmul.f32 %v66, %v109
    %v122 = vmul.f32 %v71, %v97
    %v123 = vmul.f32 %v71, %v101
    %v124 = vmul.f32 %v71, %v105
    %v125 = vmul.f32 %v71, %v109
    %v126 = vld [vmem:[%s2] sm:$0xff]
    %v127 = vld [vmem:[%s2 + $0x8] sm:$0xff]
    %v128 = vld [vmem:[%s2 + $0x10] sm:$0xff]
    %v129 = vld [vmem:[%s2 + $0x18] sm:$0xff]
    %131 = vset.pattern.permute.xlu0 0
    %132 = vperm.xlu0 %131, %v126
    %v133 = vpop.permute.xlu0 %132
    %136 = vset.pattern.permute.xlu0 0
    %137 = vperm.xlu0 %136, %v127
    %v138 = vpop.permute.xlu0 %137
    %141 = vset.pattern.permute.xlu0 0
    %142 = vperm.xlu0 %141, %v128
    %v143 = vpop.permute.xlu0 %142
    %146 = vset.pattern.permute.xlu0 0
    %147 = vperm.xlu0 %146, %v129
    %v148 = vpop.permute.xlu0 %147
    %v150 = vadd.f32 %v110, %v133
    %v151 = vadd.f32 %v111, %v133
    %v152 = vadd.f32 %v112, %v133
    %v153 = vadd.f32 %v113, %v133
    %v154 = vadd.f32 %v114, %v138
    %v155 = vadd.f32 %v115, %v138
    %v156 = vadd.f32 %v116, %v138
    %v157 = vadd.f32 %v117, %v138
    %v158 = vadd.f32 %v118, %v143
    %v159 = vadd.f32 %v119, %v143
    %v160 = vadd.f32 %v120, %v143
    %v161 = vadd.f32 %v121, %v143
    %v162 = vadd.f32 %v122, %v148
    %v163 = vadd.f32 %v123, %v148
    %v164 = vadd.f32 %v124, %v148
    %v165 = vadd.f32 %v125, %v148
    %166 = vset.pattern.permute.xlu0 1
    %167 = vperm.xlu0 %166, %v49
    %v168 = vpop.permute.xlu0 %167
    %170 = vset.pattern.permute.xlu0 1
    %171 = vperm.xlu0 %170, %v50
    %v172 = vpop.permute.xlu0 %171
    %174 = vset.pattern.permute.xlu0 1
    %175 = vperm.xlu0 %174, %v51
    %v176 = vpop.permute.xlu0 %175
    %178 = vset.pattern.permute.xlu0 1
    %179 = vperm.xlu0 %178, %v52
    %v180 = vpop.permute.xlu0 %179
    %v182 = vlaneseq
    %v183 = vshrl.u32 %v182, 7
    %v184 = vsub.s32 1, %v183
    %v185 = vrot.slane %v48, %v184
    %v186 = vlaneseq
    %v187 = vshrl.u32 %v186, 7
    %v188 = vsub.s32 3, %v187
    %v189 = vrot.slane %v48, %v188
    %v190 = vlaneseq
    %v191 = vshrl.u32 %v190, 7
    %v192 = vsub.s32 5, %v191
    %v193 = vrot.slane %v48, %v192
    %v194 = vlaneseq
    %v195 = vshrl.u32 %v194, 7
    %v196 = vsub.s32 7, %v195
    %v197 = vrot.slane %v48, %v196
    %v202 = vlaneseq
    %v203 = vshrl.u32 %v202, 7
    %v204 = vsub.s32 1, %v203
    %v205 = vrot.slane %v185, %v204
    %v206 = vlaneseq
    %v207 = vshrl.u32 %v206, 7
    %v208 = vsub.s32 1, %v207
    %v209 = vrot.slane %v189, %v208
    %v210 = vlaneseq
    %v211 = vshrl.u32 %v210, 7
    %v212 = vsub.s32 1, %v211
    %v213 = vrot.slane %v193, %v212
    %v214 = vlaneseq
    %v215 = vshrl.u32 %v214, 7
    %v216 = vsub.s32 1, %v215
    %v217 = vrot.slane %v197, %v216
    %v218 = vmul.f32 %v168, %v205
    %v219 = vmul.f32 %v168, %v209
    %v220 = vmul.f32 %v168, %v213
    %v221 = vmul.f32 %v168, %v217
    %v222 = vmul.f32 %v172, %v205
    %v223 = vmul.f32 %v172, %v209
    %v224 = vmul.f32 %v172, %v213
    %v225 = vmul.f32 %v172, %v217
    %v226 = vmul.f32 %v176, %v205
    %v227 = vmul.f32 %v176, %v209
    %v228 = vmul.f32 %v176, %v213
    %v229 = vmul.f32 %v176, %v217
    %v230 = vmul.f32 %v180, %v205
    %v231 = vmul.f32 %v180, %v209
    %v232 = vmul.f32 %v180, %v213
    %v233 = vmul.f32 %v180, %v217
    %v234 = vadd.f32 %v150, %v218
    %v235 = vadd.f32 %v151, %v219
    %v236 = vadd.f32 %v152, %v220
    %v237 = vadd.f32 %v153, %v221
    %v238 = vadd.f32 %v154, %v222
    %v239 = vadd.f32 %v155, %v223
    %v240 = vadd.f32 %v156, %v224
    %v241 = vadd.f32 %v157, %v225
    %v242 = vadd.f32 %v158, %v226
    %v243 = vadd.f32 %v159, %v227
    %v244 = vadd.f32 %v160, %v228
    %v245 = vadd.f32 %v161, %v229
    %v246 = vadd.f32 %v162, %v230
    %v247 = vadd.f32 %v163, %v231
    %v248 = vadd.f32 %v164, %v232
    %v249 = vadd.f32 %v165, %v233
    %v250 = vtanh.pop %v234
    %v251 = vtanh.pop %v235
    %v252 = vtanh.pop %v236
    %v253 = vtanh.pop %v237
    %v254 = vtanh.pop %v238
    %v255 = vtanh.pop %v239
    %v256 = vtanh.pop %v240
    %v257 = vtanh.pop %v241
    %v258 = vtanh.pop %v242
    %v259 = vtanh.pop %v243
    %v260 = vtanh.pop %v244
    %v261 = vtanh.pop %v245
    %v262 = vtanh.pop %v246
    %v263 = vtanh.pop %v247
    %v264 = vtanh.pop %v248
    %v265 = vtanh.pop %v249
    %v266 = vld [vmem:[%s1] sm:$0xff]
    %v267 = vld [vmem:[%s1 + $0x8] sm:$0xff]
    %v268 = vld [vmem:[%s1 + $0x10] sm:$0xff]
    %v269 = vld [vmem:[%s1 + $0x18] sm:$0xff]
    %s270 = scalar_lea.vmem %s2, 32
    %v271 = vld [vmem:[%s270] sm:$0xff]
    %v272 = vld [vmem:[%s270 + $0x8] sm:$0xff]
    %v273 = vld [vmem:[%s270 + $0x10] sm:$0xff]
    %v274 = vld [vmem:[%s270 + $0x18] sm:$0xff]
    %276 = vset.pattern.permute.xlu0 0
    %277 = vperm.xlu0 %276, %v271
    %v278 = vpop.permute.xlu0 %277
    %281 = vset.pattern.permute.xlu0 0
    %282 = vperm.xlu0 %281, %v272
    %v283 = vpop.permute.xlu0 %282
    %286 = vset.pattern.permute.xlu0 0
    %287 = vperm.xlu0 %286, %v273
    %v288 = vpop.permute.xlu0 %287
    %291 = vset.pattern.permute.xlu0 0
    %292 = vperm.xlu0 %291, %v274
    %v293 = vpop.permute.xlu0 %292
    %vm295 = vcmask 261120
    %v297 = vsel %vm295, %v266, 0
    %v300 = vsel %vm295, %v267, 0
    %v303 = vsel %vm295, %v268, 0
    %v306 = vsel %vm295, %v269, 0
    %308 = vmatprep.subr.mxu0 0.0
    %309 = vmatpush1.msra.mxu0 0.0
    %310 = vmatprep.subr.mxu0 0.0
    %311 = vmatpush1.msra.mxu0 0.0
    %312 = vmatprep.subr.mxu0 0.0
    %313 = vmatpush1.msra.mxu0 0.0
    %314 = vmatprep.subr.mxu0 0.0
    %315 = vmatpush1.msra.mxu0 0.0
    %316 = vmatprep.subr.mxu0 0.0
    %317 = vmatpush1.msra.mxu0 0.0
    %318 = vmatprep.subr.mxu0 0.0
    %319 = vmatpush1.msra.mxu0 0.0
    %320 = vmatprep.subr.mxu0 0.0
    %321 = vmatpush1.msra.mxu0 0.0
    %322 = vmatprep.subr.mxu0 0.0
    %323 = vmatpush1.msra.mxu0 0.0
    %324 = vmatprep.subr.mxu0 0.0
    %325 = vmatpush1.msra.mxu0 0.0
    %326 = vmatprep.subr.mxu0 0.0
    %327 = vmatpush1.msra.mxu0 0.0
    %328 = vmatprep.subr.mxu0 0.0
    %329 = vmatpush1.msra.mxu0 0.0
    %330 = vmatprep.subr.mxu0 0.0
    %331 = vmatpush1.msra.mxu0 0.0
    %v332 = vand.u32 %v263, 4294901760
    %333 = vmatprep.subr.mxu0 %v332
    %v334 = vand.u32 %v262, 4294901760
    %335 = vmatpush1.msra.mxu0 %v334
    %v336 = vand.u32 %v259, 4294901760
    %337 = vmatprep.subr.mxu0 %v336
    %v338 = vand.u32 %v258, 4294901760
    %339 = vmatpush1.msra.mxu0 %v338
    %v340 = vand.u32 %v255, 4294901760
    %341 = vmatprep.subr.mxu0 %v340
    %v342 = vand.u32 %v254, 4294901760
    %343 = vmatpush1.msra.mxu0 %v342
    %v344 = vand.u32 %v251, 4294901760
    %345 = vmatprep.subr.mxu0 %v344
    %v346 = vand.u32 %v250, 4294901760
    %347 = vmatpush1.msra.mxu0 %v346
    %348 = vmatprep.subr.mxu0 0.0
    %349 = vmatpush2.msra.mxu0 0.0
    %350 = vmatprep.subr.mxu0 0.0
    %351 = vmatpush2.msra.mxu0 0.0
    %352 = vmatprep.subr.mxu0 0.0
    %353 = vmatpush2.msra.mxu0 0.0
    %354 = vmatprep.subr.mxu0 0.0
    %355 = vmatpush2.msra.mxu0 0.0
    %356 = vmatprep.subr.mxu0 0.0
    %357 = vmatpush2.msra.mxu0 0.0
    %358 = vmatprep.subr.mxu0 0.0
    %359 = vmatpush2.msra.mxu0 0.0
    %360 = vmatprep.subr.mxu0 0.0
    %361 = vmatpush2.msra.mxu0 0.0
    %362 = vmatprep.subr.mxu0 0.0
    %363 = vmatpush2.msra.mxu0 0.0
    %364 = vmatprep.subr.mxu0 0.0
    %365 = vmatpush2.msra.mxu0 0.0
    %366 = vmatprep.subr.mxu0 0.0
    %367 = vmatpush2.msra.mxu0 0.0
    %368 = vmatprep.subr.mxu0 0.0
    %369 = vmatpush2.msra.mxu0 0.0
    %370 = vmatprep.subr.mxu0 0.0
    %371 = vmatpush2.msra.mxu0 0.0
    %372 = vmatprep.subr.mxu0 0.0
    %373 = vmatpush2.msra.mxu0 0.0
    %374 = vmatprep.subr.mxu0 0.0
    %375 = vmatpush2.msra.mxu0 0.0
    %376 = vmatprep.subr.mxu0 0.0
    %377 = vmatpush2.msra.mxu0 0.0
    %378 = vmatprep.subr.mxu0 0.0
    %379 = vmatpush2.msra.mxu0 0.0
    %380 = vmatprep.mubr.f32.mxu0 0.0
    %v381 = vand.u32 %v297, 4294901760
    %v382 = vsub.f32 %v297, %v381
    %v383 = vand.u32 %v382, 4294901760
    %v384 = vsub.f32 %v382, %v383
    %v385 = vand.u32 %v384, 4294901760
    %386 = vmatmul.mubr.f32.gmra.mxu0 %v385
    %v387 = vpop.f32.mrf.mxu0
    %v388 = vadd.f32 %v278, %v387
    %v389 = vpop.f32.mrf.mxu0
    %v390 = vadd.f32 %v278, %v389
    %391 = vmatprep.mubr.f32.mxu0 0.0
    %v392 = vand.u32 %v300, 4294901760
    %v393 = vsub.f32 %v300, %v392
    %v394 = vand.u32 %v393, 4294901760
    %v395 = vsub.f32 %v393, %v394
    %v396 = vand.u32 %v395, 4294901760
    %397 = vmatmul.mubr.f32.gmra.mxu0 %v396
    %v398 = vpop.f32.mrf.mxu0
    %v399 = vadd.f32 %v283, %v398
    %v400 = vpop.f32.mrf.mxu0
    %v401 = vadd.f32 %v283, %v400
    %402 = vmatprep.mubr.f32.mxu0 0.0
    %v403 = vand.u32 %v303, 4294901760
    %v404 = vsub.f32 %v303, %v403
    %v405 = vand.u32 %v404, 4294901760
    %v406 = vsub.f32 %v404, %v405
    %v407 = vand.u32 %v406, 4294901760
    %408 = vmatmul.mubr.f32.gmra.mxu0 %v407
    %v409 = vpop.f32.mrf.mxu0
    %v410 = vadd.f32 %v288, %v409
    %v411 = vpop.f32.mrf.mxu0
    %v412 = vadd.f32 %v288, %v411
    %413 = vmatprep.mubr.f32.mxu0 0.0
    %v414 = vand.u32 %v306, 4294901760
    %v415 = vsub.f32 %v306, %v414
    %v416 = vand.u32 %v415, 4294901760
    %v417 = vsub.f32 %v415, %v416
    %v418 = vand.u32 %v417, 4294901760
    %419 = vmatmul.mubr.f32.gmra.mxu0 %v418
    %v420 = vpop.f32.mrf.mxu0
    %v421 = vadd.f32 %v293, %v420
    %v422 = vpop.f32.mrf.mxu0
    %v423 = vadd.f32 %v293, %v422
    %424 = vdwg.mxu0
    %425 = vmatprep.subr.mxu0 0.0
    %426 = vmatpush1.msra.mxu0 0.0
    %427 = vmatprep.subr.mxu0 0.0
    %428 = vmatpush1.msra.mxu0 0.0
    %429 = vmatprep.subr.mxu0 0.0
    %430 = vmatpush1.msra.mxu0 0.0
    %431 = vmatprep.subr.mxu0 0.0
    %432 = vmatpush1.msra.mxu0 0.0
    %433 = vmatprep.subr.mxu0 0.0
    %434 = vmatpush1.msra.mxu0 0.0
    %435 = vmatprep.subr.mxu0 0.0
    %436 = vmatpush1.msra.mxu0 0.0
    %437 = vmatprep.subr.mxu0 0.0
    %438 = vmatpush1.msra.mxu0 0.0
    %439 = vmatprep.subr.mxu0 0.0
    %440 = vmatpush1.msra.mxu0 0.0
    %441 = vmatprep.subr.mxu0 0.0
    %442 = vmatpush1.msra.mxu0 0.0
    %443 = vmatprep.subr.mxu0 0.0
    %444 = vmatpush1.msra.mxu0 0.0
    %445 = vmatprep.subr.mxu0 0.0
    %446 = vmatpush1.msra.mxu0 0.0
    %447 = vmatprep.subr.mxu0 0.0
    %448 = vmatpush1.msra.mxu0 0.0
    %v449 = vand.u32 %v263, 4294901760
    %v450 = vsub.f32 %v263, %v449
    %v451 = vand.u32 %v450, 4294901760
    %v452 = vsub.f32 %v450, %v451
    %v453 = vand.u32 %v452, 4294901760
    %454 = vmatprep.subr.mxu0 %v453
    %v455 = vand.u32 %v262, 4294901760
    %v456 = vsub.f32 %v262, %v455
    %v457 = vand.u32 %v456, 4294901760
    %v458 = vsub.f32 %v456, %v457
    %v459 = vand.u32 %v458, 4294901760
    %460 = vmatpush1.msra.mxu0 %v459
    %v461 = vand.u32 %v259, 4294901760
    %v462 = vsub.f32 %v259, %v461
    %v463 = vand.u32 %v462, 4294901760
    %v464 = vsub.f32 %v462, %v463
    %v465 = vand.u32 %v464, 4294901760
    %466 = vmatprep.subr.mxu0 %v465
    %v467 = vand.u32 %v258, 4294901760
    %v468 = vsub.f32 %v258, %v467
    %v469 = vand.u32 %v468, 4294901760
    %v470 = vsub.f32 %v468, %v469
    %v471 = vand.u32 %v470, 4294901760
    %472 = vmatpush1.msra.mxu0 %v471
    %v473 = vand.u32 %v255, 4294901760
    %v474 = vsub.f32 %v255, %v473
    %v475 = vand.u32 %v474, 4294901760
    %v476 = vsub.f32 %v474, %v475
    %v477 = vand.u32 %v476, 4294901760
    %478 = vmatprep.subr.mxu0 %v477
    %v479 = vand.u32 %v254, 4294901760
    %v480 = vsub.f32 %v254, %v479
    %v481 = vand.u32 %v480, 4294901760
    %v482 = vsub.f32 %v480, %v481
    %v483 = vand.u32 %v482, 4294901760
    %484 = vmatpush1.msra.mxu0 %v483
    %v485 = vand.u32 %v251, 4294901760
    %v486 = vsub.f32 %v251, %v485
    %v487 = vand.u32 %v486, 4294901760
    %v488 = vsub.f32 %v486, %v487
    %v489 = vand.u32 %v488, 4294901760
    %490 = vmatprep.subr.mxu0 %v489
    %v491 = vand.u32 %v250, 4294901760
    %v492 = vsub.f32 %v250, %v491
    %v493 = vand.u32 %v492, 4294901760
    %v494 = vsub.f32 %v492, %v493
    %v495 = vand.u32 %v494, 4294901760
    %496 = vmatpush1.msra.mxu0 %v495
    %497 = vmatprep.subr.mxu0 0.0
    %498 = vmatpush2.msra.mxu0 0.0
    %499 = vmatprep.subr.mxu0 0.0
    %500 = vmatpush2.msra.mxu0 0.0
    %501 = vmatprep.subr.mxu0 0.0
    %502 = vmatpush2.msra.mxu0 0.0
    %503 = vmatprep.subr.mxu0 0.0
    %504 = vmatpush2.msra.mxu0 0.0
    %505 = vmatprep.subr.mxu0 0.0
    %506 = vmatpush2.msra.mxu0 0.0
    %507 = vmatprep.subr.mxu0 0.0
    %508 = vmatpush2.msra.mxu0 0.0
    %509 = vmatprep.subr.mxu0 0.0
    %510 = vmatpush2.msra.mxu0 0.0
    %511 = vmatprep.subr.mxu0 0.0
    %512 = vmatpush2.msra.mxu0 0.0
    %513 = vmatprep.subr.mxu0 0.0
    %514 = vmatpush2.msra.mxu0 0.0
    %515 = vmatprep.subr.mxu0 0.0
    %516 = vmatpush2.msra.mxu0 0.0
    %517 = vmatprep.subr.mxu0 0.0
    %518 = vmatpush2.msra.mxu0 0.0
    %519 = vmatprep.subr.mxu0 0.0
    %520 = vmatpush2.msra.mxu0 0.0
    %521 = vmatprep.subr.mxu0 0.0
    %522 = vmatpush2.msra.mxu0 0.0
    %523 = vmatprep.subr.mxu0 0.0
    %524 = vmatpush2.msra.mxu0 0.0
    %525 = vmatprep.subr.mxu0 0.0
    %526 = vmatpush2.msra.mxu0 0.0
    %527 = vmatprep.subr.mxu0 0.0
    %528 = vmatpush2.msra.mxu0 0.0
    %529 = vmatprep.mubr.f32.mxu0 0.0
    %v530 = vand.u32 %v297, 4294901760
    %531 = vmatmul.mubr.f32.gmra.mxu0 %v530
    %v532 = vpop.f32.mrf.mxu0
    %v533 = vadd.f32 %v388, %v532
    %v534 = vpop.f32.mrf.mxu0
    %v535 = vadd.f32 %v390, %v534
    %536 = vmatprep.mubr.f32.mxu0 0.0
    %v537 = vand.u32 %v300, 4294901760
    %538 = vmatmul.mubr.f32.gmra.mxu0 %v537
    %v539 = vpop.f32.mrf.mxu0
    %v540 = vadd.f32 %v399, %v539
    %v541 = vpop.f32.mrf.mxu0
    %v542 = vadd.f32 %v401, %v541
    %543 = vmatprep.mubr.f32.mxu0 0.0
    %v544 = vand.u32 %v303, 4294901760
    %545 = vmatmul.mubr.f32.gmra.mxu0 %v544
    %v546 = vpop.f32.mrf.mxu0
    %v547 = vadd.f32 %v410, %v546
    %v548 = vpop.f32.mrf.mxu0
    %v549 = vadd.f32 %v412, %v548
    %550 = vmatprep.mubr.f32.mxu0 0.0
    %v551 = vand.u32 %v306, 4294901760
    %552 = vmatmul.mubr.f32.gmra.mxu0 %v551
    %v553 = vpop.f32.mrf.mxu0
    %v554 = vadd.f32 %v421, %v553
    %v555 = vpop.f32.mrf.mxu0
    %v556 = vadd.f32 %v423, %v555
    %557 = vdwg.mxu0
    %558 = vmatprep.subr.mxu0 0.0
    %559 = vmatpush1.msra.mxu0 0.0
    %560 = vmatprep.subr.mxu0 0.0
    %561 = vmatpush1.msra.mxu0 0.0
    %562 = vmatprep.subr.mxu0 0.0
    %563 = vmatpush1.msra.mxu0 0.0
    %564 = vmatprep.subr.mxu0 0.0
    %565 = vmatpush1.msra.mxu0 0.0
    %566 = vmatprep.subr.mxu0 0.0
    %567 = vmatpush1.msra.mxu0 0.0
    %568 = vmatprep.subr.mxu0 0.0
    %569 = vmatpush1.msra.mxu0 0.0
    %570 = vmatprep.subr.mxu0 0.0
    %571 = vmatpush1.msra.mxu0 0.0
    %572 = vmatprep.subr.mxu0 0.0
    %573 = vmatpush1.msra.mxu0 0.0
    %574 = vmatprep.subr.mxu0 0.0
    %575 = vmatpush1.msra.mxu0 0.0
    %576 = vmatprep.subr.mxu0 0.0
    %577 = vmatpush1.msra.mxu0 0.0
    %578 = vmatprep.subr.mxu0 0.0
    %579 = vmatpush1.msra.mxu0 0.0
    %580 = vmatprep.subr.mxu0 0.0
    %581 = vmatpush1.msra.mxu0 0.0
    %v582 = vand.u32 %v263, 4294901760
    %v583 = vsub.f32 %v263, %v582
    %584 = vmatprep.subr.mxu0 %v583
    %v585 = vand.u32 %v262, 4294901760
    %v586 = vsub.f32 %v262, %v585
    %587 = vmatpush1.msra.mxu0 %v586
    %v588 = vand.u32 %v259, 4294901760
    %v589 = vsub.f32 %v259, %v588
    %590 = vmatprep.subr.mxu0 %v589
    %v591 = vand.u32 %v258, 4294901760
    %v592 = vsub.f32 %v258, %v591
    %593 = vmatpush1.msra.mxu0 %v592
    %v594 = vand.u32 %v255, 4294901760
    %v595 = vsub.f32 %v255, %v594
    %596 = vmatprep.subr.mxu0 %v595
    %v597 = vand.u32 %v254, 4294901760
    %v598 = vsub.f32 %v254, %v597
    %599 = vmatpush1.msra.mxu0 %v598
    %v600 = vand.u32 %v251, 4294901760
    %v601 = vsub.f32 %v251, %v600
    %602 = vmatprep.subr.mxu0 %v601
    %v603 = vand.u32 %v250, 4294901760
    %v604 = vsub.f32 %v250, %v603
    %605 = vmatpush1.msra.mxu0 %v604
    %606 = vmatprep.subr.mxu0 0.0
    %607 = vmatpush2.msra.mxu0 0.0
    %608 = vmatprep.subr.mxu0 0.0
    %609 = vmatpush2.msra.mxu0 0.0
    %610 = vmatprep.subr.mxu0 0.0
    %611 = vmatpush2.msra.mxu0 0.0
    %612 = vmatprep.subr.mxu0 0.0
    %613 = vmatpush2.msra.mxu0 0.0
    %614 = vmatprep.subr.mxu0 0.0
    %615 = vmatpush2.msra.mxu0 0.0
    %616 = vmatprep.subr.mxu0 0.0
    %617 = vmatpush2.msra.mxu0 0.0
    %618 = vmatprep.subr.mxu0 0.0
    %619 = vmatpush2.msra.mxu0 0.0
    %620 = vmatprep.subr.mxu0 0.0
    %621 = vmatpush2.msra.mxu0 0.0
    %622 = vmatprep.subr.mxu0 0.0
    %623 = vmatpush2.msra.mxu0 0.0
    %624 = vmatprep.subr.mxu0 0.0
    %625 = vmatpush2.msra.mxu0 0.0
    %626 = vmatprep.subr.mxu0 0.0
    %627 = vmatpush2.msra.mxu0 0.0
    %628 = vmatprep.subr.mxu0 0.0
    %629 = vmatpush2.msra.mxu0 0.0
    %630 = vmatprep.subr.mxu0 0.0
    %631 = vmatpush2.msra.mxu0 0.0
    %632 = vmatprep.subr.mxu0 0.0
    %633 = vmatpush2.msra.mxu0 0.0
    %634 = vmatprep.subr.mxu0 0.0
    %635 = vmatpush2.msra.mxu0 0.0
    %636 = vmatprep.subr.mxu0 0.0
    %637 = vmatpush2.msra.mxu0 0.0
    %638 = vmatprep.mubr.f32.mxu0 0.0
    %v639 = vand.u32 %v297, 4294901760
    %v640 = vsub.f32 %v297, %v639
    %641 = vmatmul.mubr.f32.gmra.mxu0 %v640
    %v642 = vpop.f32.mrf.mxu0
    %v643 = vadd.f32 %v533, %v642
    %v644 = vpop.f32.mrf.mxu0
    %v645 = vadd.f32 %v535, %v644
    %646 = vmatprep.mubr.f32.mxu0 0.0
    %v647 = vand.u32 %v300, 4294901760
    %v648 = vsub.f32 %v300, %v647
    %649 = vmatmul.mubr.f32.gmra.mxu0 %v648
    %v650 = vpop.f32.mrf.mxu0
    %v651 = vadd.f32 %v540, %v650
    %v652 = vpop.f32.mrf.mxu0
    %v653 = vadd.f32 %v542, %v652
    %654 = vmatprep.mubr.f32.mxu0 0.0
    %v655 = vand.u32 %v303, 4294901760
    %v656 = vsub.f32 %v303, %v655
    %657 = vmatmul.mubr.f32.gmra.mxu0 %v656
    %v658 = vpop.f32.mrf.mxu0
    %v659 = vadd.f32 %v547, %v658
    %v660 = vpop.f32.mrf.mxu0
    %v661 = vadd.f32 %v549, %v660
    %662 = vmatprep.mubr.f32.mxu0 0.0
    %v663 = vand.u32 %v306, 4294901760
    %v664 = vsub.f32 %v306, %v663
    %665 = vmatmul.mubr.f32.gmra.mxu0 %v664
    %v666 = vpop.f32.mrf.mxu0
    %v667 = vadd.f32 %v554, %v666
    %v668 = vpop.f32.mrf.mxu0
    %v669 = vadd.f32 %v556, %v668
    %670 = vdwg.mxu0
    %671 = vmatprep.subr.mxu0 0.0
    %672 = vmatpush1.msra.mxu0 0.0
    %673 = vmatprep.subr.mxu0 0.0
    %674 = vmatpush1.msra.mxu0 0.0
    %675 = vmatprep.subr.mxu0 0.0
    %676 = vmatpush1.msra.mxu0 0.0
    %677 = vmatprep.subr.mxu0 0.0
    %678 = vmatpush1.msra.mxu0 0.0
    %679 = vmatprep.subr.mxu0 0.0
    %680 = vmatpush1.msra.mxu0 0.0
    %681 = vmatprep.subr.mxu0 0.0
    %682 = vmatpush1.msra.mxu0 0.0
    %683 = vmatprep.subr.mxu0 0.0
    %684 = vmatpush1.msra.mxu0 0.0
    %685 = vmatprep.subr.mxu0 0.0
    %686 = vmatpush1.msra.mxu0 0.0
    %687 = vmatprep.subr.mxu0 0.0
    %688 = vmatpush1.msra.mxu0 0.0
    %689 = vmatprep.subr.mxu0 0.0
    %690 = vmatpush1.msra.mxu0 0.0
    %691 = vmatprep.subr.mxu0 0.0
    %692 = vmatpush1.msra.mxu0 0.0
    %693 = vmatprep.subr.mxu0 0.0
    %694 = vmatpush1.msra.mxu0 0.0
    %v695 = vand.u32 %v263, 4294901760
    %696 = vmatprep.subr.mxu0 %v695
    %v697 = vand.u32 %v262, 4294901760
    %698 = vmatpush1.msra.mxu0 %v697
    %v699 = vand.u32 %v259, 4294901760
    %700 = vmatprep.subr.mxu0 %v699
    %v701 = vand.u32 %v258, 4294901760
    %702 = vmatpush1.msra.mxu0 %v701
    %v703 = vand.u32 %v255, 4294901760
    %704 = vmatprep.subr.mxu0 %v703
    %v705 = vand.u32 %v254, 4294901760
    %706 = vmatpush1.msra.mxu0 %v705
    %v707 = vand.u32 %v251, 4294901760
    %708 = vmatprep.subr.mxu0 %v707
    %v709 = vand.u32 %v250, 4294901760
    %710 = vmatpush1.msra.mxu0 %v709
    %711 = vmatprep.subr.mxu0 0.0
    %712 = vmatpush2.msra.mxu0 0.0
    %713 = vmatprep.subr.mxu0 0.0
    %714 = vmatpush2.msra.mxu0 0.0
    %715 = vmatprep.subr.mxu0 0.0
    %716 = vmatpush2.msra.mxu0 0.0
    %717 = vmatprep.subr.mxu0 0.0
    %718 = vmatpush2.msra.mxu0 0.0
    %719 = vmatprep.subr.mxu0 0.0
    %720 = vmatpush2.msra.mxu0 0.0
    %721 = vmatprep.subr.mxu0 0.0
    %722 = vmatpush2.msra.mxu0 0.0
    %723 = vmatprep.subr.mxu0 0.0
    %724 = vmatpush2.msra.mxu0 0.0
    %725 = vmatprep.subr.mxu0 0.0
    %726 = vmatpush2.msra.mxu0 0.0
    %727 = vmatprep.subr.mxu0 0.0
    %728 = vmatpush2.msra.mxu0 0.0
    %729 = vmatprep.subr.mxu0 0.0
    %730 = vmatpush2.msra.mxu0 0.0
    %731 = vmatprep.subr.mxu0 0.0
    %732 = vmatpush2.msra.mxu0 0.0
    %733 = vmatprep.subr.mxu0 0.0
    %734 = vmatpush2.msra.mxu0 0.0
    %735 = vmatprep.subr.mxu0 0.0
    %736 = vmatpush2.msra.mxu0 0.0
    %737 = vmatprep.subr.mxu0 0.0
    %738 = vmatpush2.msra.mxu0 0.0
    %739 = vmatprep.subr.mxu0 0.0
    %740 = vmatpush2.msra.mxu0 0.0
    %741 = vmatprep.subr.mxu0 0.0
    %742 = vmatpush2.msra.mxu0 0.0
    %743 = vmatprep.mubr.f32.mxu0 0.0
    %v744 = vand.u32 %v297, 4294901760
    %v745 = vsub.f32 %v297, %v744
    %v746 = vand.u32 %v745, 4294901760
    %747 = vmatmul.mubr.f32.gmra.mxu0 %v746
    %v748 = vpop.f32.mrf.mxu0
    %v749 = vadd.f32 %v643, %v748
    %v750 = vpop.f32.mrf.mxu0
    %v751 = vadd.f32 %v645, %v750
    %752 = vmatprep.mubr.f32.mxu0 0.0
    %v753 = vand.u32 %v300, 4294901760
    %v754 = vsub.f32 %v300, %v753
    %v755 = vand.u32 %v754, 4294901760
    %756 = vmatmul.mubr.f32.gmra.mxu0 %v755
    %v757 = vpop.f32.mrf.mxu0
    %v758 = vadd.f32 %v651, %v757
    %v759 = vpop.f32.mrf.mxu0
    %v760 = vadd.f32 %v653, %v759
    %761 = vmatprep.mubr.f32.mxu0 0.0
    %v762 = vand.u32 %v303, 4294901760
    %v763 = vsub.f32 %v303, %v762
    %v764 = vand.u32 %v763, 4294901760
    %765 = vmatmul.mubr.f32.gmra.mxu0 %v764
    %v766 = vpop.f32.mrf.mxu0
    %v767 = vadd.f32 %v659, %v766
    %v768 = vpop.f32.mrf.mxu0
    %v769 = vadd.f32 %v661, %v768
    %770 = vmatprep.mubr.f32.mxu0 0.0
    %v771 = vand.u32 %v306, 4294901760
    %v772 = vsub.f32 %v306, %v771
    %v773 = vand.u32 %v772, 4294901760
    %774 = vmatmul.mubr.f32.gmra.mxu0 %v773
    %v775 = vpop.f32.mrf.mxu0
    %v776 = vadd.f32 %v667, %v775
    %v777 = vpop.f32.mrf.mxu0
    %v778 = vadd.f32 %v669, %v777
    %779 = vdwg.mxu0
    %780 = vmatprep.subr.mxu0 0.0
    %781 = vmatpush1.msra.mxu0 0.0
    %782 = vmatprep.subr.mxu0 0.0
    %783 = vmatpush1.msra.mxu0 0.0
    %784 = vmatprep.subr.mxu0 0.0
    %785 = vmatpush1.msra.mxu0 0.0
    %786 = vmatprep.subr.mxu0 0.0
    %787 = vmatpush1.msra.mxu0 0.0
    %788 = vmatprep.subr.mxu0 0.0
    %789 = vmatpush1.msra.mxu0 0.0
    %790 = vmatprep.subr.mxu0 0.0
    %791 = vmatpush1.msra.mxu0 0.0
    %792 = vmatprep.subr.mxu0 0.0
    %793 = vmatpush1.msra.mxu0 0.0
    %794 = vmatprep.subr.mxu0 0.0
    %795 = vmatpush1.msra.mxu0 0.0
    %796 = vmatprep.subr.mxu0 0.0
    %797 = vmatpush1.msra.mxu0 0.0
    %798 = vmatprep.subr.mxu0 0.0
    %799 = vmatpush1.msra.mxu0 0.0
    %800 = vmatprep.subr.mxu0 0.0
    %801 = vmatpush1.msra.mxu0 0.0
    %802 = vmatprep.subr.mxu0 0.0
    %803 = vmatpush1.msra.mxu0 0.0
    %v804 = vand.u32 %v263, 4294901760
    %v805 = vsub.f32 %v263, %v804
    %v806 = vand.u32 %v805, 4294901760
    %807 = vmatprep.subr.mxu0 %v806
    %v808 = vand.u32 %v262, 4294901760
    %v809 = vsub.f32 %v262, %v808
    %v810 = vand.u32 %v809, 4294901760
    %811 = vmatpush1.msra.mxu0 %v810
    %v812 = vand.u32 %v259, 4294901760
    %v813 = vsub.f32 %v259, %v812
    %v814 = vand.u32 %v813, 4294901760
    %815 = vmatprep.subr.mxu0 %v814
    %v816 = vand.u32 %v258, 4294901760
    %v817 = vsub.f32 %v258, %v816
    %v818 = vand.u32 %v817, 4294901760
    %819 = vmatpush1.msra.mxu0 %v818
    %v820 = vand.u32 %v255, 4294901760
    %v821 = vsub.f32 %v255, %v820
    %v822 = vand.u32 %v821, 4294901760
    %823 = vmatprep.subr.mxu0 %v822
    %v824 = vand.u32 %v254, 4294901760
    %v825 = vsub.f32 %v254, %v824
    %v826 = vand.u32 %v825, 4294901760
    %827 = vmatpush1.msra.mxu0 %v826
    %v828 = vand.u32 %v251, 4294901760
    %v829 = vsub.f32 %v251, %v828
    %v830 = vand.u32 %v829, 4294901760
    %831 = vmatprep.subr.mxu0 %v830
    %v832 = vand.u32 %v250, 4294901760
    %v833 = vsub.f32 %v250, %v832
    %v834 = vand.u32 %v833, 4294901760
    %835 = vmatpush1.msra.mxu0 %v834
    %836 = vmatprep.subr.mxu0 0.0
    %837 = vmatpush2.msra.mxu0 0.0
    %838 = vmatprep.subr.mxu0 0.0
    %839 = vmatpush2.msra.mxu0 0.0
    %840 = vmatprep.subr.mxu0 0.0
    %841 = vmatpush2.msra.mxu0 0.0
    %842 = vmatprep.subr.mxu0 0.0
    %843 = vmatpush2.msra.mxu0 0.0
    %844 = vmatprep.subr.mxu0 0.0
    %845 = vmatpush2.msra.mxu0 0.0
    %846 = vmatprep.subr.mxu0 0.0
    %847 = vmatpush2.msra.mxu0 0.0
    %848 = vmatprep.subr.mxu0 0.0
    %849 = vmatpush2.msra.mxu0 0.0
    %850 = vmatprep.subr.mxu0 0.0
    %851 = vmatpush2.msra.mxu0 0.0
    %852 = vmatprep.subr.mxu0 0.0
    %853 = vmatpush2.msra.mxu0 0.0
    %854 = vmatprep.subr.mxu0 0.0
    %855 = vmatpush2.msra.mxu0 0.0
    %856 = vmatprep.subr.mxu0 0.0
    %857 = vmatpush2.msra.mxu0 0.0
    %858 = vmatprep.subr.mxu0 0.0
    %859 = vmatpush2.msra.mxu0 0.0
    %860 = vmatprep.subr.mxu0 0.0
    %861 = vmatpush2.msra.mxu0 0.0
    %862 = vmatprep.subr.mxu0 0.0
    %863 = vmatpush2.msra.mxu0 0.0
    %864 = vmatprep.subr.mxu0 0.0
    %865 = vmatpush2.msra.mxu0 0.0
    %866 = vmatprep.subr.mxu0 0.0
    %867 = vmatpush2.msra.mxu0 0.0
    %868 = vmatprep.mubr.f32.mxu0 0.0
    %v869 = vand.u32 %v297, 4294901760
    %870 = vmatmul.mubr.f32.gmra.mxu0 %v869
    %v871 = vpop.f32.mrf.mxu0
    %v872 = vadd.f32 %v749, %v871
    %v873 = vpop.f32.mrf.mxu0
    %v874 = vadd.f32 %v751, %v873
    %875 = vmatprep.mubr.f32.mxu0 0.0
    %v876 = vand.u32 %v300, 4294901760
    %877 = vmatmul.mubr.f32.gmra.mxu0 %v876
    %v878 = vpop.f32.mrf.mxu0
    %v879 = vadd.f32 %v758, %v878
    %v880 = vpop.f32.mrf.mxu0
    %v881 = vadd.f32 %v760, %v880
    %882 = vmatprep.mubr.f32.mxu0 0.0
    %v883 = vand.u32 %v303, 4294901760
    %884 = vmatmul.mubr.f32.gmra.mxu0 %v883
    %v885 = vpop.f32.mrf.mxu0
    %v886 = vadd.f32 %v767, %v885
    %v887 = vpop.f32.mrf.mxu0
    %v888 = vadd.f32 %v769, %v887
    %889 = vmatprep.mubr.f32.mxu0 0.0
    %v890 = vand.u32 %v306, 4294901760
    %891 = vmatmul.mubr.f32.gmra.mxu0 %v890
    %v892 = vpop.f32.mrf.mxu0
    %v893 = vadd.f32 %v776, %v892
    %v894 = vpop.f32.mrf.mxu0
    %v895 = vadd.f32 %v778, %v894
    %896 = vdwg.mxu0
    %897 = vmatprep.subr.mxu0 0.0
    %898 = vmatpush1.msra.mxu0 0.0
    %899 = vmatprep.subr.mxu0 0.0
    %900 = vmatpush1.msra.mxu0 0.0
    %901 = vmatprep.subr.mxu0 0.0
    %902 = vmatpush1.msra.mxu0 0.0
    %903 = vmatprep.subr.mxu0 0.0
    %904 = vmatpush1.msra.mxu0 0.0
    %905 = vmatprep.subr.mxu0 0.0
    %906 = vmatpush1.msra.mxu0 0.0
    %907 = vmatprep.subr.mxu0 0.0
    %908 = vmatpush1.msra.mxu0 0.0
    %909 = vmatprep.subr.mxu0 0.0
    %910 = vmatpush1.msra.mxu0 0.0
    %911 = vmatprep.subr.mxu0 0.0
    %912 = vmatpush1.msra.mxu0 0.0
    %913 = vmatprep.subr.mxu0 0.0
    %914 = vmatpush1.msra.mxu0 0.0
    %915 = vmatprep.subr.mxu0 0.0
    %916 = vmatpush1.msra.mxu0 0.0
    %917 = vmatprep.subr.mxu0 0.0
    %918 = vmatpush1.msra.mxu0 0.0
    %919 = vmatprep.subr.mxu0 0.0
    %920 = vmatpush1.msra.mxu0 0.0
    %v921 = vand.u32 %v263, 4294901760
    %922 = vmatprep.subr.mxu0 %v921
    %v923 = vand.u32 %v262, 4294901760
    %924 = vmatpush1.msra.mxu0 %v923
    %v925 = vand.u32 %v259, 4294901760
    %926 = vmatprep.subr.mxu0 %v925
    %v927 = vand.u32 %v258, 4294901760
    %928 = vmatpush1.msra.mxu0 %v927
    %v929 = vand.u32 %v255, 4294901760
    %930 = vmatprep.subr.mxu0 %v929
    %v931 = vand.u32 %v254, 4294901760
    %932 = vmatpush1.msra.mxu0 %v931
    %v933 = vand.u32 %v251, 4294901760
    %934 = vmatprep.subr.mxu0 %v933
    %v935 = vand.u32 %v250, 4294901760
    %936 = vmatpush1.msra.mxu0 %v935
    %937 = vmatprep.subr.mxu0 0.0
    %938 = vmatpush2.msra.mxu0 0.0
    %939 = vmatprep.subr.mxu0 0.0
    %940 = vmatpush2.msra.mxu0 0.0
    %941 = vmatprep.subr.mxu0 0.0
    %942 = vmatpush2.msra.mxu0 0.0
    %943 = vmatprep.subr.mxu0 0.0
    %944 = vmatpush2.msra.mxu0 0.0
    %945 = vmatprep.subr.mxu0 0.0
    %946 = vmatpush2.msra.mxu0 0.0
    %947 = vmatprep.subr.mxu0 0.0
    %948 = vmatpush2.msra.mxu0 0.0
    %949 = vmatprep.subr.mxu0 0.0
    %950 = vmatpush2.msra.mxu0 0.0
    %951 = vmatprep.subr.mxu0 0.0
    %952 = vmatpush2.msra.mxu0 0.0
    %953 = vmatprep.subr.mxu0 0.0
    %954 = vmatpush2.msra.mxu0 0.0
    %955 = vmatprep.subr.mxu0 0.0
    %956 = vmatpush2.msra.mxu0 0.0
    %957 = vmatprep.subr.mxu0 0.0
    %958 = vmatpush2.msra.mxu0 0.0
    %959 = vmatprep.subr.mxu0 0.0
    %960 = vmatpush2.msra.mxu0 0.0
    %961 = vmatprep.subr.mxu0 0.0
    %962 = vmatpush2.msra.mxu0 0.0
    %963 = vmatprep.subr.mxu0 0.0
    %964 = vmatpush2.msra.mxu0 0.0
    %965 = vmatprep.subr.mxu0 0.0
    %966 = vmatpush2.msra.mxu0 0.0
    %967 = vmatprep.subr.mxu0 0.0
    %968 = vmatpush2.msra.mxu0 0.0
    %969 = vmatprep.mubr.f32.mxu0 0.0
    %v970 = vand.u32 %v297, 4294901760
    %971 = vmatmul.mubr.f32.gmra.mxu0 %v970
    %v972 = vpop.f32.mrf.mxu0
    %v973 = vadd.f32 %v872, %v972
    %v974 = vpop.f32.mrf.mxu0
    %v975 = vadd.f32 %v874, %v974
    %976 = vmatprep.mubr.f32.mxu0 0.0
    %v977 = vand.u32 %v300, 4294901760
    %978 = vmatmul.mubr.f32.gmra.mxu0 %v977
    %v979 = vpop.f32.mrf.mxu0
    %v980 = vadd.f32 %v879, %v979
    %v981 = vpop.f32.mrf.mxu0
    %v982 = vadd.f32 %v881, %v981
    %983 = vmatprep.mubr.f32.mxu0 0.0
    %v984 = vand.u32 %v303, 4294901760
    %985 = vmatmul.mubr.f32.gmra.mxu0 %v984
    %v986 = vpop.f32.mrf.mxu0
    %v987 = vadd.f32 %v886, %v986
    %v988 = vpop.f32.mrf.mxu0
    %v989 = vadd.f32 %v888, %v988
    %990 = vmatprep.mubr.f32.mxu0 0.0
    %v991 = vand.u32 %v306, 4294901760
    %992 = vmatmul.mubr.f32.gmra.mxu0 %v991
    %v993 = vpop.f32.mrf.mxu0
    %v994 = vadd.f32 %v893, %v993
    %v995 = vpop.f32.mrf.mxu0
    %v996 = vadd.f32 %v895, %v995
    %997 = vdwg.mxu0
    %998 = vmatprep.subr.mxu0 0.0
    %999 = vmatpush1.msra.mxu0 0.0
    %1000 = vmatprep.subr.mxu0 0.0
    %1001 = vmatpush1.msra.mxu0 0.0
    %1002 = vmatprep.subr.mxu0 0.0
    %1003 = vmatpush1.msra.mxu0 0.0
    %1004 = vmatprep.subr.mxu0 0.0
    %1005 = vmatpush1.msra.mxu0 0.0
    %1006 = vmatprep.subr.mxu0 0.0
    %1007 = vmatpush1.msra.mxu0 0.0
    %1008 = vmatprep.subr.mxu0 0.0
    %1009 = vmatpush1.msra.mxu0 0.0
    %1010 = vmatprep.subr.mxu0 0.0
    %1011 = vmatpush1.msra.mxu0 0.0
    %1012 = vmatprep.subr.mxu0 0.0
    %1013 = vmatpush1.msra.mxu0 0.0
    %1014 = vmatprep.subr.mxu0 0.0
    %1015 = vmatpush1.msra.mxu0 0.0
    %1016 = vmatprep.subr.mxu0 0.0
    %1017 = vmatpush1.msra.mxu0 0.0
    %1018 = vmatprep.subr.mxu0 0.0
    %1019 = vmatpush1.msra.mxu0 0.0
    %1020 = vmatprep.subr.mxu0 0.0
    %1021 = vmatpush1.msra.mxu0 0.0
    %v1022 = vand.u32 %v265, 4294901760
    %1023 = vmatprep.subr.mxu0 %v1022
    %v1024 = vand.u32 %v264, 4294901760
    %1025 = vmatpush1.msra.mxu0 %v1024
    %v1026 = vand.u32 %v261, 4294901760
    %1027 = vmatprep.subr.mxu0 %v1026
    %v1028 = vand.u32 %v260, 4294901760
    %1029 = vmatpush1.msra.mxu0 %v1028
    %v1030 = vand.u32 %v257, 4294901760
    %1031 = vmatprep.subr.mxu0 %v1030
    %v1032 = vand.u32 %v256, 4294901760
    %1033 = vmatpush1.msra.mxu0 %v1032
    %v1034 = vand.u32 %v253, 4294901760
    %1035 = vmatprep.subr.mxu0 %v1034
    %v1036 = vand.u32 %v252, 4294901760
    %1037 = vmatpush1.msra.mxu0 %v1036
    %1038 = vmatprep.subr.mxu0 0.0
    %1039 = vmatpush2.msra.mxu0 0.0
    %1040 = vmatprep.subr.mxu0 0.0
    %1041 = vmatpush2.msra.mxu0 0.0
    %1042 = vmatprep.subr.mxu0 0.0
    %1043 = vmatpush2.msra.mxu0 0.0
    %1044 = vmatprep.subr.mxu0 0.0
    %1045 = vmatpush2.msra.mxu0 0.0
    %1046 = vmatprep.subr.mxu0 0.0
    %1047 = vmatpush2.msra.mxu0 0.0
    %1048 = vmatprep.subr.mxu0 0.0
    %1049 = vmatpush2.msra.mxu0 0.0
    %1050 = vmatprep.subr.mxu0 0.0
    %1051 = vmatpush2.msra.mxu0 0.0
    %1052 = vmatprep.subr.mxu0 0.0
    %1053 = vmatpush2.msra.mxu0 0.0
    %1054 = vmatprep.subr.mxu0 0.0
    %1055 = vmatpush2.msra.mxu0 0.0
    %1056 = vmatprep.subr.mxu0 0.0
    %1057 = vmatpush2.msra.mxu0 0.0
    %1058 = vmatprep.subr.mxu0 0.0
    %1059 = vmatpush2.msra.mxu0 0.0
    %1060 = vmatprep.subr.mxu0 0.0
    %1061 = vmatpush2.msra.mxu0 0.0
    %1062 = vmatprep.subr.mxu0 0.0
    %1063 = vmatpush2.msra.mxu0 0.0
    %1064 = vmatprep.subr.mxu0 0.0
    %1065 = vmatpush2.msra.mxu0 0.0
    %1066 = vmatprep.subr.mxu0 0.0
    %1067 = vmatpush2.msra.mxu0 0.0
    %1068 = vmatprep.subr.mxu0 0.0
    %1069 = vmatpush2.msra.mxu0 0.0
    %1070 = vmatprep.mubr.f32.mxu0 0.0
    %v1071 = vand.u32 %v297, 4294901760
    %v1072 = vsub.f32 %v297, %v1071
    %v1073 = vand.u32 %v1072, 4294901760
    %v1074 = vsub.f32 %v1072, %v1073
    %v1075 = vand.u32 %v1074, 4294901760
    %1076 = vmatmul.mubr.f32.gmra.mxu0 %v1075
    %v1077 = vpop.f32.mrf.mxu0
    %v1078 = vadd.f32 %v278, %v1077
    %v1079 = vpop.f32.mrf.mxu0
    %v1080 = vadd.f32 %v278, %v1079
    %1081 = vmatprep.mubr.f32.mxu0 0.0
    %v1082 = vand.u32 %v300, 4294901760
    %v1083 = vsub.f32 %v300, %v1082
    %v1084 = vand.u32 %v1083, 4294901760
    %v1085 = vsub.f32 %v1083, %v1084
    %v1086 = vand.u32 %v1085, 4294901760
    %1087 = vmatmul.mubr.f32.gmra.mxu0 %v1086
    %v1088 = vpop.f32.mrf.mxu0
    %v1089 = vadd.f32 %v283, %v1088
    %v1090 = vpop.f32.mrf.mxu0
    %v1091 = vadd.f32 %v283, %v1090
    %1092 = vmatprep.mubr.f32.mxu0 0.0
    %v1093 = vand.u32 %v303, 4294901760
    %v1094 = vsub.f32 %v303, %v1093
    %v1095 = vand.u32 %v1094, 4294901760
    %v1096 = vsub.f32 %v1094, %v1095
    %v1097 = vand.u32 %v1096, 4294901760
    %1098 = vmatmul.mubr.f32.gmra.mxu0 %v1097
    %v1099 = vpop.f32.mrf.mxu0
    %v1100 = vadd.f32 %v288, %v1099
    %v1101 = vpop.f32.mrf.mxu0
    %v1102 = vadd.f32 %v288, %v1101
    %1103 = vmatprep.mubr.f32.mxu0 0.0
    %v1104 = vand.u32 %v306, 4294901760
    %v1105 = vsub.f32 %v306, %v1104
    %v1106 = vand.u32 %v1105, 4294901760
    %v1107 = vsub.f32 %v1105, %v1106
    %v1108 = vand.u32 %v1107, 4294901760
    %1109 = vmatmul.mubr.f32.gmra.mxu0 %v1108
    %v1110 = vpop.f32.mrf.mxu0
    %v1111 = vadd.f32 %v293, %v1110
    %v1112 = vpop.f32.mrf.mxu0
    %v1113 = vadd.f32 %v293, %v1112
    %1114 = vdwg.mxu0
    %1115 = vmatprep.subr.mxu0 0.0
    %1116 = vmatpush1.msra.mxu0 0.0
    %1117 = vmatprep.subr.mxu0 0.0
    %1118 = vmatpush1.msra.mxu0 0.0
    %1119 = vmatprep.subr.mxu0 0.0
    %1120 = vmatpush1.msra.mxu0 0.0
    %1121 = vmatprep.subr.mxu0 0.0
    %1122 = vmatpush1.msra.mxu0 0.0
    %1123 = vmatprep.subr.mxu0 0.0
    %1124 = vmatpush1.msra.mxu0 0.0
    %1125 = vmatprep.subr.mxu0 0.0
    %1126 = vmatpush1.msra.mxu0 0.0
    %1127 = vmatprep.subr.mxu0 0.0
    %1128 = vmatpush1.msra.mxu0 0.0
    %1129 = vmatprep.subr.mxu0 0.0
    %1130 = vmatpush1.msra.mxu0 0.0
    %1131 = vmatprep.subr.mxu0 0.0
    %1132 = vmatpush1.msra.mxu0 0.0
    %1133 = vmatprep.subr.mxu0 0.0
    %1134 = vmatpush1.msra.mxu0 0.0
    %1135 = vmatprep.subr.mxu0 0.0
    %1136 = vmatpush1.msra.mxu0 0.0
    %1137 = vmatprep.subr.mxu0 0.0
    %1138 = vmatpush1.msra.mxu0 0.0
    %v1139 = vand.u32 %v265, 4294901760
    %v1140 = vsub.f32 %v265, %v1139
    %v1141 = vand.u32 %v1140, 4294901760
    %v1142 = vsub.f32 %v1140, %v1141
    %v1143 = vand.u32 %v1142, 4294901760
    %1144 = vmatprep.subr.mxu0 %v1143
    %v1145 = vand.u32 %v264, 4294901760
    %v1146 = vsub.f32 %v264, %v1145
    %v1147 = vand.u32 %v1146, 4294901760
    %v1148 = vsub.f32 %v1146, %v1147
    %v1149 = vand.u32 %v1148, 4294901760
    %1150 = vmatpush1.msra.mxu0 %v1149
    %v1151 = vand.u32 %v261, 4294901760
    %v1152 = vsub.f32 %v261, %v1151
    %v1153 = vand.u32 %v1152, 4294901760
    %v1154 = vsub.f32 %v1152, %v1153
    %v1155 = vand.u32 %v1154, 4294901760
    %1156 = vmatprep.subr.mxu0 %v1155
    %v1157 = vand.u32 %v260, 4294901760
    %v1158 = vsub.f32 %v260, %v1157
    %v1159 = vand.u32 %v1158, 4294901760
    %v1160 = vsub.f32 %v1158, %v1159
    %v1161 = vand.u32 %v1160, 4294901760
    %1162 = vmatpush1.msra.mxu0 %v1161
    %v1163 = vand.u32 %v257, 4294901760
    %v1164 = vsub.f32 %v257, %v1163
    %v1165 = vand.u32 %v1164, 4294901760
    %v1166 = vsub.f32 %v1164, %v1165
    %v1167 = vand.u32 %v1166, 4294901760
    %1168 = vmatprep.subr.mxu0 %v1167
    %v1169 = vand.u32 %v256, 4294901760
    %v1170 = vsub.f32 %v256, %v1169
    %v1171 = vand.u32 %v1170, 4294901760
    %v1172 = vsub.f32 %v1170, %v1171
    %v1173 = vand.u32 %v1172, 4294901760
    %1174 = vmatpush1.msra.mxu0 %v1173
    %v1175 = vand.u32 %v253, 4294901760
    %v1176 = vsub.f32 %v253, %v1175
    %v1177 = vand.u32 %v1176, 4294901760
    %v1178 = vsub.f32 %v1176, %v1177
    %v1179 = vand.u32 %v1178, 4294901760
    %1180 = vmatprep.subr.mxu0 %v1179
    %v1181 = vand.u32 %v252, 4294901760
    %v1182 = vsub.f32 %v252, %v1181
    %v1183 = vand.u32 %v1182, 4294901760
    %v1184 = vsub.f32 %v1182, %v1183
    %v1185 = vand.u32 %v1184, 4294901760
    %1186 = vmatpush1.msra.mxu0 %v1185
    %1187 = vmatprep.subr.mxu0 0.0
    %1188 = vmatpush2.msra.mxu0 0.0
    %1189 = vmatprep.subr.mxu0 0.0
    %1190 = vmatpush2.msra.mxu0 0.0
    %1191 = vmatprep.subr.mxu0 0.0
    %1192 = vmatpush2.msra.mxu0 0.0
    %1193 = vmatprep.subr.mxu0 0.0
    %1194 = vmatpush2.msra.mxu0 0.0
    %1195 = vmatprep.subr.mxu0 0.0
    %1196 = vmatpush2.msra.mxu0 0.0
    %1197 = vmatprep.subr.mxu0 0.0
    %1198 = vmatpush2.msra.mxu0 0.0
    %1199 = vmatprep.subr.mxu0 0.0
    %1200 = vmatpush2.msra.mxu0 0.0
    %1201 = vmatprep.subr.mxu0 0.0
    %1202 = vmatpush2.msra.mxu0 0.0
    %1203 = vmatprep.subr.mxu0 0.0
    %1204 = vmatpush2.msra.mxu0 0.0
    %1205 = vmatprep.subr.mxu0 0.0
    %1206 = vmatpush2.msra.mxu0 0.0
    %1207 = vmatprep.subr.mxu0 0.0
    %1208 = vmatpush2.msra.mxu0 0.0
    %1209 = vmatprep.subr.mxu0 0.0
    %1210 = vmatpush2.msra.mxu0 0.0
    %1211 = vmatprep.subr.mxu0 0.0
    %1212 = vmatpush2.msra.mxu0 0.0
    %1213 = vmatprep.subr.mxu0 0.0
    %1214 = vmatpush2.msra.mxu0 0.0
    %1215 = vmatprep.subr.mxu0 0.0
    %1216 = vmatpush2.msra.mxu0 0.0
    %1217 = vmatprep.subr.mxu0 0.0
    %1218 = vmatpush2.msra.mxu0 0.0
    %1219 = vmatprep.mubr.f32.mxu0 0.0
    %v1220 = vand.u32 %v297, 4294901760
    %1221 = vmatmul.mubr.f32.gmra.mxu0 %v1220
    %v1222 = vpop.f32.mrf.mxu0
    %v1223 = vadd.f32 %v1078, %v1222
    %v1224 = vpop.f32.mrf.mxu0
    %v1225 = vadd.f32 %v1080, %v1224
    %1226 = vmatprep.mubr.f32.mxu0 0.0
    %v1227 = vand.u32 %v300, 4294901760
    %1228 = vmatmul.mubr.f32.gmra.mxu0 %v1227
    %v1229 = vpop.f32.mrf.mxu0
    %v1230 = vadd.f32 %v1089, %v1229
    %v1231 = vpop.f32.mrf.mxu0
    %v1232 = vadd.f32 %v1091, %v1231
    %1233 = vmatprep.mubr.f32.mxu0 0.0
    %v1234 = vand.u32 %v303, 4294901760
    %1235 = vmatmul.mubr.f32.gmra.mxu0 %v1234
    %v1236 = vpop.f32.mrf.mxu0
    %v1237 = vadd.f32 %v1100, %v1236
    %v1238 = vpop.f32.mrf.mxu0
    %v1239 = vadd.f32 %v1102, %v1238
    %1240 = vmatprep.mubr.f32.mxu0 0.0
    %v1241 = vand.u32 %v306, 4294901760
    %1242 = vmatmul.mubr.f32.gmra.mxu0 %v1241
    %v1243 = vpop.f32.mrf.mxu0
    %v1244 = vadd.f32 %v1111, %v1243
    %v1245 = vpop.f32.mrf.mxu0
    %v1246 = vadd.f32 %v1113, %v1245
    %1247 = vdwg.mxu0
    %1248 = vmatprep.subr.mxu0 0.0
    %1249 = vmatpush1.msra.mxu0 0.0
    %1250 = vmatprep.subr.mxu0 0.0
    %1251 = vmatpush1.msra.mxu0 0.0
    %1252 = vmatprep.subr.mxu0 0.0
    %1253 = vmatpush1.msra.mxu0 0.0
    %1254 = vmatprep.subr.mxu0 0.0
    %1255 = vmatpush1.msra.mxu0 0.0
    %1256 = vmatprep.subr.mxu0 0.0
    %1257 = vmatpush1.msra.mxu0 0.0
    %1258 = vmatprep.subr.mxu0 0.0
    %1259 = vmatpush1.msra.mxu0 0.0
    %1260 = vmatprep.subr.mxu0 0.0
    %1261 = vmatpush1.msra.mxu0 0.0
    %1262 = vmatprep.subr.mxu0 0.0
    %1263 = vmatpush1.msra.mxu0 0.0
    %1264 = vmatprep.subr.mxu0 0.0
    %1265 = vmatpush1.msra.mxu0 0.0
    %1266 = vmatprep.subr.mxu0 0.0
    %1267 = vmatpush1.msra.mxu0 0.0
    %1268 = vmatprep.subr.mxu0 0.0
    %1269 = vmatpush1.msra.mxu0 0.0
    %1270 = vmatprep.subr.mxu0 0.0
    %1271 = vmatpush1.msra.mxu0 0.0
    %v1272 = vand.u32 %v265, 4294901760
    %v1273 = vsub.f32 %v265, %v1272
    %1274 = vmatprep.subr.mxu0 %v1273
    %v1275 = vand.u32 %v264, 4294901760
    %v1276 = vsub.f32 %v264, %v1275
    %1277 = vmatpush1.msra.mxu0 %v1276
    %v1278 = vand.u32 %v261, 4294901760
    %v1279 = vsub.f32 %v261, %v1278
    %1280 = vmatprep.subr.mxu0 %v1279
    %v1281 = vand.u32 %v260, 4294901760
    %v1282 = vsub.f32 %v260, %v1281
    %1283 = vmatpush1.msra.mxu0 %v1282
    %v1284 = vand.u32 %v257, 4294901760
    %v1285 = vsub.f32 %v257, %v1284
    %1286 = vmatprep.subr.mxu0 %v1285
    %v1287 = vand.u32 %v256, 4294901760
    %v1288 = vsub.f32 %v256, %v1287
    %1289 = vmatpush1.msra.mxu0 %v1288
    %v1290 = vand.u32 %v253, 4294901760
    %v1291 = vsub.f32 %v253, %v1290
    %1292 = vmatprep.subr.mxu0 %v1291
    %v1293 = vand.u32 %v252, 4294901760
    %v1294 = vsub.f32 %v252, %v1293
    %1295 = vmatpush1.msra.mxu0 %v1294
    %1296 = vmatprep.subr.mxu0 0.0
    %1297 = vmatpush2.msra.mxu0 0.0
    %1298 = vmatprep.subr.mxu0 0.0
    %1299 = vmatpush2.msra.mxu0 0.0
    %1300 = vmatprep.subr.mxu0 0.0
    %1301 = vmatpush2.msra.mxu0 0.0
    %1302 = vmatprep.subr.mxu0 0.0
    %1303 = vmatpush2.msra.mxu0 0.0
    %1304 = vmatprep.subr.mxu0 0.0
    %1305 = vmatpush2.msra.mxu0 0.0
    %1306 = vmatprep.subr.mxu0 0.0
    %1307 = vmatpush2.msra.mxu0 0.0
    %1308 = vmatprep.subr.mxu0 0.0
    %1309 = vmatpush2.msra.mxu0 0.0
    %1310 = vmatprep.subr.mxu0 0.0
    %1311 = vmatpush2.msra.mxu0 0.0
    %1312 = vmatprep.subr.mxu0 0.0
    %1313 = vmatpush2.msra.mxu0 0.0
    %1314 = vmatprep.subr.mxu0 0.0
    %1315 = vmatpush2.msra.mxu0 0.0
    %1316 = vmatprep.subr.mxu0 0.0
    %1317 = vmatpush2.msra.mxu0 0.0
    %1318 = vmatprep.subr.mxu0 0.0
    %1319 = vmatpush2.msra.mxu0 0.0
    %1320 = vmatprep.subr.mxu0 0.0
    %1321 = vmatpush2.msra.mxu0 0.0
    %1322 = vmatprep.subr.mxu0 0.0
    %1323 = vmatpush2.msra.mxu0 0.0
    %1324 = vmatprep.subr.mxu0 0.0
    %1325 = vmatpush2.msra.mxu0 0.0
    %1326 = vmatprep.subr.mxu0 0.0
    %1327 = vmatpush2.msra.mxu0 0.0
    %1328 = vmatprep.mubr.f32.mxu0 0.0
    %v1329 = vand.u32 %v297, 4294901760
    %v1330 = vsub.f32 %v297, %v1329
    %1331 = vmatmul.mubr.f32.gmra.mxu0 %v1330
    %v1332 = vpop.f32.mrf.mxu0
    %v1333 = vadd.f32 %v1223, %v1332
    %v1334 = vpop.f32.mrf.mxu0
    %v1335 = vadd.f32 %v1225, %v1334
    %1336 = vmatprep.mubr.f32.mxu0 0.0
    %v1337 = vand.u32 %v300, 4294901760
    %v1338 = vsub.f32 %v300, %v1337
    %1339 = vmatmul.mubr.f32.gmra.mxu0 %v1338
    %v1340 = vpop.f32.mrf.mxu0
    %v1341 = vadd.f32 %v1230, %v1340
    %v1342 = vpop.f32.mrf.mxu0
    %v1343 = vadd.f32 %v1232, %v1342
    %1344 = vmatprep.mubr.f32.mxu0 0.0
    %v1345 = vand.u32 %v303, 4294901760
    %v1346 = vsub.f32 %v303, %v1345
    %1347 = vmatmul.mubr.f32.gmra.mxu0 %v1346
    %v1348 = vpop.f32.mrf.mxu0
    %v1349 = vadd.f32 %v1237, %v1348
    %v1350 = vpop.f32.mrf.mxu0
    %v1351 = vadd.f32 %v1239, %v1350
    %1352 = vmatprep.mubr.f32.mxu0 0.0
    %v1353 = vand.u32 %v306, 4294901760
    %v1354 = vsub.f32 %v306, %v1353
    %1355 = vmatmul.mubr.f32.gmra.mxu0 %v1354
    %v1356 = vpop.f32.mrf.mxu0
    %v1357 = vadd.f32 %v1244, %v1356
    %v1358 = vpop.f32.mrf.mxu0
    %v1359 = vadd.f32 %v1246, %v1358
    %1360 = vdwg.mxu0
    %1361 = vmatprep.subr.mxu0 0.0
    %1362 = vmatpush1.msra.mxu0 0.0
    %1363 = vmatprep.subr.mxu0 0.0
    %1364 = vmatpush1.msra.mxu0 0.0
    %1365 = vmatprep.subr.mxu0 0.0
    %1366 = vmatpush1.msra.mxu0 0.0
    %1367 = vmatprep.subr.mxu0 0.0
    %1368 = vmatpush1.msra.mxu0 0.0
    %1369 = vmatprep.subr.mxu0 0.0
    %1370 = vmatpush1.msra.mxu0 0.0
    %1371 = vmatprep.subr.mxu0 0.0
    %1372 = vmatpush1.msra.mxu0 0.0
    %1373 = vmatprep.subr.mxu0 0.0
    %1374 = vmatpush1.msra.mxu0 0.0
    %1375 = vmatprep.subr.mxu0 0.0
    %1376 = vmatpush1.msra.mxu0 0.0
    %1377 = vmatprep.subr.mxu0 0.0
    %1378 = vmatpush1.msra.mxu0 0.0
    %1379 = vmatprep.subr.mxu0 0.0
    %1380 = vmatpush1.msra.mxu0 0.0
    %1381 = vmatprep.subr.mxu0 0.0
    %1382 = vmatpush1.msra.mxu0 0.0
    %1383 = vmatprep.subr.mxu0 0.0
    %1384 = vmatpush1.msra.mxu0 0.0
    %v1385 = vand.u32 %v265, 4294901760
    %1386 = vmatprep.subr.mxu0 %v1385
    %v1387 = vand.u32 %v264, 4294901760
    %1388 = vmatpush1.msra.mxu0 %v1387
    %v1389 = vand.u32 %v261, 4294901760
    %1390 = vmatprep.subr.mxu0 %v1389
    %v1391 = vand.u32 %v260, 4294901760
    %1392 = vmatpush1.msra.mxu0 %v1391
    %v1393 = vand.u32 %v257, 4294901760
    %1394 = vmatprep.subr.mxu0 %v1393
    %v1395 = vand.u32 %v256, 4294901760
    %1396 = vmatpush1.msra.mxu0 %v1395
    %v1397 = vand.u32 %v253, 4294901760
    %1398 = vmatprep.subr.mxu0 %v1397
    %v1399 = vand.u32 %v252, 4294901760
    %1400 = vmatpush1.msra.mxu0 %v1399
    %1401 = vmatprep.subr.mxu0 0.0
    %1402 = vmatpush2.msra.mxu0 0.0
    %1403 = vmatprep.subr.mxu0 0.0
    %1404 = vmatpush2.msra.mxu0 0.0
    %1405 = vmatprep.subr.mxu0 0.0
    %1406 = vmatpush2.msra.mxu0 0.0
    %1407 = vmatprep.subr.mxu0 0.0
    %1408 = vmatpush2.msra.mxu0 0.0
    %1409 = vmatprep.subr.mxu0 0.0
    %1410 = vmatpush2.msra.mxu0 0.0
    %1411 = vmatprep.subr.mxu0 0.0
    %1412 = vmatpush2.msra.mxu0 0.0
    %1413 = vmatprep.subr.mxu0 0.0
    %1414 = vmatpush2.msra.mxu0 0.0
    %1415 = vmatprep.subr.mxu0 0.0
    %1416 = vmatpush2.msra.mxu0 0.0
    %1417 = vmatprep.subr.mxu0 0.0
    %1418 = vmatpush2.msra.mxu0 0.0
    %1419 = vmatprep.subr.mxu0 0.0
    %1420 = vmatpush2.msra.mxu0 0.0
    %1421 = vmatprep.subr.mxu0 0.0
    %1422 = vmatpush2.msra.mxu0 0.0
    %1423 = vmatprep.subr.mxu0 0.0
    %1424 = vmatpush2.msra.mxu0 0.0
    %1425 = vmatprep.subr.mxu0 0.0
    %1426 = vmatpush2.msra.mxu0 0.0
    %1427 = vmatprep.subr.mxu0 0.0
    %1428 = vmatpush2.msra.mxu0 0.0
    %1429 = vmatprep.subr.mxu0 0.0
    %1430 = vmatpush2.msra.mxu0 0.0
    %1431 = vmatprep.subr.mxu0 0.0
    %1432 = vmatpush2.msra.mxu0 0.0
    %1433 = vmatprep.mubr.f32.mxu0 0.0
    %v1434 = vand.u32 %v297, 4294901760
    %v1435 = vsub.f32 %v297, %v1434
    %v1436 = vand.u32 %v1435, 4294901760
    %1437 = vmatmul.mubr.f32.gmra.mxu0 %v1436
    %v1438 = vpop.f32.mrf.mxu0
    %v1439 = vadd.f32 %v1333, %v1438
    %v1440 = vpop.f32.mrf.mxu0
    %v1441 = vadd.f32 %v1335, %v1440
    %1442 = vmatprep.mubr.f32.mxu0 0.0
    %v1443 = vand.u32 %v300, 4294901760
    %v1444 = vsub.f32 %v300, %v1443
    %v1445 = vand.u32 %v1444, 4294901760
    %1446 = vmatmul.mubr.f32.gmra.mxu0 %v1445
    %v1447 = vpop.f32.mrf.mxu0
    %v1448 = vadd.f32 %v1341, %v1447
    %v1449 = vpop.f32.mrf.mxu0
    %v1450 = vadd.f32 %v1343, %v1449
    %1451 = vmatprep.mubr.f32.mxu0 0.0
    %v1452 = vand.u32 %v303, 4294901760
    %v1453 = vsub.f32 %v303, %v1452
    %v1454 = vand.u32 %v1453, 4294901760
    %1455 = vmatmul.mubr.f32.gmra.mxu0 %v1454
    %v1456 = vpop.f32.mrf.mxu0
    %v1457 = vadd.f32 %v1349, %v1456
    %v1458 = vpop.f32.mrf.mxu0
    %v1459 = vadd.f32 %v1351, %v1458
    %1460 = vmatprep.mubr.f32.mxu0 0.0
    %v1461 = vand.u32 %v306, 4294901760
    %v1462 = vsub.f32 %v306, %v1461
    %v1463 = vand.u32 %v1462, 4294901760
    %1464 = vmatmul.mubr.f32.gmra.mxu0 %v1463
    %v1465 = vpop.f32.mrf.mxu0
    %v1466 = vadd.f32 %v1357, %v1465
    %v1467 = vpop.f32.mrf.mxu0
    %v1468 = vadd.f32 %v1359, %v1467
    %1469 = vdwg.mxu0
    %1470 = vmatprep.subr.mxu0 0.0
    %1471 = vmatpush1.msra.mxu0 0.0
    %1472 = vmatprep.subr.mxu0 0.0
    %1473 = vmatpush1.msra.mxu0 0.0
    %1474 = vmatprep.subr.mxu0 0.0
    %1475 = vmatpush1.msra.mxu0 0.0
    %1476 = vmatprep.subr.mxu0 0.0
    %1477 = vmatpush1.msra.mxu0 0.0
    %1478 = vmatprep.subr.mxu0 0.0
    %1479 = vmatpush1.msra.mxu0 0.0
    %1480 = vmatprep.subr.mxu0 0.0
    %1481 = vmatpush1.msra.mxu0 0.0
    %1482 = vmatprep.subr.mxu0 0.0
    %1483 = vmatpush1.msra.mxu0 0.0
    %1484 = vmatprep.subr.mxu0 0.0
    %1485 = vmatpush1.msra.mxu0 0.0
    %1486 = vmatprep.subr.mxu0 0.0
    %1487 = vmatpush1.msra.mxu0 0.0
    %1488 = vmatprep.subr.mxu0 0.0
    %1489 = vmatpush1.msra.mxu0 0.0
    %1490 = vmatprep.subr.mxu0 0.0
    %1491 = vmatpush1.msra.mxu0 0.0
    %1492 = vmatprep.subr.mxu0 0.0
    %1493 = vmatpush1.msra.mxu0 0.0
    %v1494 = vand.u32 %v265, 4294901760
    %v1495 = vsub.f32 %v265, %v1494
    %v1496 = vand.u32 %v1495, 4294901760
    %1497 = vmatprep.subr.mxu0 %v1496
    %v1498 = vand.u32 %v264, 4294901760
    %v1499 = vsub.f32 %v264, %v1498
    %v1500 = vand.u32 %v1499, 4294901760
    %1501 = vmatpush1.msra.mxu0 %v1500
    %v1502 = vand.u32 %v261, 4294901760
    %v1503 = vsub.f32 %v261, %v1502
    %v1504 = vand.u32 %v1503, 4294901760
    %1505 = vmatprep.subr.mxu0 %v1504
    %v1506 = vand.u32 %v260, 4294901760
    %v1507 = vsub.f32 %v260, %v1506
    %v1508 = vand.u32 %v1507, 4294901760
    %1509 = vmatpush1.msra.mxu0 %v1508
    %v1510 = vand.u32 %v257, 4294901760
    %v1511 = vsub.f32 %v257, %v1510
    %v1512 = vand.u32 %v1511, 4294901760
    %1513 = vmatprep.subr.mxu0 %v1512
    %v1514 = vand.u32 %v256, 4294901760
    %v1515 = vsub.f32 %v256, %v1514
    %v1516 = vand.u32 %v1515, 4294901760
    %1517 = vmatpush1.msra.mxu0 %v1516
    %v1518 = vand.u32 %v253, 4294901760
    %v1519 = vsub.f32 %v253, %v1518
    %v1520 = vand.u32 %v1519, 4294901760
    %1521 = vmatprep.subr.mxu0 %v1520
    %v1522 = vand.u32 %v252, 4294901760
    %v1523 = vsub.f32 %v252, %v1522
    %v1524 = vand.u32 %v1523, 4294901760
    %1525 = vmatpush1.msra.mxu0 %v1524
    %1526 = vmatprep.subr.mxu0 0.0
    %1527 = vmatpush2.msra.mxu0 0.0
    %1528 = vmatprep.subr.mxu0 0.0
    %1529 = vmatpush2.msra.mxu0 0.0
    %1530 = vmatprep.subr.mxu0 0.0
    %1531 = vmatpush2.msra.mxu0 0.0
    %1532 = vmatprep.subr.mxu0 0.0
    %1533 = vmatpush2.msra.mxu0 0.0
    %1534 = vmatprep.subr.mxu0 0.0
    %1535 = vmatpush2.msra.mxu0 0.0
    %1536 = vmatprep.subr.mxu0 0.0
    %1537 = vmatpush2.msra.mxu0 0.0
    %1538 = vmatprep.subr.mxu0 0.0
    %1539 = vmatpush2.msra.mxu0 0.0
    %1540 = vmatprep.subr.mxu0 0.0
    %1541 = vmatpush2.msra.mxu0 0.0
    %1542 = vmatprep.subr.mxu0 0.0
    %1543 = vmatpush2.msra.mxu0 0.0
    %1544 = vmatprep.subr.mxu0 0.0
    %1545 = vmatpush2.msra.mxu0 0.0
    %1546 = vmatprep.subr.mxu0 0.0
    %1547 = vmatpush2.msra.mxu0 0.0
    %1548 = vmatprep.subr.mxu0 0.0
    %1549 = vmatpush2.msra.mxu0 0.0
    %1550 = vmatprep.subr.mxu0 0.0
    %1551 = vmatpush2.msra.mxu0 0.0
    %1552 = vmatprep.subr.mxu0 0.0
    %1553 = vmatpush2.msra.mxu0 0.0
    %1554 = vmatprep.subr.mxu0 0.0
    %1555 = vmatpush2.msra.mxu0 0.0
    %1556 = vmatprep.subr.mxu0 0.0
    %1557 = vmatpush2.msra.mxu0 0.0
    %1558 = vmatprep.mubr.f32.mxu0 0.0
    %v1559 = vand.u32 %v297, 4294901760
    %1560 = vmatmul.mubr.f32.gmra.mxu0 %v1559
    %v1561 = vpop.f32.mrf.mxu0
    %v1562 = vadd.f32 %v1439, %v1561
    %v1563 = vpop.f32.mrf.mxu0
    %v1564 = vadd.f32 %v1441, %v1563
    %1565 = vmatprep.mubr.f32.mxu0 0.0
    %v1566 = vand.u32 %v300, 4294901760
    %1567 = vmatmul.mubr.f32.gmra.mxu0 %v1566
    %v1568 = vpop.f32.mrf.mxu0
    %v1569 = vadd.f32 %v1448, %v1568
    %v1570 = vpop.f32.mrf.mxu0
    %v1571 = vadd.f32 %v1450, %v1570
    %1572 = vmatprep.mubr.f32.mxu0 0.0
    %v1573 = vand.u32 %v303, 4294901760
    %1574 = vmatmul.mubr.f32.gmra.mxu0 %v1573
    %v1575 = vpop.f32.mrf.mxu0
    %v1576 = vadd.f32 %v1457, %v1575
    %v1577 = vpop.f32.mrf.mxu0
    %v1578 = vadd.f32 %v1459, %v1577
    %1579 = vmatprep.mubr.f32.mxu0 0.0
    %v1580 = vand.u32 %v306, 4294901760
    %1581 = vmatmul.mubr.f32.gmra.mxu0 %v1580
    %v1582 = vpop.f32.mrf.mxu0
    %v1583 = vadd.f32 %v1466, %v1582
    %v1584 = vpop.f32.mrf.mxu0
    %v1585 = vadd.f32 %v1468, %v1584
    %1586 = vdwg.mxu0
    %1587 = vmatprep.subr.mxu0 0.0
    %1588 = vmatpush1.msra.mxu0 0.0
    %1589 = vmatprep.subr.mxu0 0.0
    %1590 = vmatpush1.msra.mxu0 0.0
    %1591 = vmatprep.subr.mxu0 0.0
    %1592 = vmatpush1.msra.mxu0 0.0
    %1593 = vmatprep.subr.mxu0 0.0
    %1594 = vmatpush1.msra.mxu0 0.0
    %1595 = vmatprep.subr.mxu0 0.0
    %1596 = vmatpush1.msra.mxu0 0.0
    %1597 = vmatprep.subr.mxu0 0.0
    %1598 = vmatpush1.msra.mxu0 0.0
    %1599 = vmatprep.subr.mxu0 0.0
    %1600 = vmatpush1.msra.mxu0 0.0
    %1601 = vmatprep.subr.mxu0 0.0
    %1602 = vmatpush1.msra.mxu0 0.0
    %1603 = vmatprep.subr.mxu0 0.0
    %1604 = vmatpush1.msra.mxu0 0.0
    %1605 = vmatprep.subr.mxu0 0.0
    %1606 = vmatpush1.msra.mxu0 0.0
    %1607 = vmatprep.subr.mxu0 0.0
    %1608 = vmatpush1.msra.mxu0 0.0
    %1609 = vmatprep.subr.mxu0 0.0
    %1610 = vmatpush1.msra.mxu0 0.0
    %v1611 = vand.u32 %v265, 4294901760
    %1612 = vmatprep.subr.mxu0 %v1611
    %v1613 = vand.u32 %v264, 4294901760
    %1614 = vmatpush1.msra.mxu0 %v1613
    %v1615 = vand.u32 %v261, 4294901760
    %1616 = vmatprep.subr.mxu0 %v1615
    %v1617 = vand.u32 %v260, 4294901760
    %1618 = vmatpush1.msra.mxu0 %v1617
    %v1619 = vand.u32 %v257, 4294901760
    %1620 = vmatprep.subr.mxu0 %v1619
    %v1621 = vand.u32 %v256, 4294901760
    %1622 = vmatpush1.msra.mxu0 %v1621
    %v1623 = vand.u32 %v253, 4294901760
    %1624 = vmatprep.subr.mxu0 %v1623
    %v1625 = vand.u32 %v252, 4294901760
    %1626 = vmatpush1.msra.mxu0 %v1625
    %1627 = vmatprep.subr.mxu0 0.0
    %1628 = vmatpush2.msra.mxu0 0.0
    %1629 = vmatprep.subr.mxu0 0.0
    %1630 = vmatpush2.msra.mxu0 0.0
    %1631 = vmatprep.subr.mxu0 0.0
    %1632 = vmatpush2.msra.mxu0 0.0
    %1633 = vmatprep.subr.mxu0 0.0
    %1634 = vmatpush2.msra.mxu0 0.0
    %1635 = vmatprep.subr.mxu0 0.0
    %1636 = vmatpush2.msra.mxu0 0.0
    %1637 = vmatprep.subr.mxu0 0.0
    %1638 = vmatpush2.msra.mxu0 0.0
    %1639 = vmatprep.subr.mxu0 0.0
    %1640 = vmatpush2.msra.mxu0 0.0
    %1641 = vmatprep.subr.mxu0 0.0
    %1642 = vmatpush2.msra.mxu0 0.0
    %1643 = vmatprep.subr.mxu0 0.0
    %1644 = vmatpush2.msra.mxu0 0.0
    %1645 = vmatprep.subr.mxu0 0.0
    %1646 = vmatpush2.msra.mxu0 0.0
    %1647 = vmatprep.subr.mxu0 0.0
    %1648 = vmatpush2.msra.mxu0 0.0
    %1649 = vmatprep.subr.mxu0 0.0
    %1650 = vmatpush2.msra.mxu0 0.0
    %1651 = vmatprep.subr.mxu0 0.0
    %1652 = vmatpush2.msra.mxu0 0.0
    %1653 = vmatprep.subr.mxu0 0.0
    %1654 = vmatpush2.msra.mxu0 0.0
    %1655 = vmatprep.subr.mxu0 0.0
    %1656 = vmatpush2.msra.mxu0 0.0
    %1657 = vmatprep.subr.mxu0 0.0
    %1658 = vmatpush2.msra.mxu0 0.0
    %1659 = vmatprep.mubr.f32.mxu0 0.0
    %v1660 = vand.u32 %v297, 4294901760
    %1661 = vmatmul.mubr.f32.gmra.mxu0 %v1660
    %v1662 = vpop.f32.mrf.mxu0
    %v1663 = vadd.f32 %v1562, %v1662
    %v1664 = vpop.f32.mrf.mxu0
    %v1665 = vadd.f32 %v1564, %v1664
    %1666 = vmatprep.mubr.f32.mxu0 0.0
    %v1667 = vand.u32 %v300, 4294901760
    %1668 = vmatmul.mubr.f32.gmra.mxu0 %v1667
    %v1669 = vpop.f32.mrf.mxu0
    %v1670 = vadd.f32 %v1569, %v1669
    %v1671 = vpop.f32.mrf.mxu0
    %v1672 = vadd.f32 %v1571, %v1671
    %1673 = vmatprep.mubr.f32.mxu0 0.0
    %v1674 = vand.u32 %v303, 4294901760
    %1675 = vmatmul.mubr.f32.gmra.mxu0 %v1674
    %v1676 = vpop.f32.mrf.mxu0
    %v1677 = vadd.f32 %v1576, %v1676
    %v1678 = vpop.f32.mrf.mxu0
    %v1679 = vadd.f32 %v1578, %v1678
    %1680 = vmatprep.mubr.f32.mxu0 0.0
    %v1681 = vand.u32 %v306, 4294901760
    %1682 = vmatmul.mubr.f32.gmra.mxu0 %v1681
    %v1683 = vpop.f32.mrf.mxu0
    %v1684 = vadd.f32 %v1583, %v1683
    %v1685 = vpop.f32.mrf.mxu0
    %v1686 = vadd.f32 %v1585, %v1685
    %1687 = vdwg.mxu0
    %v1688 = vtanh.pop %v973
    %v1689 = vtanh.pop %v975
    %v1690 = vtanh.pop %v1663
    %v1691 = vtanh.pop %v1665
    %v1692 = vtanh.pop %v980
    %v1693 = vtanh.pop %v982
    %v1694 = vtanh.pop %v1670
    %v1695 = vtanh.pop %v1672
    %v1696 = vtanh.pop %v987
    %v1697 = vtanh.pop %v989
    %v1698 = vtanh.pop %v1677
    %v1699 = vtanh.pop %v1679
    %v1700 = vtanh.pop %v994
    %v1701 = vtanh.pop %v996
    %v1702 = vtanh.pop %v1684
    %v1703 = vtanh.pop %v1686
    %s1704 = scalar_lea.vmem %s1, 32
    %v1705 = vld [vmem:[%s1704] sm:$0xff]
    %v1706 = vld [vmem:[%s1704 + $0x8] sm:$0xff]
    %v1707 = vld [vmem:[%s1704 + $0x10] sm:$0xff]
    %v1708 = vld [vmem:[%s1704 + $0x18] sm:$0xff]
    %s1709 = scalar_lea.vmem %s2, 64
    %v1710 = vld [vmem:[%s1709] sm:$0xff]
    %v1711 = vld [vmem:[%s1709 + $0x8] sm:$0xff]
    %v1712 = vld [vmem:[%s1709 + $0x10] sm:$0xff]
    %v1713 = vld [vmem:[%s1709 + $0x18] sm:$0xff]
    %1715 = vset.pattern.permute.xlu0 0
    %1716 = vperm.xlu0 %1715, %v1710
    %v1717 = vpop.permute.xlu0 %1716
    %1720 = vset.pattern.permute.xlu0 0
    %1721 = vperm.xlu0 %1720, %v1711
    %v1722 = vpop.permute.xlu0 %1721
    %1725 = vset.pattern.permute.xlu0 0
    %1726 = vperm.xlu0 %1725, %v1712
    %v1727 = vpop.permute.xlu0 %1726
    %1730 = vset.pattern.permute.xlu0 0
    %1731 = vperm.xlu0 %1730, %v1713
    %v1732 = vpop.permute.xlu0 %1731
    %v1735 = vsel %vm295, %v1705, 0
    %v1738 = vsel %vm295, %v1706, 0
    %v1741 = vsel %vm295, %v1707, 0
    %v1744 = vsel %vm295, %v1708, 0
    %1746 = vmatprep.subr.mxu0 0.0
    %1747 = vmatpush1.msra.mxu0 0.0
    %1748 = vmatprep.subr.mxu0 0.0
    %1749 = vmatpush1.msra.mxu0 0.0
    %1750 = vmatprep.subr.mxu0 0.0
    %1751 = vmatpush1.msra.mxu0 0.0
    %1752 = vmatprep.subr.mxu0 0.0
    %1753 = vmatpush1.msra.mxu0 0.0
    %1754 = vmatprep.subr.mxu0 0.0
    %1755 = vmatpush1.msra.mxu0 0.0
    %1756 = vmatprep.subr.mxu0 0.0
    %1757 = vmatpush1.msra.mxu0 0.0
    %1758 = vmatprep.subr.mxu0 0.0
    %1759 = vmatpush1.msra.mxu0 0.0
    %1760 = vmatprep.subr.mxu0 0.0
    %1761 = vmatpush1.msra.mxu0 0.0
    %1762 = vmatprep.subr.mxu0 0.0
    %1763 = vmatpush1.msra.mxu0 0.0
    %1764 = vmatprep.subr.mxu0 0.0
    %1765 = vmatpush1.msra.mxu0 0.0
    %1766 = vmatprep.subr.mxu0 0.0
    %1767 = vmatpush1.msra.mxu0 0.0
    %1768 = vmatprep.subr.mxu0 0.0
    %1769 = vmatpush1.msra.mxu0 0.0
    %v1770 = vand.u32 %v1701, 4294901760
    %1771 = vmatprep.subr.mxu0 %v1770
    %v1772 = vand.u32 %v1700, 4294901760
    %1773 = vmatpush1.msra.mxu0 %v1772
    %v1774 = vand.u32 %v1697, 4294901760
    %1775 = vmatprep.subr.mxu0 %v1774
    %v1776 = vand.u32 %v1696, 4294901760
    %1777 = vmatpush1.msra.mxu0 %v1776
    %v1778 = vand.u32 %v1693, 4294901760
    %1779 = vmatprep.subr.mxu0 %v1778
    %v1780 = vand.u32 %v1692, 4294901760
    %1781 = vmatpush1.msra.mxu0 %v1780
    %v1782 = vand.u32 %v1689, 4294901760
    %1783 = vmatprep.subr.mxu0 %v1782
    %v1784 = vand.u32 %v1688, 4294901760
    %1785 = vmatpush1.msra.mxu0 %v1784
    %1786 = vmatprep.subr.mxu0 0.0
    %1787 = vmatpush2.msra.mxu0 0.0
    %1788 = vmatprep.subr.mxu0 0.0
    %1789 = vmatpush2.msra.mxu0 0.0
    %1790 = vmatprep.subr.mxu0 0.0
    %1791 = vmatpush2.msra.mxu0 0.0
    %1792 = vmatprep.subr.mxu0 0.0
    %1793 = vmatpush2.msra.mxu0 0.0
    %1794 = vmatprep.subr.mxu0 0.0
    %1795 = vmatpush2.msra.mxu0 0.0
    %1796 = vmatprep.subr.mxu0 0.0
    %1797 = vmatpush2.msra.mxu0 0.0
    %1798 = vmatprep.subr.mxu0 0.0
    %1799 = vmatpush2.msra.mxu0 0.0
    %1800 = vmatprep.subr.mxu0 0.0
    %1801 = vmatpush2.msra.mxu0 0.0
    %1802 = vmatprep.subr.mxu0 0.0
    %1803 = vmatpush2.msra.mxu0 0.0
    %1804 = vmatprep.subr.mxu0 0.0
    %1805 = vmatpush2.msra.mxu0 0.0
    %1806 = vmatprep.subr.mxu0 0.0
    %1807 = vmatpush2.msra.mxu0 0.0
    %1808 = vmatprep.subr.mxu0 0.0
    %1809 = vmatpush2.msra.mxu0 0.0
    %1810 = vmatprep.subr.mxu0 0.0
    %1811 = vmatpush2.msra.mxu0 0.0
    %1812 = vmatprep.subr.mxu0 0.0
    %1813 = vmatpush2.msra.mxu0 0.0
    %1814 = vmatprep.subr.mxu0 0.0
    %1815 = vmatpush2.msra.mxu0 0.0
    %1816 = vmatprep.subr.mxu0 0.0
    %1817 = vmatpush2.msra.mxu0 0.0
    %1818 = vmatprep.mubr.f32.mxu0 0.0
    %v1819 = vand.u32 %v1735, 4294901760
    %v1820 = vsub.f32 %v1735, %v1819
    %v1821 = vand.u32 %v1820, 4294901760
    %v1822 = vsub.f32 %v1820, %v1821
    %v1823 = vand.u32 %v1822, 4294901760
    %1824 = vmatmul.mubr.f32.gmra.mxu0 %v1823
    %v1825 = vpop.f32.mrf.mxu0
    %v1826 = vadd.f32 %v1717, %v1825
    %v1827 = vpop.f32.mrf.mxu0
    %v1828 = vadd.f32 %v1717, %v1827
    %1829 = vmatprep.mubr.f32.mxu0 0.0
    %v1830 = vand.u32 %v1738, 4294901760
    %v1831 = vsub.f32 %v1738, %v1830
    %v1832 = vand.u32 %v1831, 4294901760
    %v1833 = vsub.f32 %v1831, %v1832
    %v1834 = vand.u32 %v1833, 4294901760
    %1835 = vmatmul.mubr.f32.gmra.mxu0 %v1834
    %v1836 = vpop.f32.mrf.mxu0
    %v1837 = vadd.f32 %v1722, %v1836
    %v1838 = vpop.f32.mrf.mxu0
    %v1839 = vadd.f32 %v1722, %v1838
    %1840 = vmatprep.mubr.f32.mxu0 0.0
    %v1841 = vand.u32 %v1741, 4294901760
    %v1842 = vsub.f32 %v1741, %v1841
    %v1843 = vand.u32 %v1842, 4294901760
    %v1844 = vsub.f32 %v1842, %v1843
    %v1845 = vand.u32 %v1844, 4294901760
    %1846 = vmatmul.mubr.f32.gmra.mxu0 %v1845
    %v1847 = vpop.f32.mrf.mxu0
    %v1848 = vadd.f32 %v1727, %v1847
    %v1849 = vpop.f32.mrf.mxu0
    %v1850 = vadd.f32 %v1727, %v1849
    %1851 = vmatprep.mubr.f32.mxu0 0.0
    %v1852 = vand.u32 %v1744, 4294901760
    %v1853 = vsub.f32 %v1744, %v1852
    %v1854 = vand.u32 %v1853, 4294901760
    %v1855 = vsub.f32 %v1853, %v1854
    %v1856 = vand.u32 %v1855, 4294901760
    %1857 = vmatmul.mubr.f32.gmra.mxu0 %v1856
    %v1858 = vpop.f32.mrf.mxu0
    %v1859 = vadd.f32 %v1732, %v1858
    %v1860 = vpop.f32.mrf.mxu0
    %v1861 = vadd.f32 %v1732, %v1860
    %1862 = vdwg.mxu0
    %1863 = vmatprep.subr.mxu0 0.0
    %1864 = vmatpush1.msra.mxu0 0.0
    %1865 = vmatprep.subr.mxu0 0.0
    %1866 = vmatpush1.msra.mxu0 0.0
    %1867 = vmatprep.subr.mxu0 0.0
    %1868 = vmatpush1.msra.mxu0 0.0
    %1869 = vmatprep.subr.mxu0 0.0
    %1870 = vmatpush1.msra.mxu0 0.0
    %1871 = vmatprep.subr.mxu0 0.0
    %1872 = vmatpush1.msra.mxu0 0.0
    %1873 = vmatprep.subr.mxu0 0.0
    %1874 = vmatpush1.msra.mxu0 0.0
    %1875 = vmatprep.subr.mxu0 0.0
    %1876 = vmatpush1.msra.mxu0 0.0
    %1877 = vmatprep.subr.mxu0 0.0
    %1878 = vmatpush1.msra.mxu0 0.0
    %1879 = vmatprep.subr.mxu0 0.0
    %1880 = vmatpush1.msra.mxu0 0.0
    %1881 = vmatprep.subr.mxu0 0.0
    %1882 = vmatpush1.msra.mxu0 0.0
    %1883 = vmatprep.subr.mxu0 0.0
    %1884 = vmatpush1.msra.mxu0 0.0
    %1885 = vmatprep.subr.mxu0 0.0
    %1886 = vmatpush1.msra.mxu0 0.0
    %v1887 = vand.u32 %v1701, 4294901760
    %v1888 = vsub.f32 %v1701, %v1887
    %v1889 = vand.u32 %v1888, 4294901760
    %v1890 = vsub.f32 %v1888, %v1889
    %v1891 = vand.u32 %v1890, 4294901760
    %1892 = vmatprep.subr.mxu0 %v1891
    %v1893 = vand.u32 %v1700, 4294901760
    %v1894 = vsub.f32 %v1700, %v1893
    %v1895 = vand.u32 %v1894, 4294901760
    %v1896 = vsub.f32 %v1894, %v1895
    %v1897 = vand.u32 %v1896, 4294901760
    %1898 = vmatpush1.msra.mxu0 %v1897
    %v1899 = vand.u32 %v1697, 4294901760
    %v1900 = vsub.f32 %v1697, %v1899
    %v1901 = vand.u32 %v1900, 4294901760
    %v1902 = vsub.f32 %v1900, %v1901
    %v1903 = vand.u32 %v1902, 4294901760
    %1904 = vmatprep.subr.mxu0 %v1903
    %v1905 = vand.u32 %v1696, 4294901760
    %v1906 = vsub.f32 %v1696, %v1905
    %v1907 = vand.u32 %v1906, 4294901760
    %v1908 = vsub.f32 %v1906, %v1907
    %v1909 = vand.u32 %v1908, 4294901760
    %1910 = vmatpush1.msra.mxu0 %v1909
    %v1911 = vand.u32 %v1693, 4294901760
    %v1912 = vsub.f32 %v1693, %v1911
    %v1913 = vand.u32 %v1912, 4294901760
    %v1914 = vsub.f32 %v1912, %v1913
    %v1915 = vand.u32 %v1914, 4294901760
    %1916 = vmatprep.subr.mxu0 %v1915
    %v1917 = vand.u32 %v1692, 4294901760
    %v1918 = vsub.f32 %v1692, %v1917
    %v1919 = vand.u32 %v1918, 4294901760
    %v1920 = vsub.f32 %v1918, %v1919
    %v1921 = vand.u32 %v1920, 4294901760
    %1922 = vmatpush1.msra.mxu0 %v1921
    %v1923 = vand.u32 %v1689, 4294901760
    %v1924 = vsub.f32 %v1689, %v1923
    %v1925 = vand.u32 %v1924, 4294901760
    %v1926 = vsub.f32 %v1924, %v1925
    %v1927 = vand.u32 %v1926, 4294901760
    %1928 = vmatprep.subr.mxu0 %v1927
    %v1929 = vand.u32 %v1688, 4294901760
    %v1930 = vsub.f32 %v1688, %v1929
    %v1931 = vand.u32 %v1930, 4294901760
    %v1932 = vsub.f32 %v1930, %v1931
    %v1933 = vand.u32 %v1932, 4294901760
    %1934 = vmatpush1.msra.mxu0 %v1933
    %1935 = vmatprep.subr.mxu0 0.0
    %1936 = vmatpush2.msra.mxu0 0.0
    %1937 = vmatprep.subr.mxu0 0.0
    %1938 = vmatpush2.msra.mxu0 0.0
    %1939 = vmatprep.subr.mxu0 0.0
    %1940 = vmatpush2.msra.mxu0 0.0
    %1941 = vmatprep.subr.mxu0 0.0
    %1942 = vmatpush2.msra.mxu0 0.0
    %1943 = vmatprep.subr.mxu0 0.0
    %1944 = vmatpush2.msra.mxu0 0.0
    %1945 = vmatprep.subr.mxu0 0.0
    %1946 = vmatpush2.msra.mxu0 0.0
    %1947 = vmatprep.subr.mxu0 0.0
    %1948 = vmatpush2.msra.mxu0 0.0
    %1949 = vmatprep.subr.mxu0 0.0
    %1950 = vmatpush2.msra.mxu0 0.0
    %1951 = vmatprep.subr.mxu0 0.0
    %1952 = vmatpush2.msra.mxu0 0.0
    %1953 = vmatprep.subr.mxu0 0.0
    %1954 = vmatpush2.msra.mxu0 0.0
    %1955 = vmatprep.subr.mxu0 0.0
    %1956 = vmatpush2.msra.mxu0 0.0
    %1957 = vmatprep.subr.mxu0 0.0
    %1958 = vmatpush2.msra.mxu0 0.0
    %1959 = vmatprep.subr.mxu0 0.0
    %1960 = vmatpush2.msra.mxu0 0.0
    %1961 = vmatprep.subr.mxu0 0.0
    %1962 = vmatpush2.msra.mxu0 0.0
    %1963 = vmatprep.subr.mxu0 0.0
    %1964 = vmatpush2.msra.mxu0 0.0
    %1965 = vmatprep.subr.mxu0 0.0
    %1966 = vmatpush2.msra.mxu0 0.0
    %1967 = vmatprep.mubr.f32.mxu0 0.0
    %v1968 = vand.u32 %v1735, 4294901760
    %1969 = vmatmul.mubr.f32.gmra.mxu0 %v1968
    %v1970 = vpop.f32.mrf.mxu0
    %v1971 = vadd.f32 %v1826, %v1970
    %v1972 = vpop.f32.mrf.mxu0
    %v1973 = vadd.f32 %v1828, %v1972
    %1974 = vmatprep.mubr.f32.mxu0 0.0
    %v1975 = vand.u32 %v1738, 4294901760
    %1976 = vmatmul.mubr.f32.gmra.mxu0 %v1975
    %v1977 = vpop.f32.mrf.mxu0
    %v1978 = vadd.f32 %v1837, %v1977
    %v1979 = vpop.f32.mrf.mxu0
    %v1980 = vadd.f32 %v1839, %v1979
    %1981 = vmatprep.mubr.f32.mxu0 0.0
    %v1982 = vand.u32 %v1741, 4294901760
    %1983 = vmatmul.mubr.f32.gmra.mxu0 %v1982
    %v1984 = vpop.f32.mrf.mxu0
    %v1985 = vadd.f32 %v1848, %v1984
    %v1986 = vpop.f32.mrf.mxu0
    %v1987 = vadd.f32 %v1850, %v1986
    %1988 = vmatprep.mubr.f32.mxu0 0.0
    %v1989 = vand.u32 %v1744, 4294901760
    %1990 = vmatmul.mubr.f32.gmra.mxu0 %v1989
    %v1991 = vpop.f32.mrf.mxu0
    %v1992 = vadd.f32 %v1859, %v1991
    %v1993 = vpop.f32.mrf.mxu0
    %v1994 = vadd.f32 %v1861, %v1993
    %1995 = vdwg.mxu0
    %1996 = vmatprep.subr.mxu0 0.0
    %1997 = vmatpush1.msra.mxu0 0.0
    %1998 = vmatprep.subr.mxu0 0.0
    %1999 = vmatpush1.msra.mxu0 0.0
    %2000 = vmatprep.subr.mxu0 0.0
    %2001 = vmatpush1.msra.mxu0 0.0
    %2002 = vmatprep.subr.mxu0 0.0
    %2003 = vmatpush1.msra.mxu0 0.0
    %2004 = vmatprep.subr.mxu0 0.0
    %2005 = vmatpush1.msra.mxu0 0.0
    %2006 = vmatprep.subr.mxu0 0.0
    %2007 = vmatpush1.msra.mxu0 0.0
    %2008 = vmatprep.subr.mxu0 0.0
    %2009 = vmatpush1.msra.mxu0 0.0
    %2010 = vmatprep.subr.mxu0 0.0
    %2011 = vmatpush1.msra.mxu0 0.0
    %2012 = vmatprep.subr.mxu0 0.0
    %2013 = vmatpush1.msra.mxu0 0.0
    %2014 = vmatprep.subr.mxu0 0.0
    %2015 = vmatpush1.msra.mxu0 0.0
    %2016 = vmatprep.subr.mxu0 0.0
    %2017 = vmatpush1.msra.mxu0 0.0
    %2018 = vmatprep.subr.mxu0 0.0
    %2019 = vmatpush1.msra.mxu0 0.0
    %v2020 = vand.u32 %v1701, 4294901760
    %v2021 = vsub.f32 %v1701, %v2020
    %2022 = vmatprep.subr.mxu0 %v2021
    %v2023 = vand.u32 %v1700, 4294901760
    %v2024 = vsub.f32 %v1700, %v2023
    %2025 = vmatpush1.msra.mxu0 %v2024
    %v2026 = vand.u32 %v1697, 4294901760
    %v2027 = vsub.f32 %v1697, %v2026
    %2028 = vmatprep.subr.mxu0 %v2027
    %v2029 = vand.u32 %v1696, 4294901760
    %v2030 = vsub.f32 %v1696, %v2029
    %2031 = vmatpush1.msra.mxu0 %v2030
    %v2032 = vand.u32 %v1693, 4294901760
    %v2033 = vsub.f32 %v1693, %v2032
    %2034 = vmatprep.subr.mxu0 %v2033
    %v2035 = vand.u32 %v1692, 4294901760
    %v2036 = vsub.f32 %v1692, %v2035
    %2037 = vmatpush1.msra.mxu0 %v2036
    %v2038 = vand.u32 %v1689, 4294901760
    %v2039 = vsub.f32 %v1689, %v2038
    %2040 = vmatprep.subr.mxu0 %v2039
    %v2041 = vand.u32 %v1688, 4294901760
    %v2042 = vsub.f32 %v1688, %v2041
    %2043 = vmatpush1.msra.mxu0 %v2042
    %2044 = vmatprep.subr.mxu0 0.0
    %2045 = vmatpush2.msra.mxu0 0.0
    %2046 = vmatprep.subr.mxu0 0.0
    %2047 = vmatpush2.msra.mxu0 0.0
    %2048 = vmatprep.subr.mxu0 0.0
    %2049 = vmatpush2.msra.mxu0 0.0
    %2050 = vmatprep.subr.mxu0 0.0
    %2051 = vmatpush2.msra.mxu0 0.0
    %2052 = vmatprep.subr.mxu0 0.0
    %2053 = vmatpush2.msra.mxu0 0.0
    %2054 = vmatprep.subr.mxu0 0.0
    %2055 = vmatpush2.msra.mxu0 0.0
    %2056 = vmatprep.subr.mxu0 0.0
    %2057 = vmatpush2.msra.mxu0 0.0
    %2058 = vmatprep.subr.mxu0 0.0
    %2059 = vmatpush2.msra.mxu0 0.0
    %2060 = vmatprep.subr.mxu0 0.0
    %2061 = vmatpush2.msra.mxu0 0.0
    %2062 = vmatprep.subr.mxu0 0.0
    %2063 = vmatpush2.msra.mxu0 0.0
    %2064 = vmatprep.subr.mxu0 0.0
    %2065 = vmatpush2.msra.mxu0 0.0
    %2066 = vmatprep.subr.mxu0 0.0
    %2067 = vmatpush2.msra.mxu0 0.0
    %2068 = vmatprep.subr.mxu0 0.0
    %2069 = vmatpush2.msra.mxu0 0.0
    %2070 = vmatprep.subr.mxu0 0.0
    %2071 = vmatpush2.msra.mxu0 0.0
    %2072 = vmatprep.subr.mxu0 0.0
    %2073 = vmatpush2.msra.mxu0 0.0
    %2074 = vmatprep.subr.mxu0 0.0
    %2075 = vmatpush2.msra.mxu0 0.0
    %2076 = vmatprep.mubr.f32.mxu0 0.0
    %v2077 = vand.u32 %v1735, 4294901760
    %v2078 = vsub.f32 %v1735, %v2077
    %2079 = vmatmul.mubr.f32.gmra.mxu0 %v2078
    %v2080 = vpop.f32.mrf.mxu0
    %v2081 = vadd.f32 %v1971, %v2080
    %v2082 = vpop.f32.mrf.mxu0
    %v2083 = vadd.f32 %v1973, %v2082
    %2084 = vmatprep.mubr.f32.mxu0 0.0
    %v2085 = vand.u32 %v1738, 4294901760
    %v2086 = vsub.f32 %v1738, %v2085
    %2087 = vmatmul.mubr.f32.gmra.mxu0 %v2086
    %v2088 = vpop.f32.mrf.mxu0
    %v2089 = vadd.f32 %v1978, %v2088
    %v2090 = vpop.f32.mrf.mxu0
    %v2091 = vadd.f32 %v1980, %v2090
    %2092 = vmatprep.mubr.f32.mxu0 0.0
    %v2093 = vand.u32 %v1741, 4294901760
    %v2094 = vsub.f32 %v1741, %v2093
    %2095 = vmatmul.mubr.f32.gmra.mxu0 %v2094
    %v2096 = vpop.f32.mrf.mxu0
    %v2097 = vadd.f32 %v1985, %v2096
    %v2098 = vpop.f32.mrf.mxu0
    %v2099 = vadd.f32 %v1987, %v2098
    %2100 = vmatprep.mubr.f32.mxu0 0.0
    %v2101 = vand.u32 %v1744, 4294901760
    %v2102 = vsub.f32 %v1744, %v2101
    %2103 = vmatmul.mubr.f32.gmra.mxu0 %v2102
    %v2104 = vpop.f32.mrf.mxu0
    %v2105 = vadd.f32 %v1992, %v2104
    %v2106 = vpop.f32.mrf.mxu0
    %v2107 = vadd.f32 %v1994, %v2106
    %2108 = vdwg.mxu0
    %2109 = vmatprep.subr.mxu0 0.0
    %2110 = vmatpush1.msra.mxu0 0.0
    %2111 = vmatprep.subr.mxu0 0.0
    %2112 = vmatpush1.msra.mxu0 0.0
    %2113 = vmatprep.subr.mxu0 0.0
    %2114 = vmatpush1.msra.mxu0 0.0
    %2115 = vmatprep.subr.mxu0 0.0
    %2116 = vmatpush1.msra.mxu0 0.0
    %2117 = vmatprep.subr.mxu0 0.0
    %2118 = vmatpush1.msra.mxu0 0.0
    %2119 = vmatprep.subr.mxu0 0.0
    %2120 = vmatpush1.msra.mxu0 0.0
    %2121 = vmatprep.subr.mxu0 0.0
    %2122 = vmatpush1.msra.mxu0 0.0
    %2123 = vmatprep.subr.mxu0 0.0
    %2124 = vmatpush1.msra.mxu0 0.0
    %2125 = vmatprep.subr.mxu0 0.0
    %2126 = vmatpush1.msra.mxu0 0.0
    %2127 = vmatprep.subr.mxu0 0.0
    %2128 = vmatpush1.msra.mxu0 0.0
    %2129 = vmatprep.subr.mxu0 0.0
    %2130 = vmatpush1.msra.mxu0 0.0
    %2131 = vmatprep.subr.mxu0 0.0
    %2132 = vmatpush1.msra.mxu0 0.0
    %v2133 = vand.u32 %v1701, 4294901760
    %2134 = vmatprep.subr.mxu0 %v2133
    %v2135 = vand.u32 %v1700, 4294901760
    %2136 = vmatpush1.msra.mxu0 %v2135
    %v2137 = vand.u32 %v1697, 4294901760
    %2138 = vmatprep.subr.mxu0 %v2137
    %v2139 = vand.u32 %v1696, 4294901760
    %2140 = vmatpush1.msra.mxu0 %v2139
    %v2141 = vand.u32 %v1693, 4294901760
    %2142 = vmatprep.subr.mxu0 %v2141
    %v2143 = vand.u32 %v1692, 4294901760
    %2144 = vmatpush1.msra.mxu0 %v2143
    %v2145 = vand.u32 %v1689, 4294901760
    %2146 = vmatprep.subr.mxu0 %v2145
    %v2147 = vand.u32 %v1688, 4294901760
    %2148 = vmatpush1.msra.mxu0 %v2147
    %2149 = vmatprep.subr.mxu0 0.0
    %2150 = vmatpush2.msra.mxu0 0.0
    %2151 = vmatprep.subr.mxu0 0.0
    %2152 = vmatpush2.msra.mxu0 0.0
    %2153 = vmatprep.subr.mxu0 0.0
    %2154 = vmatpush2.msra.mxu0 0.0
    %2155 = vmatprep.subr.mxu0 0.0
    %2156 = vmatpush2.msra.mxu0 0.0
    %2157 = vmatprep.subr.mxu0 0.0
    %2158 = vmatpush2.msra.mxu0 0.0
    %2159 = vmatprep.subr.mxu0 0.0
    %2160 = vmatpush2.msra.mxu0 0.0
    %2161 = vmatprep.subr.mxu0 0.0
    %2162 = vmatpush2.msra.mxu0 0.0
    %2163 = vmatprep.subr.mxu0 0.0
    %2164 = vmatpush2.msra.mxu0 0.0
    %2165 = vmatprep.subr.mxu0 0.0
    %2166 = vmatpush2.msra.mxu0 0.0
    %2167 = vmatprep.subr.mxu0 0.0
    %2168 = vmatpush2.msra.mxu0 0.0
    %2169 = vmatprep.subr.mxu0 0.0
    %2170 = vmatpush2.msra.mxu0 0.0
    %2171 = vmatprep.subr.mxu0 0.0
    %2172 = vmatpush2.msra.mxu0 0.0
    %2173 = vmatprep.subr.mxu0 0.0
    %2174 = vmatpush2.msra.mxu0 0.0
    %2175 = vmatprep.subr.mxu0 0.0
    %2176 = vmatpush2.msra.mxu0 0.0
    %2177 = vmatprep.subr.mxu0 0.0
    %2178 = vmatpush2.msra.mxu0 0.0
    %2179 = vmatprep.subr.mxu0 0.0
    %2180 = vmatpush2.msra.mxu0 0.0
    %2181 = vmatprep.mubr.f32.mxu0 0.0
    %v2182 = vand.u32 %v1735, 4294901760
    %v2183 = vsub.f32 %v1735, %v2182
    %v2184 = vand.u32 %v2183, 4294901760
    %2185 = vmatmul.mubr.f32.gmra.mxu0 %v2184
    %v2186 = vpop.f32.mrf.mxu0
    %v2187 = vadd.f32 %v2081, %v2186
    %v2188 = vpop.f32.mrf.mxu0
    %v2189 = vadd.f32 %v2083, %v2188
    %2190 = vmatprep.mubr.f32.mxu0 0.0
    %v2191 = vand.u32 %v1738, 4294901760
    %v2192 = vsub.f32 %v1738, %v2191
    %v2193 = vand.u32 %v2192, 4294901760
    %2194 = vmatmul.mubr.f32.gmra.mxu0 %v2193
    %v2195 = vpop.f32.mrf.mxu0
    %v2196 = vadd.f32 %v2089, %v2195
    %v2197 = vpop.f32.mrf.mxu0
    %v2198 = vadd.f32 %v2091, %v2197
    %2199 = vmatprep.mubr.f32.mxu0 0.0
    %v2200 = vand.u32 %v1741, 4294901760
    %v2201 = vsub.f32 %v1741, %v2200
    %v2202 = vand.u32 %v2201, 4294901760
    %2203 = vmatmul.mubr.f32.gmra.mxu0 %v2202
    %v2204 = vpop.f32.mrf.mxu0
    %v2205 = vadd.f32 %v2097, %v2204
    %v2206 = vpop.f32.mrf.mxu0
    %v2207 = vadd.f32 %v2099, %v2206
    %2208 = vmatprep.mubr.f32.mxu0 0.0
    %v2209 = vand.u32 %v1744, 4294901760
    %v2210 = vsub.f32 %v1744, %v2209
    %v2211 = vand.u32 %v2210, 4294901760
    %2212 = vmatmul.mubr.f32.gmra.mxu0 %v2211
    %v2213 = vpop.f32.mrf.mxu0
    %v2214 = vadd.f32 %v2105, %v2213
    %v2215 = vpop.f32.mrf.mxu0
    %v2216 = vadd.f32 %v2107, %v2215
    %2217 = vdwg.mxu0
    %2218 = vmatprep.subr.mxu0 0.0
    %2219 = vmatpush1.msra.mxu0 0.0
    %2220 = vmatprep.subr.mxu0 0.0
    %2221 = vmatpush1.msra.mxu0 0.0
    %2222 = vmatprep.subr.mxu0 0.0
    %2223 = vmatpush1.msra.mxu0 0.0
    %2224 = vmatprep.subr.mxu0 0.0
    %2225 = vmatpush1.msra.mxu0 0.0
    %2226 = vmatprep.subr.mxu0 0.0
    %2227 = vmatpush1.msra.mxu0 0.0
    %2228 = vmatprep.subr.mxu0 0.0
    %2229 = vmatpush1.msra.mxu0 0.0
    %2230 = vmatprep.subr.mxu0 0.0
    %2231 = vmatpush1.msra.mxu0 0.0
    %2232 = vmatprep.subr.mxu0 0.0
    %2233 = vmatpush1.msra.mxu0 0.0
    %2234 = vmatprep.subr.mxu0 0.0
    %2235 = vmatpush1.msra.mxu0 0.0
    %2236 = vmatprep.subr.mxu0 0.0
    %2237 = vmatpush1.msra.mxu0 0.0
    %2238 = vmatprep.subr.mxu0 0.0
    %2239 = vmatpush1.msra.mxu0 0.0
    %2240 = vmatprep.subr.mxu0 0.0
    %2241 = vmatpush1.msra.mxu0 0.0
    %v2242 = vand.u32 %v1701, 4294901760
    %v2243 = vsub.f32 %v1701, %v2242
    %v2244 = vand.u32 %v2243, 4294901760
    %2245 = vmatprep.subr.mxu0 %v2244
    %v2246 = vand.u32 %v1700, 4294901760
    %v2247 = vsub.f32 %v1700, %v2246
    %v2248 = vand.u32 %v2247, 4294901760
    %2249 = vmatpush1.msra.mxu0 %v2248
    %v2250 = vand.u32 %v1697, 4294901760
    %v2251 = vsub.f32 %v1697, %v2250
    %v2252 = vand.u32 %v2251, 4294901760
    %2253 = vmatprep.subr.mxu0 %v2252
    %v2254 = vand.u32 %v1696, 4294901760
    %v2255 = vsub.f32 %v1696, %v2254
    %v2256 = vand.u32 %v2255, 4294901760
    %2257 = vmatpush1.msra.mxu0 %v2256
    %v2258 = vand.u32 %v1693, 4294901760
    %v2259 = vsub.f32 %v1693, %v2258
    %v2260 = vand.u32 %v2259, 4294901760
    %2261 = vmatprep.subr.mxu0 %v2260
    %v2262 = vand.u32 %v1692, 4294901760
    %v2263 = vsub.f32 %v1692, %v2262
    %v2264 = vand.u32 %v2263, 4294901760
    %2265 = vmatpush1.msra.mxu0 %v2264
    %v2266 = vand.u32 %v1689, 4294901760
    %v2267 = vsub.f32 %v1689, %v2266
    %v2268 = vand.u32 %v2267, 4294901760
    %2269 = vmatprep.subr.mxu0 %v2268
    %v2270 = vand.u32 %v1688, 4294901760
    %v2271 = vsub.f32 %v1688, %v2270
    %v2272 = vand.u32 %v2271, 4294901760
    %2273 = vmatpush1.msra.mxu0 %v2272
    %2274 = vmatprep.subr.mxu0 0.0
    %2275 = vmatpush2.msra.mxu0 0.0
    %2276 = vmatprep.subr.mxu0 0.0
    %2277 = vmatpush2.msra.mxu0 0.0
    %2278 = vmatprep.subr.mxu0 0.0
    %2279 = vmatpush2.msra.mxu0 0.0
    %2280 = vmatprep.subr.mxu0 0.0
    %2281 = vmatpush2.msra.mxu0 0.0
    %2282 = vmatprep.subr.mxu0 0.0
    %2283 = vmatpush2.msra.mxu0 0.0
    %2284 = vmatprep.subr.mxu0 0.0
    %2285 = vmatpush2.msra.mxu0 0.0
    %2286 = vmatprep.subr.mxu0 0.0
    %2287 = vmatpush2.msra.mxu0 0.0
    %2288 = vmatprep.subr.mxu0 0.0
    %2289 = vmatpush2.msra.mxu0 0.0
    %2290 = vmatprep.subr.mxu0 0.0
    %2291 = vmatpush2.msra.mxu0 0.0
    %2292 = vmatprep.subr.mxu0 0.0
    %2293 = vmatpush2.msra.mxu0 0.0
    %2294 = vmatprep.subr.mxu0 0.0
    %2295 = vmatpush2.msra.mxu0 0.0
    %2296 = vmatprep.subr.mxu0 0.0
    %2297 = vmatpush2.msra.mxu0 0.0
    %2298 = vmatprep.subr.mxu0 0.0
    %2299 = vmatpush2.msra.mxu0 0.0
    %2300 = vmatprep.subr.mxu0 0.0
    %2301 = vmatpush2.msra.mxu0 0.0
    %2302 = vmatprep.subr.mxu0 0.0
    %2303 = vmatpush2.msra.mxu0 0.0
    %2304 = vmatprep.subr.mxu0 0.0
    %2305 = vmatpush2.msra.mxu0 0.0
    %2306 = vmatprep.mubr.f32.mxu0 0.0
    %v2307 = vand.u32 %v1735, 4294901760
    %2308 = vmatmul.mubr.f32.gmra.mxu0 %v2307
    %v2309 = vpop.f32.mrf.mxu0
    %v2310 = vadd.f32 %v2187, %v2309
    %v2311 = vpop.f32.mrf.mxu0
    %v2312 = vadd.f32 %v2189, %v2311
    %2313 = vmatprep.mubr.f32.mxu0 0.0
    %v2314 = vand.u32 %v1738, 4294901760
    %2315 = vmatmul.mubr.f32.gmra.mxu0 %v2314
    %v2316 = vpop.f32.mrf.mxu0
    %v2317 = vadd.f32 %v2196, %v2316
    %v2318 = vpop.f32.mrf.mxu0
    %v2319 = vadd.f32 %v2198, %v2318
    %2320 = vmatprep.mubr.f32.mxu0 0.0
    %v2321 = vand.u32 %v1741, 4294901760
    %2322 = vmatmul.mubr.f32.gmra.mxu0 %v2321
    %v2323 = vpop.f32.mrf.mxu0
    %v2324 = vadd.f32 %v2205, %v2323
    %v2325 = vpop.f32.mrf.mxu0
    %v2326 = vadd.f32 %v2207, %v2325
    %2327 = vmatprep.mubr.f32.mxu0 0.0
    %v2328 = vand.u32 %v1744, 4294901760
    %2329 = vmatmul.mubr.f32.gmra.mxu0 %v2328
    %v2330 = vpop.f32.mrf.mxu0
    %v2331 = vadd.f32 %v2214, %v2330
    %v2332 = vpop.f32.mrf.mxu0
    %v2333 = vadd.f32 %v2216, %v2332
    %2334 = vdwg.mxu0
    %2335 = vmatprep.subr.mxu0 0.0
    %2336 = vmatpush1.msra.mxu0 0.0
    %2337 = vmatprep.subr.mxu0 0.0
    %2338 = vmatpush1.msra.mxu0 0.0
    %2339 = vmatprep.subr.mxu0 0.0
    %2340 = vmatpush1.msra.mxu0 0.0
    %2341 = vmatprep.subr.mxu0 0.0
    %2342 = vmatpush1.msra.mxu0 0.0
    %2343 = vmatprep.subr.mxu0 0.0
    %2344 = vmatpush1.msra.mxu0 0.0
    %2345 = vmatprep.subr.mxu0 0.0
    %2346 = vmatpush1.msra.mxu0 0.0
    %2347 = vmatprep.subr.mxu0 0.0
    %2348 = vmatpush1.msra.mxu0 0.0
    %2349 = vmatprep.subr.mxu0 0.0
    %2350 = vmatpush1.msra.mxu0 0.0
    %2351 = vmatprep.subr.mxu0 0.0
    %2352 = vmatpush1.msra.mxu0 0.0
    %2353 = vmatprep.subr.mxu0 0.0
    %2354 = vmatpush1.msra.mxu0 0.0
    %2355 = vmatprep.subr.mxu0 0.0
    %2356 = vmatpush1.msra.mxu0 0.0
    %2357 = vmatprep.subr.mxu0 0.0
    %2358 = vmatpush1.msra.mxu0 0.0
    %v2359 = vand.u32 %v1701, 4294901760
    %2360 = vmatprep.subr.mxu0 %v2359
    %v2361 = vand.u32 %v1700, 4294901760
    %2362 = vmatpush1.msra.mxu0 %v2361
    %v2363 = vand.u32 %v1697, 4294901760
    %2364 = vmatprep.subr.mxu0 %v2363
    %v2365 = vand.u32 %v1696, 4294901760
    %2366 = vmatpush1.msra.mxu0 %v2365
    %v2367 = vand.u32 %v1693, 4294901760
    %2368 = vmatprep.subr.mxu0 %v2367
    %v2369 = vand.u32 %v1692, 4294901760
    %2370 = vmatpush1.msra.mxu0 %v2369
    %v2371 = vand.u32 %v1689, 4294901760
    %2372 = vmatprep.subr.mxu0 %v2371
    %v2373 = vand.u32 %v1688, 4294901760
    %2374 = vmatpush1.msra.mxu0 %v2373
    %2375 = vmatprep.subr.mxu0 0.0
    %2376 = vmatpush2.msra.mxu0 0.0
    %2377 = vmatprep.subr.mxu0 0.0
    %2378 = vmatpush2.msra.mxu0 0.0
    %2379 = vmatprep.subr.mxu0 0.0
    %2380 = vmatpush2.msra.mxu0 0.0
    %2381 = vmatprep.subr.mxu0 0.0
    %2382 = vmatpush2.msra.mxu0 0.0
    %2383 = vmatprep.subr.mxu0 0.0
    %2384 = vmatpush2.msra.mxu0 0.0
    %2385 = vmatprep.subr.mxu0 0.0
    %2386 = vmatpush2.msra.mxu0 0.0
    %2387 = vmatprep.subr.mxu0 0.0
    %2388 = vmatpush2.msra.mxu0 0.0
    %2389 = vmatprep.subr.mxu0 0.0
    %2390 = vmatpush2.msra.mxu0 0.0
    %2391 = vmatprep.subr.mxu0 0.0
    %2392 = vmatpush2.msra.mxu0 0.0
    %2393 = vmatprep.subr.mxu0 0.0
    %2394 = vmatpush2.msra.mxu0 0.0
    %2395 = vmatprep.subr.mxu0 0.0
    %2396 = vmatpush2.msra.mxu0 0.0
    %2397 = vmatprep.subr.mxu0 0.0
    %2398 = vmatpush2.msra.mxu0 0.0
    %2399 = vmatprep.subr.mxu0 0.0
    %2400 = vmatpush2.msra.mxu0 0.0
    %2401 = vmatprep.subr.mxu0 0.0
    %2402 = vmatpush2.msra.mxu0 0.0
    %2403 = vmatprep.subr.mxu0 0.0
    %2404 = vmatpush2.msra.mxu0 0.0
    %2405 = vmatprep.subr.mxu0 0.0
    %2406 = vmatpush2.msra.mxu0 0.0
    %2407 = vmatprep.mubr.f32.mxu0 0.0
    %v2408 = vand.u32 %v1735, 4294901760
    %2409 = vmatmul.mubr.f32.gmra.mxu0 %v2408
    %v2410 = vpop.f32.mrf.mxu0
    %v2411 = vadd.f32 %v2310, %v2410
    %v2412 = vpop.f32.mrf.mxu0
    %v2413 = vadd.f32 %v2312, %v2412
    %2414 = vmatprep.mubr.f32.mxu0 0.0
    %v2415 = vand.u32 %v1738, 4294901760
    %2416 = vmatmul.mubr.f32.gmra.mxu0 %v2415
    %v2417 = vpop.f32.mrf.mxu0
    %v2418 = vadd.f32 %v2317, %v2417
    %v2419 = vpop.f32.mrf.mxu0
    %v2420 = vadd.f32 %v2319, %v2419
    %2421 = vmatprep.mubr.f32.mxu0 0.0
    %v2422 = vand.u32 %v1741, 4294901760
    %2423 = vmatmul.mubr.f32.gmra.mxu0 %v2422
    %v2424 = vpop.f32.mrf.mxu0
    %v2425 = vadd.f32 %v2324, %v2424
    %v2426 = vpop.f32.mrf.mxu0
    %v2427 = vadd.f32 %v2326, %v2426
    %2428 = vmatprep.mubr.f32.mxu0 0.0
    %v2429 = vand.u32 %v1744, 4294901760
    %2430 = vmatmul.mubr.f32.gmra.mxu0 %v2429
    %v2431 = vpop.f32.mrf.mxu0
    %v2432 = vadd.f32 %v2331, %v2431
    %v2433 = vpop.f32.mrf.mxu0
    %v2434 = vadd.f32 %v2333, %v2433
    %2435 = vdwg.mxu0
    %2436 = vmatprep.subr.mxu0 0.0
    %2437 = vmatpush1.msra.mxu0 0.0
    %2438 = vmatprep.subr.mxu0 0.0
    %2439 = vmatpush1.msra.mxu0 0.0
    %2440 = vmatprep.subr.mxu0 0.0
    %2441 = vmatpush1.msra.mxu0 0.0
    %2442 = vmatprep.subr.mxu0 0.0
    %2443 = vmatpush1.msra.mxu0 0.0
    %2444 = vmatprep.subr.mxu0 0.0
    %2445 = vmatpush1.msra.mxu0 0.0
    %2446 = vmatprep.subr.mxu0 0.0
    %2447 = vmatpush1.msra.mxu0 0.0
    %2448 = vmatprep.subr.mxu0 0.0
    %2449 = vmatpush1.msra.mxu0 0.0
    %2450 = vmatprep.subr.mxu0 0.0
    %2451 = vmatpush1.msra.mxu0 0.0
    %2452 = vmatprep.subr.mxu0 0.0
    %2453 = vmatpush1.msra.mxu0 0.0
    %2454 = vmatprep.subr.mxu0 0.0
    %2455 = vmatpush1.msra.mxu0 0.0
    %2456 = vmatprep.subr.mxu0 0.0
    %2457 = vmatpush1.msra.mxu0 0.0
    %2458 = vmatprep.subr.mxu0 0.0
    %2459 = vmatpush1.msra.mxu0 0.0
    %v2460 = vand.u32 %v1703, 4294901760
    %2461 = vmatprep.subr.mxu0 %v2460
    %v2462 = vand.u32 %v1702, 4294901760
    %2463 = vmatpush1.msra.mxu0 %v2462
    %v2464 = vand.u32 %v1699, 4294901760
    %2465 = vmatprep.subr.mxu0 %v2464
    %v2466 = vand.u32 %v1698, 4294901760
    %2467 = vmatpush1.msra.mxu0 %v2466
    %v2468 = vand.u32 %v1695, 4294901760
    %2469 = vmatprep.subr.mxu0 %v2468
    %v2470 = vand.u32 %v1694, 4294901760
    %2471 = vmatpush1.msra.mxu0 %v2470
    %v2472 = vand.u32 %v1691, 4294901760
    %2473 = vmatprep.subr.mxu0 %v2472
    %v2474 = vand.u32 %v1690, 4294901760
    %2475 = vmatpush1.msra.mxu0 %v2474
    %2476 = vmatprep.subr.mxu0 0.0
    %2477 = vmatpush2.msra.mxu0 0.0
    %2478 = vmatprep.subr.mxu0 0.0
    %2479 = vmatpush2.msra.mxu0 0.0
    %2480 = vmatprep.subr.mxu0 0.0
    %2481 = vmatpush2.msra.mxu0 0.0
    %2482 = vmatprep.subr.mxu0 0.0
    %2483 = vmatpush2.msra.mxu0 0.0
    %2484 = vmatprep.subr.mxu0 0.0
    %2485 = vmatpush2.msra.mxu0 0.0
    %2486 = vmatprep.subr.mxu0 0.0
    %2487 = vmatpush2.msra.mxu0 0.0
    %2488 = vmatprep.subr.mxu0 0.0
    %2489 = vmatpush2.msra.mxu0 0.0
    %2490 = vmatprep.subr.mxu0 0.0
    %2491 = vmatpush2.msra.mxu0 0.0
    %2492 = vmatprep.subr.mxu0 0.0
    %2493 = vmatpush2.msra.mxu0 0.0
    %2494 = vmatprep.subr.mxu0 0.0
    %2495 = vmatpush2.msra.mxu0 0.0
    %2496 = vmatprep.subr.mxu0 0.0
    %2497 = vmatpush2.msra.mxu0 0.0
    %2498 = vmatprep.subr.mxu0 0.0
    %2499 = vmatpush2.msra.mxu0 0.0
    %2500 = vmatprep.subr.mxu0 0.0
    %2501 = vmatpush2.msra.mxu0 0.0
    %2502 = vmatprep.subr.mxu0 0.0
    %2503 = vmatpush2.msra.mxu0 0.0
    %2504 = vmatprep.subr.mxu0 0.0
    %2505 = vmatpush2.msra.mxu0 0.0
    %2506 = vmatprep.subr.mxu0 0.0
    %2507 = vmatpush2.msra.mxu0 0.0
    %2508 = vmatprep.mubr.f32.mxu0 0.0
    %v2509 = vand.u32 %v1735, 4294901760
    %v2510 = vsub.f32 %v1735, %v2509
    %v2511 = vand.u32 %v2510, 4294901760
    %v2512 = vsub.f32 %v2510, %v2511
    %v2513 = vand.u32 %v2512, 4294901760
    %2514 = vmatmul.mubr.f32.gmra.mxu0 %v2513
    %v2515 = vpop.f32.mrf.mxu0
    %v2516 = vadd.f32 %v1717, %v2515
    %v2517 = vpop.f32.mrf.mxu0
    %v2518 = vadd.f32 %v1717, %v2517
    %2519 = vmatprep.mubr.f32.mxu0 0.0
    %v2520 = vand.u32 %v1738, 4294901760
    %v2521 = vsub.f32 %v1738, %v2520
    %v2522 = vand.u32 %v2521, 4294901760
    %v2523 = vsub.f32 %v2521, %v2522
    %v2524 = vand.u32 %v2523, 4294901760
    %2525 = vmatmul.mubr.f32.gmra.mxu0 %v2524
    %v2526 = vpop.f32.mrf.mxu0
    %v2527 = vadd.f32 %v1722, %v2526
    %v2528 = vpop.f32.mrf.mxu0
    %v2529 = vadd.f32 %v1722, %v2528
    %2530 = vmatprep.mubr.f32.mxu0 0.0
    %v2531 = vand.u32 %v1741, 4294901760
    %v2532 = vsub.f32 %v1741, %v2531
    %v2533 = vand.u32 %v2532, 4294901760
    %v2534 = vsub.f32 %v2532, %v2533
    %v2535 = vand.u32 %v2534, 4294901760
    %2536 = vmatmul.mubr.f32.gmra.mxu0 %v2535
    %v2537 = vpop.f32.mrf.mxu0
    %v2538 = vadd.f32 %v1727, %v2537
    %v2539 = vpop.f32.mrf.mxu0
    %v2540 = vadd.f32 %v1727, %v2539
    %2541 = vmatprep.mubr.f32.mxu0 0.0
    %v2542 = vand.u32 %v1744, 4294901760
    %v2543 = vsub.f32 %v1744, %v2542
    %v2544 = vand.u32 %v2543, 4294901760
    %v2545 = vsub.f32 %v2543, %v2544
    %v2546 = vand.u32 %v2545, 4294901760
    %2547 = vmatmul.mubr.f32.gmra.mxu0 %v2546
    %v2548 = vpop.f32.mrf.mxu0
    %v2549 = vadd.f32 %v1732, %v2548
    %v2550 = vpop.f32.mrf.mxu0
    %v2551 = vadd.f32 %v1732, %v2550
    %2552 = vdwg.mxu0
    %2553 = vmatprep.subr.mxu0 0.0
    %2554 = vmatpush1.msra.mxu0 0.0
    %2555 = vmatprep.subr.mxu0 0.0
    %2556 = vmatpush1.msra.mxu0 0.0
    %2557 = vmatprep.subr.mxu0 0.0
    %2558 = vmatpush1.msra.mxu0 0.0
    %2559 = vmatprep.subr.mxu0 0.0
    %2560 = vmatpush1.msra.mxu0 0.0
    %2561 = vmatprep.subr.mxu0 0.0
    %2562 = vmatpush1.msra.mxu0 0.0
    %2563 = vmatprep.subr.mxu0 0.0
    %2564 = vmatpush1.msra.mxu0 0.0
    %2565 = vmatprep.subr.mxu0 0.0
    %2566 = vmatpush1.msra.mxu0 0.0
    %2567 = vmatprep.subr.mxu0 0.0
    %2568 = vmatpush1.msra.mxu0 0.0
    %2569 = vmatprep.subr.mxu0 0.0
    %2570 = vmatpush1.msra.mxu0 0.0
    %2571 = vmatprep.subr.mxu0 0.0
    %2572 = vmatpush1.msra.mxu0 0.0
    %2573 = vmatprep.subr.mxu0 0.0
    %2574 = vmatpush1.msra.mxu0 0.0
    %2575 = vmatprep.subr.mxu0 0.0
    %2576 = vmatpush1.msra.mxu0 0.0
    %v2577 = vand.u32 %v1703, 4294901760
    %v2578 = vsub.f32 %v1703, %v2577
    %v2579 = vand.u32 %v2578, 4294901760
    %v2580 = vsub.f32 %v2578, %v2579
    %v2581 = vand.u32 %v2580, 4294901760
    %2582 = vmatprep.subr.mxu0 %v2581
    %v2583 = vand.u32 %v1702, 4294901760
    %v2584 = vsub.f32 %v1702, %v2583
    %v2585 = vand.u32 %v2584, 4294901760
    %v2586 = vsub.f32 %v2584, %v2585
    %v2587 = vand.u32 %v2586, 4294901760
    %2588 = vmatpush1.msra.mxu0 %v2587
    %v2589 = vand.u32 %v1699, 4294901760
    %v2590 = vsub.f32 %v1699, %v2589
    %v2591 = vand.u32 %v2590, 4294901760
    %v2592 = vsub.f32 %v2590, %v2591
    %v2593 = vand.u32 %v2592, 4294901760
    %2594 = vmatprep.subr.mxu0 %v2593
    %v2595 = vand.u32 %v1698, 4294901760
    %v2596 = vsub.f32 %v1698, %v2595
    %v2597 = vand.u32 %v2596, 4294901760
    %v2598 = vsub.f32 %v2596, %v2597
    %v2599 = vand.u32 %v2598, 4294901760
    %2600 = vmatpush1.msra.mxu0 %v2599
    %v2601 = vand.u32 %v1695, 4294901760
    %v2602 = vsub.f32 %v1695, %v2601
    %v2603 = vand.u32 %v2602, 4294901760
    %v2604 = vsub.f32 %v2602, %v2603
    %v2605 = vand.u32 %v2604, 4294901760
    %2606 = vmatprep.subr.mxu0 %v2605
    %v2607 = vand.u32 %v1694, 4294901760
    %v2608 = vsub.f32 %v1694, %v2607
    %v2609 = vand.u32 %v2608, 4294901760
    %v2610 = vsub.f32 %v2608, %v2609
    %v2611 = vand.u32 %v2610, 4294901760
    %2612 = vmatpush1.msra.mxu0 %v2611
    %v2613 = vand.u32 %v1691, 4294901760
    %v2614 = vsub.f32 %v1691, %v2613
    %v2615 = vand.u32 %v2614, 4294901760
    %v2616 = vsub.f32 %v2614, %v2615
    %v2617 = vand.u32 %v2616, 4294901760
    %2618 = vmatprep.subr.mxu0 %v2617
    %v2619 = vand.u32 %v1690, 4294901760
    %v2620 = vsub.f32 %v1690, %v2619
    %v2621 = vand.u32 %v2620, 4294901760
    %v2622 = vsub.f32 %v2620, %v2621
    %v2623 = vand.u32 %v2622, 4294901760
    %2624 = vmatpush1.msra.mxu0 %v2623
    %2625 = vmatprep.subr.mxu0 0.0
    %2626 = vmatpush2.msra.mxu0 0.0
    %2627 = vmatprep.subr.mxu0 0.0
    %2628 = vmatpush2.msra.mxu0 0.0
    %2629 = vmatprep.subr.mxu0 0.0
    %2630 = vmatpush2.msra.mxu0 0.0
    %2631 = vmatprep.subr.mxu0 0.0
    %2632 = vmatpush2.msra.mxu0 0.0
    %2633 = vmatprep.subr.mxu0 0.0
    %2634 = vmatpush2.msra.mxu0 0.0
    %2635 = vmatprep.subr.mxu0 0.0
    %2636 = vmatpush2.msra.mxu0 0.0
    %2637 = vmatprep.subr.mxu0 0.0
    %2638 = vmatpush2.msra.mxu0 0.0
    %2639 = vmatprep.subr.mxu0 0.0
    %2640 = vmatpush2.msra.mxu0 0.0
    %2641 = vmatprep.subr.mxu0 0.0
    %2642 = vmatpush2.msra.mxu0 0.0
    %2643 = vmatprep.subr.mxu0 0.0
    %2644 = vmatpush2.msra.mxu0 0.0
    %2645 = vmatprep.subr.mxu0 0.0
    %2646 = vmatpush2.msra.mxu0 0.0
    %2647 = vmatprep.subr.mxu0 0.0
    %2648 = vmatpush2.msra.mxu0 0.0
    %2649 = vmatprep.subr.mxu0 0.0
    %2650 = vmatpush2.msra.mxu0 0.0
    %2651 = vmatprep.subr.mxu0 0.0
    %2652 = vmatpush2.msra.mxu0 0.0
    %2653 = vmatprep.subr.mxu0 0.0
    %2654 = vmatpush2.msra.mxu0 0.0
    %2655 = vmatprep.subr.mxu0 0.0
    %2656 = vmatpush2.msra.mxu0 0.0
    %2657 = vmatprep.mubr.f32.mxu0 0.0
    %v2658 = vand.u32 %v1735, 4294901760
    %2659 = vmatmul.mubr.f32.gmra.mxu0 %v2658
    %v2660 = vpop.f32.mrf.mxu0
    %v2661 = vadd.f32 %v2516, %v2660
    %v2662 = vpop.f32.mrf.mxu0
    %v2663 = vadd.f32 %v2518, %v2662
    %2664 = vmatprep.mubr.f32.mxu0 0.0
    %v2665 = vand.u32 %v1738, 4294901760
    %2666 = vmatmul.mubr.f32.gmra.mxu0 %v2665
    %v2667 = vpop.f32.mrf.mxu0
    %v2668 = vadd.f32 %v2527, %v2667
    %v2669 = vpop.f32.mrf.mxu0
    %v2670 = vadd.f32 %v2529, %v2669
    %2671 = vmatprep.mubr.f32.mxu0 0.0
    %v2672 = vand.u32 %v1741, 4294901760
    %2673 = vmatmul.mubr.f32.gmra.mxu0 %v2672
    %v2674 = vpop.f32.mrf.mxu0
    %v2675 = vadd.f32 %v2538, %v2674
    %v2676 = vpop.f32.mrf.mxu0
    %v2677 = vadd.f32 %v2540, %v2676
    %2678 = vmatprep.mubr.f32.mxu0 0.0
    %v2679 = vand.u32 %v1744, 4294901760
    %2680 = vmatmul.mubr.f32.gmra.mxu0 %v2679
    %v2681 = vpop.f32.mrf.mxu0
    %v2682 = vadd.f32 %v2549, %v2681
    %v2683 = vpop.f32.mrf.mxu0
    %v2684 = vadd.f32 %v2551, %v2683
    %2685 = vdwg.mxu0
    %2686 = vmatprep.subr.mxu0 0.0
    %2687 = vmatpush1.msra.mxu0 0.0
    %2688 = vmatprep.subr.mxu0 0.0
    %2689 = vmatpush1.msra.mxu0 0.0
    %2690 = vmatprep.subr.mxu0 0.0
    %2691 = vmatpush1.msra.mxu0 0.0
    %2692 = vmatprep.subr.mxu0 0.0
    %2693 = vmatpush1.msra.mxu0 0.0
    %2694 = vmatprep.subr.mxu0 0.0
    %2695 = vmatpush1.msra.mxu0 0.0
    %2696 = vmatprep.subr.mxu0 0.0
    %2697 = vmatpush1.msra.mxu0 0.0
    %2698 = vmatprep.subr.mxu0 0.0
    %2699 = vmatpush1.msra.mxu0 0.0
    %2700 = vmatprep.subr.mxu0 0.0
    %2701 = vmatpush1.msra.mxu0 0.0
    %2702 = vmatprep.subr.mxu0 0.0
    %2703 = vmatpush1.msra.mxu0 0.0
    %2704 = vmatprep.subr.mxu0 0.0
    %2705 = vmatpush1.msra.mxu0 0.0
    %2706 = vmatprep.subr.mxu0 0.0
    %2707 = vmatpush1.msra.mxu0 0.0
    %2708 = vmatprep.subr.mxu0 0.0
    %2709 = vmatpush1.msra.mxu0 0.0
    %v2710 = vand.u32 %v1703, 4294901760
    %v2711 = vsub.f32 %v1703, %v2710
    %2712 = vmatprep.subr.mxu0 %v2711
    %v2713 = vand.u32 %v1702, 4294901760
    %v2714 = vsub.f32 %v1702, %v2713
    %2715 = vmatpush1.msra.mxu0 %v2714
    %v2716 = vand.u32 %v1699, 4294901760
    %v2717 = vsub.f32 %v1699, %v2716
    %2718 = vmatprep.subr.mxu0 %v2717
    %v2719 = vand.u32 %v1698, 4294901760
    %v2720 = vsub.f32 %v1698, %v2719
    %2721 = vmatpush1.msra.mxu0 %v2720
    %v2722 = vand.u32 %v1695, 4294901760
    %v2723 = vsub.f32 %v1695, %v2722
    %2724 = vmatprep.subr.mxu0 %v2723
    %v2725 = vand.u32 %v1694, 4294901760
    %v2726 = vsub.f32 %v1694, %v2725
    %2727 = vmatpush1.msra.mxu0 %v2726
    %v2728 = vand.u32 %v1691, 4294901760
    %v2729 = vsub.f32 %v1691, %v2728
    %2730 = vmatprep.subr.mxu0 %v2729
    %v2731 = vand.u32 %v1690, 4294901760
    %v2732 = vsub.f32 %v1690, %v2731
    %2733 = vmatpush1.msra.mxu0 %v2732
    %2734 = vmatprep.subr.mxu0 0.0
    %2735 = vmatpush2.msra.mxu0 0.0
    %2736 = vmatprep.subr.mxu0 0.0
    %2737 = vmatpush2.msra.mxu0 0.0
    %2738 = vmatprep.subr.mxu0 0.0
    %2739 = vmatpush2.msra.mxu0 0.0
    %2740 = vmatprep.subr.mxu0 0.0
    %2741 = vmatpush2.msra.mxu0 0.0
    %2742 = vmatprep.subr.mxu0 0.0
    %2743 = vmatpush2.msra.mxu0 0.0
    %2744 = vmatprep.subr.mxu0 0.0
    %2745 = vmatpush2.msra.mxu0 0.0
    %2746 = vmatprep.subr.mxu0 0.0
    %2747 = vmatpush2.msra.mxu0 0.0
    %2748 = vmatprep.subr.mxu0 0.0
    %2749 = vmatpush2.msra.mxu0 0.0
    %2750 = vmatprep.subr.mxu0 0.0
    %2751 = vmatpush2.msra.mxu0 0.0
    %2752 = vmatprep.subr.mxu0 0.0
    %2753 = vmatpush2.msra.mxu0 0.0
    %2754 = vmatprep.subr.mxu0 0.0
    %2755 = vmatpush2.msra.mxu0 0.0
    %2756 = vmatprep.subr.mxu0 0.0
    %2757 = vmatpush2.msra.mxu0 0.0
    %2758 = vmatprep.subr.mxu0 0.0
    %2759 = vmatpush2.msra.mxu0 0.0
    %2760 = vmatprep.subr.mxu0 0.0
    %2761 = vmatpush2.msra.mxu0 0.0
    %2762 = vmatprep.subr.mxu0 0.0
    %2763 = vmatpush2.msra.mxu0 0.0
    %2764 = vmatprep.subr.mxu0 0.0
    %2765 = vmatpush2.msra.mxu0 0.0
    %2766 = vmatprep.mubr.f32.mxu0 0.0
    %v2767 = vand.u32 %v1735, 4294901760
    %v2768 = vsub.f32 %v1735, %v2767
    %2769 = vmatmul.mubr.f32.gmra.mxu0 %v2768
    %v2770 = vpop.f32.mrf.mxu0
    %v2771 = vadd.f32 %v2661, %v2770
    %v2772 = vpop.f32.mrf.mxu0
    %v2773 = vadd.f32 %v2663, %v2772
    %2774 = vmatprep.mubr.f32.mxu0 0.0
    %v2775 = vand.u32 %v1738, 4294901760
    %v2776 = vsub.f32 %v1738, %v2775
    %2777 = vmatmul.mubr.f32.gmra.mxu0 %v2776
    %v2778 = vpop.f32.mrf.mxu0
    %v2779 = vadd.f32 %v2668, %v2778
    %v2780 = vpop.f32.mrf.mxu0
    %v2781 = vadd.f32 %v2670, %v2780
    %2782 = vmatprep.mubr.f32.mxu0 0.0
    %v2783 = vand.u32 %v1741, 4294901760
    %v2784 = vsub.f32 %v1741, %v2783
    %2785 = vmatmul.mubr.f32.gmra.mxu0 %v2784
    %v2786 = vpop.f32.mrf.mxu0
    %v2787 = vadd.f32 %v2675, %v2786
    %v2788 = vpop.f32.mrf.mxu0
    %v2789 = vadd.f32 %v2677, %v2788
    %2790 = vmatprep.mubr.f32.mxu0 0.0
    %v2791 = vand.u32 %v1744, 4294901760
    %v2792 = vsub.f32 %v1744, %v2791
    %2793 = vmatmul.mubr.f32.gmra.mxu0 %v2792
    %v2794 = vpop.f32.mrf.mxu0
    %v2795 = vadd.f32 %v2682, %v2794
    %v2796 = vpop.f32.mrf.mxu0
    %v2797 = vadd.f32 %v2684, %v2796
    %2798 = vdwg.mxu0
    %2799 = vmatprep.subr.mxu0 0.0
    %2800 = vmatpush1.msra.mxu0 0.0
    %2801 = vmatprep.subr.mxu0 0.0
    %2802 = vmatpush1.msra.mxu0 0.0
    %2803 = vmatprep.subr.mxu0 0.0
    %2804 = vmatpush1.msra.mxu0 0.0
    %2805 = vmatprep.subr.mxu0 0.0
    %2806 = vmatpush1.msra.mxu0 0.0
    %2807 = vmatprep.subr.mxu0 0.0
    %2808 = vmatpush1.msra.mxu0 0.0
    %2809 = vmatprep.subr.mxu0 0.0
    %2810 = vmatpush1.msra.mxu0 0.0
    %2811 = vmatprep.subr.mxu0 0.0
    %2812 = vmatpush1.msra.mxu0 0.0
    %2813 = vmatprep.subr.mxu0 0.0
    %2814 = vmatpush1.msra.mxu0 0.0
    %2815 = vmatprep.subr.mxu0 0.0
    %2816 = vmatpush1.msra.mxu0 0.0
    %2817 = vmatprep.subr.mxu0 0.0
    %2818 = vmatpush1.msra.mxu0 0.0
    %2819 = vmatprep.subr.mxu0 0.0
    %2820 = vmatpush1.msra.mxu0 0.0
    %2821 = vmatprep.subr.mxu0 0.0
    %2822 = vmatpush1.msra.mxu0 0.0
    %v2823 = vand.u32 %v1703, 4294901760
    %2824 = vmatprep.subr.mxu0 %v2823
    %v2825 = vand.u32 %v1702, 4294901760
    %2826 = vmatpush1.msra.mxu0 %v2825
    %v2827 = vand.u32 %v1699, 4294901760
    %2828 = vmatprep.subr.mxu0 %v2827
    %v2829 = vand.u32 %v1698, 4294901760
    %2830 = vmatpush1.msra.mxu0 %v2829
    %v2831 = vand.u32 %v1695, 4294901760
    %2832 = vmatprep.subr.mxu0 %v2831
    %v2833 = vand.u32 %v1694, 4294901760
    %2834 = vmatpush1.msra.mxu0 %v2833
    %v2835 = vand.u32 %v1691, 4294901760
    %2836 = vmatprep.subr.mxu0 %v2835
    %v2837 = vand.u32 %v1690, 4294901760
    %2838 = vmatpush1.msra.mxu0 %v2837
    %2839 = vmatprep.subr.mxu0 0.0
    %2840 = vmatpush2.msra.mxu0 0.0
    %2841 = vmatprep.subr.mxu0 0.0
    %2842 = vmatpush2.msra.mxu0 0.0
    %2843 = vmatprep.subr.mxu0 0.0
    %2844 = vmatpush2.msra.mxu0 0.0
    %2845 = vmatprep.subr.mxu0 0.0
    %2846 = vmatpush2.msra.mxu0 0.0
    %2847 = vmatprep.subr.mxu0 0.0
    %2848 = vmatpush2.msra.mxu0 0.0
    %2849 = vmatprep.subr.mxu0 0.0
    %2850 = vmatpush2.msra.mxu0 0.0
    %2851 = vmatprep.subr.mxu0 0.0
    %2852 = vmatpush2.msra.mxu0 0.0
    %2853 = vmatprep.subr.mxu0 0.0
    %2854 = vmatpush2.msra.mxu0 0.0
    %2855 = vmatprep.subr.mxu0 0.0
    %2856 = vmatpush2.msra.mxu0 0.0
    %2857 = vmatprep.subr.mxu0 0.0
    %2858 = vmatpush2.msra.mxu0 0.0
    %2859 = vmatprep.subr.mxu0 0.0
    %2860 = vmatpush2.msra.mxu0 0.0
    %2861 = vmatprep.subr.mxu0 0.0
    %2862 = vmatpush2.msra.mxu0 0.0
    %2863 = vmatprep.subr.mxu0 0.0
    %2864 = vmatpush2.msra.mxu0 0.0
    %2865 = vmatprep.subr.mxu0 0.0
    %2866 = vmatpush2.msra.mxu0 0.0
    %2867 = vmatprep.subr.mxu0 0.0
    %2868 = vmatpush2.msra.mxu0 0.0
    %2869 = vmatprep.subr.mxu0 0.0
    %2870 = vmatpush2.msra.mxu0 0.0
    %2871 = vmatprep.mubr.f32.mxu0 0.0
    %v2872 = vand.u32 %v1735, 4294901760
    %v2873 = vsub.f32 %v1735, %v2872
    %v2874 = vand.u32 %v2873, 4294901760
    %2875 = vmatmul.mubr.f32.gmra.mxu0 %v2874
    %v2876 = vpop.f32.mrf.mxu0
    %v2877 = vadd.f32 %v2771, %v2876
    %v2878 = vpop.f32.mrf.mxu0
    %v2879 = vadd.f32 %v2773, %v2878
    %2880 = vmatprep.mubr.f32.mxu0 0.0
    %v2881 = vand.u32 %v1738, 4294901760
    %v2882 = vsub.f32 %v1738, %v2881
    %v2883 = vand.u32 %v2882, 4294901760
    %2884 = vmatmul.mubr.f32.gmra.mxu0 %v2883
    %v2885 = vpop.f32.mrf.mxu0
    %v2886 = vadd.f32 %v2779, %v2885
    %v2887 = vpop.f32.mrf.mxu0
    %v2888 = vadd.f32 %v2781, %v2887
    %2889 = vmatprep.mubr.f32.mxu0 0.0
    %v2890 = vand.u32 %v1741, 4294901760
    %v2891 = vsub.f32 %v1741, %v2890
    %v2892 = vand.u32 %v2891, 4294901760
    %2893 = vmatmul.mubr.f32.gmra.mxu0 %v2892
    %v2894 = vpop.f32.mrf.mxu0
    %v2895 = vadd.f32 %v2787, %v2894
    %v2896 = vpop.f32.mrf.mxu0
    %v2897 = vadd.f32 %v2789, %v2896
    %2898 = vmatprep.mubr.f32.mxu0 0.0
    %v2899 = vand.u32 %v1744, 4294901760
    %v2900 = vsub.f32 %v1744, %v2899
    %v2901 = vand.u32 %v2900, 4294901760
    %2902 = vmatmul.mubr.f32.gmra.mxu0 %v2901
    %v2903 = vpop.f32.mrf.mxu0
    %v2904 = vadd.f32 %v2795, %v2903
    %v2905 = vpop.f32.mrf.mxu0
    %v2906 = vadd.f32 %v2797, %v2905
    %2907 = vdwg.mxu0
    %2908 = vmatprep.subr.mxu0 0.0
    %2909 = vmatpush1.msra.mxu0 0.0
    %2910 = vmatprep.subr.mxu0 0.0
    %2911 = vmatpush1.msra.mxu0 0.0
    %2912 = vmatprep.subr.mxu0 0.0
    %2913 = vmatpush1.msra.mxu0 0.0
    %2914 = vmatprep.subr.mxu0 0.0
    %2915 = vmatpush1.msra.mxu0 0.0
    %2916 = vmatprep.subr.mxu0 0.0
    %2917 = vmatpush1.msra.mxu0 0.0
    %2918 = vmatprep.subr.mxu0 0.0
    %2919 = vmatpush1.msra.mxu0 0.0
    %2920 = vmatprep.subr.mxu0 0.0
    %2921 = vmatpush1.msra.mxu0 0.0
    %2922 = vmatprep.subr.mxu0 0.0
    %2923 = vmatpush1.msra.mxu0 0.0
    %2924 = vmatprep.subr.mxu0 0.0
    %2925 = vmatpush1.msra.mxu0 0.0
    %2926 = vmatprep.subr.mxu0 0.0
    %2927 = vmatpush1.msra.mxu0 0.0
    %2928 = vmatprep.subr.mxu0 0.0
    %2929 = vmatpush1.msra.mxu0 0.0
    %2930 = vmatprep.subr.mxu0 0.0
    %2931 = vmatpush1.msra.mxu0 0.0
    %v2932 = vand.u32 %v1703, 4294901760
    %v2933 = vsub.f32 %v1703, %v2932
    %v2934 = vand.u32 %v2933, 4294901760
    %2935 = vmatprep.subr.mxu0 %v2934
    %v2936 = vand.u32 %v1702, 4294901760
    %v2937 = vsub.f32 %v1702, %v2936
    %v2938 = vand.u32 %v2937, 4294901760
    %2939 = vmatpush1.msra.mxu0 %v2938
    %v2940 = vand.u32 %v1699, 4294901760
    %v2941 = vsub.f32 %v1699, %v2940
    %v2942 = vand.u32 %v2941, 4294901760
    %2943 = vmatprep.subr.mxu0 %v2942
    %v2944 = vand.u32 %v1698, 4294901760
    %v2945 = vsub.f32 %v1698, %v2944
    %v2946 = vand.u32 %v2945, 4294901760
    %2947 = vmatpush1.msra.mxu0 %v2946
    %v2948 = vand.u32 %v1695, 4294901760
    %v2949 = vsub.f32 %v1695, %v2948
    %v2950 = vand.u32 %v2949, 4294901760
    %2951 = vmatprep.subr.mxu0 %v2950
    %v2952 = vand.u32 %v1694, 4294901760
    %v2953 = vsub.f32 %v1694, %v2952
    %v2954 = vand.u32 %v2953, 4294901760
    %2955 = vmatpush1.msra.mxu0 %v2954
    %v2956 = vand.u32 %v1691, 4294901760
    %v2957 = vsub.f32 %v1691, %v2956
    %v2958 = vand.u32 %v2957, 4294901760
    %2959 = vmatprep.subr.mxu0 %v2958
    %v2960 = vand.u32 %v1690, 4294901760
    %v2961 = vsub.f32 %v1690, %v2960
    %v2962 = vand.u32 %v2961, 4294901760
    %2963 = vmatpush1.msra.mxu0 %v2962
    %2964 = vmatprep.subr.mxu0 0.0
    %2965 = vmatpush2.msra.mxu0 0.0
    %2966 = vmatprep.subr.mxu0 0.0
    %2967 = vmatpush2.msra.mxu0 0.0
    %2968 = vmatprep.subr.mxu0 0.0
    %2969 = vmatpush2.msra.mxu0 0.0
    %2970 = vmatprep.subr.mxu0 0.0
    %2971 = vmatpush2.msra.mxu0 0.0
    %2972 = vmatprep.subr.mxu0 0.0
    %2973 = vmatpush2.msra.mxu0 0.0
    %2974 = vmatprep.subr.mxu0 0.0
    %2975 = vmatpush2.msra.mxu0 0.0
    %2976 = vmatprep.subr.mxu0 0.0
    %2977 = vmatpush2.msra.mxu0 0.0
    %2978 = vmatprep.subr.mxu0 0.0
    %2979 = vmatpush2.msra.mxu0 0.0
    %2980 = vmatprep.subr.mxu0 0.0
    %2981 = vmatpush2.msra.mxu0 0.0
    %2982 = vmatprep.subr.mxu0 0.0
    %2983 = vmatpush2.msra.mxu0 0.0
    %2984 = vmatprep.subr.mxu0 0.0
    %2985 = vmatpush2.msra.mxu0 0.0
    %2986 = vmatprep.subr.mxu0 0.0
    %2987 = vmatpush2.msra.mxu0 0.0
    %2988 = vmatprep.subr.mxu0 0.0
    %2989 = vmatpush2.msra.mxu0 0.0
    %2990 = vmatprep.subr.mxu0 0.0
    %2991 = vmatpush2.msra.mxu0 0.0
    %2992 = vmatprep.subr.mxu0 0.0
    %2993 = vmatpush2.msra.mxu0 0.0
    %2994 = vmatprep.subr.mxu0 0.0
    %2995 = vmatpush2.msra.mxu0 0.0
    %2996 = vmatprep.mubr.f32.mxu0 0.0
    %v2997 = vand.u32 %v1735, 4294901760
    %2998 = vmatmul.mubr.f32.gmra.mxu0 %v2997
    %v2999 = vpop.f32.mrf.mxu0
    %v3000 = vadd.f32 %v2877, %v2999
    %v3001 = vpop.f32.mrf.mxu0
    %v3002 = vadd.f32 %v2879, %v3001
    %3003 = vmatprep.mubr.f32.mxu0 0.0
    %v3004 = vand.u32 %v1738, 4294901760
    %3005 = vmatmul.mubr.f32.gmra.mxu0 %v3004
    %v3006 = vpop.f32.mrf.mxu0
    %v3007 = vadd.f32 %v2886, %v3006
    %v3008 = vpop.f32.mrf.mxu0
    %v3009 = vadd.f32 %v2888, %v3008
    %3010 = vmatprep.mubr.f32.mxu0 0.0
    %v3011 = vand.u32 %v1741, 4294901760
    %3012 = vmatmul.mubr.f32.gmra.mxu0 %v3011
    %v3013 = vpop.f32.mrf.mxu0
    %v3014 = vadd.f32 %v2895, %v3013
    %v3015 = vpop.f32.mrf.mxu0
    %v3016 = vadd.f32 %v2897, %v3015
    %3017 = vmatprep.mubr.f32.mxu0 0.0
    %v3018 = vand.u32 %v1744, 4294901760
    %3019 = vmatmul.mubr.f32.gmra.mxu0 %v3018
    %v3020 = vpop.f32.mrf.mxu0
    %v3021 = vadd.f32 %v2904, %v3020
    %v3022 = vpop.f32.mrf.mxu0
    %v3023 = vadd.f32 %v2906, %v3022
    %3024 = vdwg.mxu0
    %3025 = vmatprep.subr.mxu0 0.0
    %3026 = vmatpush1.msra.mxu0 0.0
    %3027 = vmatprep.subr.mxu0 0.0
    %3028 = vmatpush1.msra.mxu0 0.0
    %3029 = vmatprep.subr.mxu0 0.0
    %3030 = vmatpush1.msra.mxu0 0.0
    %3031 = vmatprep.subr.mxu0 0.0
    %3032 = vmatpush1.msra.mxu0 0.0
    %3033 = vmatprep.subr.mxu0 0.0
    %3034 = vmatpush1.msra.mxu0 0.0
    %3035 = vmatprep.subr.mxu0 0.0
    %3036 = vmatpush1.msra.mxu0 0.0
    %3037 = vmatprep.subr.mxu0 0.0
    %3038 = vmatpush1.msra.mxu0 0.0
    %3039 = vmatprep.subr.mxu0 0.0
    %3040 = vmatpush1.msra.mxu0 0.0
    %3041 = vmatprep.subr.mxu0 0.0
    %3042 = vmatpush1.msra.mxu0 0.0
    %3043 = vmatprep.subr.mxu0 0.0
    %3044 = vmatpush1.msra.mxu0 0.0
    %3045 = vmatprep.subr.mxu0 0.0
    %3046 = vmatpush1.msra.mxu0 0.0
    %3047 = vmatprep.subr.mxu0 0.0
    %3048 = vmatpush1.msra.mxu0 0.0
    %v3049 = vand.u32 %v1703, 4294901760
    %3050 = vmatprep.subr.mxu0 %v3049
    %v3051 = vand.u32 %v1702, 4294901760
    %3052 = vmatpush1.msra.mxu0 %v3051
    %v3053 = vand.u32 %v1699, 4294901760
    %3054 = vmatprep.subr.mxu0 %v3053
    %v3055 = vand.u32 %v1698, 4294901760
    %3056 = vmatpush1.msra.mxu0 %v3055
    %v3057 = vand.u32 %v1695, 4294901760
    %3058 = vmatprep.subr.mxu0 %v3057
    %v3059 = vand.u32 %v1694, 4294901760
    %3060 = vmatpush1.msra.mxu0 %v3059
    %v3061 = vand.u32 %v1691, 4294901760
    %3062 = vmatprep.subr.mxu0 %v3061
    %v3063 = vand.u32 %v1690, 4294901760
    %3064 = vmatpush1.msra.mxu0 %v3063
    %3065 = vmatprep.subr.mxu0 0.0
    %3066 = vmatpush2.msra.mxu0 0.0
    %3067 = vmatprep.subr.mxu0 0.0
    %3068 = vmatpush2.msra.mxu0 0.0
    %3069 = vmatprep.subr.mxu0 0.0
    %3070 = vmatpush2.msra.mxu0 0.0
    %3071 = vmatprep.subr.mxu0 0.0
    %3072 = vmatpush2.msra.mxu0 0.0
    %3073 = vmatprep.subr.mxu0 0.0
    %3074 = vmatpush2.msra.mxu0 0.0
    %3075 = vmatprep.subr.mxu0 0.0
    %3076 = vmatpush2.msra.mxu0 0.0
    %3077 = vmatprep.subr.mxu0 0.0
    %3078 = vmatpush2.msra.mxu0 0.0
    %3079 = vmatprep.subr.mxu0 0.0
    %3080 = vmatpush2.msra.mxu0 0.0
    %3081 = vmatprep.subr.mxu0 0.0
    %3082 = vmatpush2.msra.mxu0 0.0
    %3083 = vmatprep.subr.mxu0 0.0
    %3084 = vmatpush2.msra.mxu0 0.0
    %3085 = vmatprep.subr.mxu0 0.0
    %3086 = vmatpush2.msra.mxu0 0.0
    %3087 = vmatprep.subr.mxu0 0.0
    %3088 = vmatpush2.msra.mxu0 0.0
    %3089 = vmatprep.subr.mxu0 0.0
    %3090 = vmatpush2.msra.mxu0 0.0
    %3091 = vmatprep.subr.mxu0 0.0
    %3092 = vmatpush2.msra.mxu0 0.0
    %3093 = vmatprep.subr.mxu0 0.0
    %3094 = vmatpush2.msra.mxu0 0.0
    %3095 = vmatprep.subr.mxu0 0.0
    %3096 = vmatpush2.msra.mxu0 0.0
    %3097 = vmatprep.mubr.f32.mxu0 0.0
    %v3098 = vand.u32 %v1735, 4294901760
    %3099 = vmatmul.mubr.f32.gmra.mxu0 %v3098
    %v3100 = vpop.f32.mrf.mxu0
    %v3101 = vadd.f32 %v3000, %v3100
    %v3102 = vpop.f32.mrf.mxu0
    %v3103 = vadd.f32 %v3002, %v3102
    %3104 = vmatprep.mubr.f32.mxu0 0.0
    %v3105 = vand.u32 %v1738, 4294901760
    %3106 = vmatmul.mubr.f32.gmra.mxu0 %v3105
    %v3107 = vpop.f32.mrf.mxu0
    %v3108 = vadd.f32 %v3007, %v3107
    %v3109 = vpop.f32.mrf.mxu0
    %v3110 = vadd.f32 %v3009, %v3109
    %3111 = vmatprep.mubr.f32.mxu0 0.0
    %v3112 = vand.u32 %v1741, 4294901760
    %3113 = vmatmul.mubr.f32.gmra.mxu0 %v3112
    %v3114 = vpop.f32.mrf.mxu0
    %v3115 = vadd.f32 %v3014, %v3114
    %v3116 = vpop.f32.mrf.mxu0
    %v3117 = vadd.f32 %v3016, %v3116
    %3118 = vmatprep.mubr.f32.mxu0 0.0
    %v3119 = vand.u32 %v1744, 4294901760
    %3120 = vmatmul.mubr.f32.gmra.mxu0 %v3119
    %v3121 = vpop.f32.mrf.mxu0
    %v3122 = vadd.f32 %v3021, %v3121
    %v3123 = vpop.f32.mrf.mxu0
    %v3124 = vadd.f32 %v3023, %v3123
    %3125 = vdwg.mxu0
    %v3126 = vtanh.pop %v2411
    %v3127 = vtanh.pop %v2413
    %v3128 = vtanh.pop %v3101
    %v3129 = vtanh.pop %v3103
    %v3130 = vtanh.pop %v2418
    %v3131 = vtanh.pop %v2420
    %v3132 = vtanh.pop %v3108
    %v3133 = vtanh.pop %v3110
    %v3134 = vtanh.pop %v2425
    %v3135 = vtanh.pop %v2427
    %v3136 = vtanh.pop %v3115
    %v3137 = vtanh.pop %v3117
    %v3138 = vtanh.pop %v2432
    %v3139 = vtanh.pop %v2434
    %v3140 = vtanh.pop %v3122
    %v3141 = vtanh.pop %v3124
    %s3142 = scalar_lea.vmem %s1, 64
    %v3143 = vld [vmem:[%s3142] sm:$0xff]
    %v3144 = vld [vmem:[%s3142 + $0x8] sm:$0xff]
    %v3145 = vld [vmem:[%s3142 + $0x10] sm:$0xff]
    %v3146 = vld [vmem:[%s3142 + $0x18] sm:$0xff]
    %s3147 = scalar_lea.vmem %s2, 96
    %v3148 = vld [vmem:[%s3147] sm:$0xff]
    %v3149 = vld [vmem:[%s3147 + $0x8] sm:$0xff]
    %v3150 = vld [vmem:[%s3147 + $0x10] sm:$0xff]
    %v3151 = vld [vmem:[%s3147 + $0x18] sm:$0xff]
    %3153 = vset.pattern.permute.xlu0 0
    %3154 = vperm.xlu0 %3153, %v3148
    %v3155 = vpop.permute.xlu0 %3154
    %3158 = vset.pattern.permute.xlu0 0
    %3159 = vperm.xlu0 %3158, %v3149
    %v3160 = vpop.permute.xlu0 %3159
    %3163 = vset.pattern.permute.xlu0 0
    %3164 = vperm.xlu0 %3163, %v3150
    %v3165 = vpop.permute.xlu0 %3164
    %3168 = vset.pattern.permute.xlu0 0
    %3169 = vperm.xlu0 %3168, %v3151
    %v3170 = vpop.permute.xlu0 %3169
    %v3173 = vsel %vm295, %v3143, 0
    %v3176 = vsel %vm295, %v3144, 0
    %v3179 = vsel %vm295, %v3145, 0
    %v3182 = vsel %vm295, %v3146, 0
    %3184 = vmatprep.subr.mxu0 0.0
    %3185 = vmatpush1.msra.mxu0 0.0
    %3186 = vmatprep.subr.mxu0 0.0
    %3187 = vmatpush1.msra.mxu0 0.0
    %3188 = vmatprep.subr.mxu0 0.0
    %3189 = vmatpush1.msra.mxu0 0.0
    %3190 = vmatprep.subr.mxu0 0.0
    %3191 = vmatpush1.msra.mxu0 0.0
    %3192 = vmatprep.subr.mxu0 0.0
    %3193 = vmatpush1.msra.mxu0 0.0
    %3194 = vmatprep.subr.mxu0 0.0
    %3195 = vmatpush1.msra.mxu0 0.0
    %3196 = vmatprep.subr.mxu0 0.0
    %3197 = vmatpush1.msra.mxu0 0.0
    %3198 = vmatprep.subr.mxu0 0.0
    %3199 = vmatpush1.msra.mxu0 0.0
    %3200 = vmatprep.subr.mxu0 0.0
    %3201 = vmatpush1.msra.mxu0 0.0
    %3202 = vmatprep.subr.mxu0 0.0
    %3203 = vmatpush1.msra.mxu0 0.0
    %3204 = vmatprep.subr.mxu0 0.0
    %3205 = vmatpush1.msra.mxu0 0.0
    %3206 = vmatprep.subr.mxu0 0.0
    %3207 = vmatpush1.msra.mxu0 0.0
    %v3208 = vand.u32 %v3139, 4294901760
    %3209 = vmatprep.subr.mxu0 %v3208
    %v3210 = vand.u32 %v3138, 4294901760
    %3211 = vmatpush1.msra.mxu0 %v3210
    %v3212 = vand.u32 %v3135, 4294901760
    %3213 = vmatprep.subr.mxu0 %v3212
    %v3214 = vand.u32 %v3134, 4294901760
    %3215 = vmatpush1.msra.mxu0 %v3214
    %v3216 = vand.u32 %v3131, 4294901760
    %3217 = vmatprep.subr.mxu0 %v3216
    %v3218 = vand.u32 %v3130, 4294901760
    %3219 = vmatpush1.msra.mxu0 %v3218
    %v3220 = vand.u32 %v3127, 4294901760
    %3221 = vmatprep.subr.mxu0 %v3220
    %v3222 = vand.u32 %v3126, 4294901760
    %3223 = vmatpush1.msra.mxu0 %v3222
    %3224 = vmatprep.subr.mxu0 0.0
    %3225 = vmatpush2.msra.mxu0 0.0
    %3226 = vmatprep.subr.mxu0 0.0
    %3227 = vmatpush2.msra.mxu0 0.0
    %3228 = vmatprep.subr.mxu0 0.0
    %3229 = vmatpush2.msra.mxu0 0.0
    %3230 = vmatprep.subr.mxu0 0.0
    %3231 = vmatpush2.msra.mxu0 0.0
    %3232 = vmatprep.subr.mxu0 0.0
    %3233 = vmatpush2.msra.mxu0 0.0
    %3234 = vmatprep.subr.mxu0 0.0
    %3235 = vmatpush2.msra.mxu0 0.0
    %3236 = vmatprep.subr.mxu0 0.0
    %3237 = vmatpush2.msra.mxu0 0.0
    %3238 = vmatprep.subr.mxu0 0.0
    %3239 = vmatpush2.msra.mxu0 0.0
    %3240 = vmatprep.subr.mxu0 0.0
    %3241 = vmatpush2.msra.mxu0 0.0
    %3242 = vmatprep.subr.mxu0 0.0
    %3243 = vmatpush2.msra.mxu0 0.0
    %3244 = vmatprep.subr.mxu0 0.0
    %3245 = vmatpush2.msra.mxu0 0.0
    %3246 = vmatprep.subr.mxu0 0.0
    %3247 = vmatpush2.msra.mxu0 0.0
    %3248 = vmatprep.subr.mxu0 0.0
    %3249 = vmatpush2.msra.mxu0 0.0
    %3250 = vmatprep.subr.mxu0 0.0
    %3251 = vmatpush2.msra.mxu0 0.0
    %3252 = vmatprep.subr.mxu0 0.0
    %3253 = vmatpush2.msra.mxu0 0.0
    %3254 = vmatprep.subr.mxu0 0.0
    %3255 = vmatpush2.msra.mxu0 0.0
    %3256 = vmatprep.mubr.f32.mxu0 0.0
    %v3257 = vand.u32 %v3173, 4294901760
    %v3258 = vsub.f32 %v3173, %v3257
    %v3259 = vand.u32 %v3258, 4294901760
    %v3260 = vsub.f32 %v3258, %v3259
    %v3261 = vand.u32 %v3260, 4294901760
    %3262 = vmatmul.mubr.f32.gmra.mxu0 %v3261
    %v3263 = vpop.f32.mrf.mxu0
    %v3264 = vadd.f32 %v3155, %v3263
    %v3265 = vpop.f32.mrf.mxu0
    %v3266 = vadd.f32 %v3155, %v3265
    %3267 = vmatprep.mubr.f32.mxu0 0.0
    %v3268 = vand.u32 %v3176, 4294901760
    %v3269 = vsub.f32 %v3176, %v3268
    %v3270 = vand.u32 %v3269, 4294901760
    %v3271 = vsub.f32 %v3269, %v3270
    %v3272 = vand.u32 %v3271, 4294901760
    %3273 = vmatmul.mubr.f32.gmra.mxu0 %v3272
    %v3274 = vpop.f32.mrf.mxu0
    %v3275 = vadd.f32 %v3160, %v3274
    %v3276 = vpop.f32.mrf.mxu0
    %v3277 = vadd.f32 %v3160, %v3276
    %3278 = vmatprep.mubr.f32.mxu0 0.0
    %v3279 = vand.u32 %v3179, 4294901760
    %v3280 = vsub.f32 %v3179, %v3279
    %v3281 = vand.u32 %v3280, 4294901760
    %v3282 = vsub.f32 %v3280, %v3281
    %v3283 = vand.u32 %v3282, 4294901760
    %3284 = vmatmul.mubr.f32.gmra.mxu0 %v3283
    %v3285 = vpop.f32.mrf.mxu0
    %v3286 = vadd.f32 %v3165, %v3285
    %v3287 = vpop.f32.mrf.mxu0
    %v3288 = vadd.f32 %v3165, %v3287
    %3289 = vmatprep.mubr.f32.mxu0 0.0
    %v3290 = vand.u32 %v3182, 4294901760
    %v3291 = vsub.f32 %v3182, %v3290
    %v3292 = vand.u32 %v3291, 4294901760
    %v3293 = vsub.f32 %v3291, %v3292
    %v3294 = vand.u32 %v3293, 4294901760
    %3295 = vmatmul.mubr.f32.gmra.mxu0 %v3294
    %v3296 = vpop.f32.mrf.mxu0
    %v3297 = vadd.f32 %v3170, %v3296
    %v3298 = vpop.f32.mrf.mxu0
    %v3299 = vadd.f32 %v3170, %v3298
    %3300 = vdwg.mxu0
    %3301 = vmatprep.subr.mxu0 0.0
    %3302 = vmatpush1.msra.mxu0 0.0
    %3303 = vmatprep.subr.mxu0 0.0
    %3304 = vmatpush1.msra.mxu0 0.0
    %3305 = vmatprep.subr.mxu0 0.0
    %3306 = vmatpush1.msra.mxu0 0.0
    %3307 = vmatprep.subr.mxu0 0.0
    %3308 = vmatpush1.msra.mxu0 0.0
    %3309 = vmatprep.subr.mxu0 0.0
    %3310 = vmatpush1.msra.mxu0 0.0
    %3311 = vmatprep.subr.mxu0 0.0
    %3312 = vmatpush1.msra.mxu0 0.0
    %3313 = vmatprep.subr.mxu0 0.0
    %3314 = vmatpush1.msra.mxu0 0.0
    %3315 = vmatprep.subr.mxu0 0.0
    %3316 = vmatpush1.msra.mxu0 0.0
    %3317 = vmatprep.subr.mxu0 0.0
    %3318 = vmatpush1.msra.mxu0 0.0
    %3319 = vmatprep.subr.mxu0 0.0
    %3320 = vmatpush1.msra.mxu0 0.0
    %3321 = vmatprep.subr.mxu0 0.0
    %3322 = vmatpush1.msra.mxu0 0.0
    %3323 = vmatprep.subr.mxu0 0.0
    %3324 = vmatpush1.msra.mxu0 0.0
    %v3325 = vand.u32 %v3139, 4294901760
    %v3326 = vsub.f32 %v3139, %v3325
    %v3327 = vand.u32 %v3326, 4294901760
    %v3328 = vsub.f32 %v3326, %v3327
    %v3329 = vand.u32 %v3328, 4294901760
    %3330 = vmatprep.subr.mxu0 %v3329
    %v3331 = vand.u32 %v3138, 4294901760
    %v3332 = vsub.f32 %v3138, %v3331
    %v3333 = vand.u32 %v3332, 4294901760
    %v3334 = vsub.f32 %v3332, %v3333
    %v3335 = vand.u32 %v3334, 4294901760
    %3336 = vmatpush1.msra.mxu0 %v3335
    %v3337 = vand.u32 %v3135, 4294901760
    %v3338 = vsub.f32 %v3135, %v3337
    %v3339 = vand.u32 %v3338, 4294901760
    %v3340 = vsub.f32 %v3338, %v3339
    %v3341 = vand.u32 %v3340, 4294901760
    %3342 = vmatprep.subr.mxu0 %v3341
    %v3343 = vand.u32 %v3134, 4294901760
    %v3344 = vsub.f32 %v3134, %v3343
    %v3345 = vand.u32 %v3344, 4294901760
    %v3346 = vsub.f32 %v3344, %v3345
    %v3347 = vand.u32 %v3346, 4294901760
    %3348 = vmatpush1.msra.mxu0 %v3347
    %v3349 = vand.u32 %v3131, 4294901760
    %v3350 = vsub.f32 %v3131, %v3349
    %v3351 = vand.u32 %v3350, 4294901760
    %v3352 = vsub.f32 %v3350, %v3351
    %v3353 = vand.u32 %v3352, 4294901760
    %3354 = vmatprep.subr.mxu0 %v3353
    %v3355 = vand.u32 %v3130, 4294901760
    %v3356 = vsub.f32 %v3130, %v3355
    %v3357 = vand.u32 %v3356, 4294901760
    %v3358 = vsub.f32 %v3356, %v3357
    %v3359 = vand.u32 %v3358, 4294901760
    %3360 = vmatpush1.msra.mxu0 %v3359
    %v3361 = vand.u32 %v3127, 4294901760
    %v3362 = vsub.f32 %v3127, %v3361
    %v3363 = vand.u32 %v3362, 4294901760
    %v3364 = vsub.f32 %v3362, %v3363
    %v3365 = vand.u32 %v3364, 4294901760
    %3366 = vmatprep.subr.mxu0 %v3365
    %v3367 = vand.u32 %v3126, 4294901760
    %v3368 = vsub.f32 %v3126, %v3367
    %v3369 = vand.u32 %v3368, 4294901760
    %v3370 = vsub.f32 %v3368, %v3369
    %v3371 = vand.u32 %v3370, 4294901760
    %3372 = vmatpush1.msra.mxu0 %v3371
    %3373 = vmatprep.subr.mxu0 0.0
    %3374 = vmatpush2.msra.mxu0 0.0
    %3375 = vmatprep.subr.mxu0 0.0
    %3376 = vmatpush2.msra.mxu0 0.0
    %3377 = vmatprep.subr.mxu0 0.0
    %3378 = vmatpush2.msra.mxu0 0.0
    %3379 = vmatprep.subr.mxu0 0.0
    %3380 = vmatpush2.msra.mxu0 0.0
    %3381 = vmatprep.subr.mxu0 0.0
    %3382 = vmatpush2.msra.mxu0 0.0
    %3383 = vmatprep.subr.mxu0 0.0
    %3384 = vmatpush2.msra.mxu0 0.0
    %3385 = vmatprep.subr.mxu0 0.0
    %3386 = vmatpush2.msra.mxu0 0.0
    %3387 = vmatprep.subr.mxu0 0.0
    %3388 = vmatpush2.msra.mxu0 0.0
    %3389 = vmatprep.subr.mxu0 0.0
    %3390 = vmatpush2.msra.mxu0 0.0
    %3391 = vmatprep.subr.mxu0 0.0
    %3392 = vmatpush2.msra.mxu0 0.0
    %3393 = vmatprep.subr.mxu0 0.0
    %3394 = vmatpush2.msra.mxu0 0.0
    %3395 = vmatprep.subr.mxu0 0.0
    %3396 = vmatpush2.msra.mxu0 0.0
    %3397 = vmatprep.subr.mxu0 0.0
    %3398 = vmatpush2.msra.mxu0 0.0
    %3399 = vmatprep.subr.mxu0 0.0
    %3400 = vmatpush2.msra.mxu0 0.0
    %3401 = vmatprep.subr.mxu0 0.0
    %3402 = vmatpush2.msra.mxu0 0.0
    %3403 = vmatprep.subr.mxu0 0.0
    %3404 = vmatpush2.msra.mxu0 0.0
    %3405 = vmatprep.mubr.f32.mxu0 0.0
    %v3406 = vand.u32 %v3173, 4294901760
    %3407 = vmatmul.mubr.f32.gmra.mxu0 %v3406
    %v3408 = vpop.f32.mrf.mxu0
    %v3409 = vadd.f32 %v3264, %v3408
    %v3410 = vpop.f32.mrf.mxu0
    %v3411 = vadd.f32 %v3266, %v3410
    %3412 = vmatprep.mubr.f32.mxu0 0.0
    %v3413 = vand.u32 %v3176, 4294901760
    %3414 = vmatmul.mubr.f32.gmra.mxu0 %v3413
    %v3415 = vpop.f32.mrf.mxu0
    %v3416 = vadd.f32 %v3275, %v3415
    %v3417 = vpop.f32.mrf.mxu0
    %v3418 = vadd.f32 %v3277, %v3417
    %3419 = vmatprep.mubr.f32.mxu0 0.0
    %v3420 = vand.u32 %v3179, 4294901760
    %3421 = vmatmul.mubr.f32.gmra.mxu0 %v3420
    %v3422 = vpop.f32.mrf.mxu0
    %v3423 = vadd.f32 %v3286, %v3422
    %v3424 = vpop.f32.mrf.mxu0
    %v3425 = vadd.f32 %v3288, %v3424
    %3426 = vmatprep.mubr.f32.mxu0 0.0
    %v3427 = vand.u32 %v3182, 4294901760
    %3428 = vmatmul.mubr.f32.gmra.mxu0 %v3427
    %v3429 = vpop.f32.mrf.mxu0
    %v3430 = vadd.f32 %v3297, %v3429
    %v3431 = vpop.f32.mrf.mxu0
    %v3432 = vadd.f32 %v3299, %v3431
    %3433 = vdwg.mxu0
    %3434 = vmatprep.subr.mxu0 0.0
    %3435 = vmatpush1.msra.mxu0 0.0
    %3436 = vmatprep.subr.mxu0 0.0
    %3437 = vmatpush1.msra.mxu0 0.0
    %3438 = vmatprep.subr.mxu0 0.0
    %3439 = vmatpush1.msra.mxu0 0.0
    %3440 = vmatprep.subr.mxu0 0.0
    %3441 = vmatpush1.msra.mxu0 0.0
    %3442 = vmatprep.subr.mxu0 0.0
    %3443 = vmatpush1.msra.mxu0 0.0
    %3444 = vmatprep.subr.mxu0 0.0
    %3445 = vmatpush1.msra.mxu0 0.0
    %3446 = vmatprep.subr.mxu0 0.0
    %3447 = vmatpush1.msra.mxu0 0.0
    %3448 = vmatprep.subr.mxu0 0.0
    %3449 = vmatpush1.msra.mxu0 0.0
    %3450 = vmatprep.subr.mxu0 0.0
    %3451 = vmatpush1.msra.mxu0 0.0
    %3452 = vmatprep.subr.mxu0 0.0
    %3453 = vmatpush1.msra.mxu0 0.0
    %3454 = vmatprep.subr.mxu0 0.0
    %3455 = vmatpush1.msra.mxu0 0.0
    %3456 = vmatprep.subr.mxu0 0.0
    %3457 = vmatpush1.msra.mxu0 0.0
    %v3458 = vand.u32 %v3139, 4294901760
    %v3459 = vsub.f32 %v3139, %v3458
    %3460 = vmatprep.subr.mxu0 %v3459
    %v3461 = vand.u32 %v3138, 4294901760
    %v3462 = vsub.f32 %v3138, %v3461
    %3463 = vmatpush1.msra.mxu0 %v3462
    %v3464 = vand.u32 %v3135, 4294901760
    %v3465 = vsub.f32 %v3135, %v3464
    %3466 = vmatprep.subr.mxu0 %v3465
    %v3467 = vand.u32 %v3134, 4294901760
    %v3468 = vsub.f32 %v3134, %v3467
    %3469 = vmatpush1.msra.mxu0 %v3468
    %v3470 = vand.u32 %v3131, 4294901760
    %v3471 = vsub.f32 %v3131, %v3470
    %3472 = vmatprep.subr.mxu0 %v3471
    %v3473 = vand.u32 %v3130, 4294901760
    %v3474 = vsub.f32 %v3130, %v3473
    %3475 = vmatpush1.msra.mxu0 %v3474
    %v3476 = vand.u32 %v3127, 4294901760
    %v3477 = vsub.f32 %v3127, %v3476
    %3478 = vmatprep.subr.mxu0 %v3477
    %v3479 = vand.u32 %v3126, 4294901760
    %v3480 = vsub.f32 %v3126, %v3479
    %3481 = vmatpush1.msra.mxu0 %v3480
    %3482 = vmatprep.subr.mxu0 0.0
    %3483 = vmatpush2.msra.mxu0 0.0
    %3484 = vmatprep.subr.mxu0 0.0
    %3485 = vmatpush2.msra.mxu0 0.0
    %3486 = vmatprep.subr.mxu0 0.0
    %3487 = vmatpush2.msra.mxu0 0.0
    %3488 = vmatprep.subr.mxu0 0.0
    %3489 = vmatpush2.msra.mxu0 0.0
    %3490 = vmatprep.subr.mxu0 0.0
    %3491 = vmatpush2.msra.mxu0 0.0
    %3492 = vmatprep.subr.mxu0 0.0
    %3493 = vmatpush2.msra.mxu0 0.0
    %3494 = vmatprep.subr.mxu0 0.0
    %3495 = vmatpush2.msra.mxu0 0.0
    %3496 = vmatprep.subr.mxu0 0.0
    %3497 = vmatpush2.msra.mxu0 0.0
    %3498 = vmatprep.subr.mxu0 0.0
    %3499 = vmatpush2.msra.mxu0 0.0
    %3500 = vmatprep.subr.mxu0 0.0
    %3501 = vmatpush2.msra.mxu0 0.0
    %3502 = vmatprep.subr.mxu0 0.0
    %3503 = vmatpush2.msra.mxu0 0.0
    %3504 = vmatprep.subr.mxu0 0.0
    %3505 = vmatpush2.msra.mxu0 0.0
    %3506 = vmatprep.subr.mxu0 0.0
    %3507 = vmatpush2.msra.mxu0 0.0
    %3508 = vmatprep.subr.mxu0 0.0
    %3509 = vmatpush2.msra.mxu0 0.0
    %3510 = vmatprep.subr.mxu0 0.0
    %3511 = vmatpush2.msra.mxu0 0.0
    %3512 = vmatprep.subr.mxu0 0.0
    %3513 = vmatpush2.msra.mxu0 0.0
    %3514 = vmatprep.mubr.f32.mxu0 0.0
    %v3515 = vand.u32 %v3173, 4294901760
    %v3516 = vsub.f32 %v3173, %v3515
    %3517 = vmatmul.mubr.f32.gmra.mxu0 %v3516
    %v3518 = vpop.f32.mrf.mxu0
    %v3519 = vadd.f32 %v3409, %v3518
    %v3520 = vpop.f32.mrf.mxu0
    %v3521 = vadd.f32 %v3411, %v3520
    %3522 = vmatprep.mubr.f32.mxu0 0.0
    %v3523 = vand.u32 %v3176, 4294901760
    %v3524 = vsub.f32 %v3176, %v3523
    %3525 = vmatmul.mubr.f32.gmra.mxu0 %v3524
    %v3526 = vpop.f32.mrf.mxu0
    %v3527 = vadd.f32 %v3416, %v3526
    %v3528 = vpop.f32.mrf.mxu0
    %v3529 = vadd.f32 %v3418, %v3528
    %3530 = vmatprep.mubr.f32.mxu0 0.0
    %v3531 = vand.u32 %v3179, 4294901760
    %v3532 = vsub.f32 %v3179, %v3531
    %3533 = vmatmul.mubr.f32.gmra.mxu0 %v3532
    %v3534 = vpop.f32.mrf.mxu0
    %v3535 = vadd.f32 %v3423, %v3534
    %v3536 = vpop.f32.mrf.mxu0
    %v3537 = vadd.f32 %v3425, %v3536
    %3538 = vmatprep.mubr.f32.mxu0 0.0
    %v3539 = vand.u32 %v3182, 4294901760
    %v3540 = vsub.f32 %v3182, %v3539
    %3541 = vmatmul.mubr.f32.gmra.mxu0 %v3540
    %v3542 = vpop.f32.mrf.mxu0
    %v3543 = vadd.f32 %v3430, %v3542
    %v3544 = vpop.f32.mrf.mxu0
    %v3545 = vadd.f32 %v3432, %v3544
    %3546 = vdwg.mxu0
    %3547 = vmatprep.subr.mxu0 0.0
    %3548 = vmatpush1.msra.mxu0 0.0
    %3549 = vmatprep.subr.mxu0 0.0
    %3550 = vmatpush1.msra.mxu0 0.0
    %3551 = vmatprep.subr.mxu0 0.0
    %3552 = vmatpush1.msra.mxu0 0.0
    %3553 = vmatprep.subr.mxu0 0.0
    %3554 = vmatpush1.msra.mxu0 0.0
    %3555 = vmatprep.subr.mxu0 0.0
    %3556 = vmatpush1.msra.mxu0 0.0
    %3557 = vmatprep.subr.mxu0 0.0
    %3558 = vmatpush1.msra.mxu0 0.0
    %3559 = vmatprep.subr.mxu0 0.0
    %3560 = vmatpush1.msra.mxu0 0.0
    %3561 = vmatprep.subr.mxu0 0.0
    %3562 = vmatpush1.msra.mxu0 0.0
    %3563 = vmatprep.subr.mxu0 0.0
    %3564 = vmatpush1.msra.mxu0 0.0
    %3565 = vmatprep.subr.mxu0 0.0
    %3566 = vmatpush1.msra.mxu0 0.0
    %3567 = vmatprep.subr.mxu0 0.0
    %3568 = vmatpush1.msra.mxu0 0.0
    %3569 = vmatprep.subr.mxu0 0.0
    %3570 = vmatpush1.msra.mxu0 0.0
    %v3571 = vand.u32 %v3139, 4294901760
    %3572 = vmatprep.subr.mxu0 %v3571
    %v3573 = vand.u32 %v3138, 4294901760
    %3574 = vmatpush1.msra.mxu0 %v3573
    %v3575 = vand.u32 %v3135, 4294901760
    %3576 = vmatprep.subr.mxu0 %v3575
    %v3577 = vand.u32 %v3134, 4294901760
    %3578 = vmatpush1.msra.mxu0 %v3577
    %v3579 = vand.u32 %v3131, 4294901760
    %3580 = vmatprep.subr.mxu0 %v3579
    %v3581 = vand.u32 %v3130, 4294901760
    %3582 = vmatpush1.msra.mxu0 %v3581
    %v3583 = vand.u32 %v3127, 4294901760
    %3584 = vmatprep.subr.mxu0 %v3583
    %v3585 = vand.u32 %v3126, 4294901760
    %3586 = vmatpush1.msra.mxu0 %v3585
    %3587 = vmatprep.subr.mxu0 0.0
    %3588 = vmatpush2.msra.mxu0 0.0
    %3589 = vmatprep.subr.mxu0 0.0
    %3590 = vmatpush2.msra.mxu0 0.0
    %3591 = vmatprep.subr.mxu0 0.0
    %3592 = vmatpush2.msra.mxu0 0.0
    %3593 = vmatprep.subr.mxu0 0.0
    %3594 = vmatpush2.msra.mxu0 0.0
    %3595 = vmatprep.subr.mxu0 0.0
    %3596 = vmatpush2.msra.mxu0 0.0
    %3597 = vmatprep.subr.mxu0 0.0
    %3598 = vmatpush2.msra.mxu0 0.0
    %3599 = vmatprep.subr.mxu0 0.0
    %3600 = vmatpush2.msra.mxu0 0.0
    %3601 = vmatprep.subr.mxu0 0.0
    %3602 = vmatpush2.msra.mxu0 0.0
    %3603 = vmatprep.subr.mxu0 0.0
    %3604 = vmatpush2.msra.mxu0 0.0
    %3605 = vmatprep.subr.mxu0 0.0
    %3606 = vmatpush2.msra.mxu0 0.0
    %3607 = vmatprep.subr.mxu0 0.0
    %3608 = vmatpush2.msra.mxu0 0.0
    %3609 = vmatprep.subr.mxu0 0.0
    %3610 = vmatpush2.msra.mxu0 0.0
    %3611 = vmatprep.subr.mxu0 0.0
    %3612 = vmatpush2.msra.mxu0 0.0
    %3613 = vmatprep.subr.mxu0 0.0
    %3614 = vmatpush2.msra.mxu0 0.0
    %3615 = vmatprep.subr.mxu0 0.0
    %3616 = vmatpush2.msra.mxu0 0.0
    %3617 = vmatprep.subr.mxu0 0.0
    %3618 = vmatpush2.msra.mxu0 0.0
    %3619 = vmatprep.mubr.f32.mxu0 0.0
    %v3620 = vand.u32 %v3173, 4294901760
    %v3621 = vsub.f32 %v3173, %v3620
    %v3622 = vand.u32 %v3621, 4294901760
    %3623 = vmatmul.mubr.f32.gmra.mxu0 %v3622
    %v3624 = vpop.f32.mrf.mxu0
    %v3625 = vadd.f32 %v3519, %v3624
    %v3626 = vpop.f32.mrf.mxu0
    %v3627 = vadd.f32 %v3521, %v3626
    %3628 = vmatprep.mubr.f32.mxu0 0.0
    %v3629 = vand.u32 %v3176, 4294901760
    %v3630 = vsub.f32 %v3176, %v3629
    %v3631 = vand.u32 %v3630, 4294901760
    %3632 = vmatmul.mubr.f32.gmra.mxu0 %v3631
    %v3633 = vpop.f32.mrf.mxu0
    %v3634 = vadd.f32 %v3527, %v3633
    %v3635 = vpop.f32.mrf.mxu0
    %v3636 = vadd.f32 %v3529, %v3635
    %3637 = vmatprep.mubr.f32.mxu0 0.0
    %v3638 = vand.u32 %v3179, 4294901760
    %v3639 = vsub.f32 %v3179, %v3638
    %v3640 = vand.u32 %v3639, 4294901760
    %3641 = vmatmul.mubr.f32.gmra.mxu0 %v3640
    %v3642 = vpop.f32.mrf.mxu0
    %v3643 = vadd.f32 %v3535, %v3642
    %v3644 = vpop.f32.mrf.mxu0
    %v3645 = vadd.f32 %v3537, %v3644
    %3646 = vmatprep.mubr.f32.mxu0 0.0
    %v3647 = vand.u32 %v3182, 4294901760
    %v3648 = vsub.f32 %v3182, %v3647
    %v3649 = vand.u32 %v3648, 4294901760
    %3650 = vmatmul.mubr.f32.gmra.mxu0 %v3649
    %v3651 = vpop.f32.mrf.mxu0
    %v3652 = vadd.f32 %v3543, %v3651
    %v3653 = vpop.f32.mrf.mxu0
    %v3654 = vadd.f32 %v3545, %v3653
    %3655 = vdwg.mxu0
    %3656 = vmatprep.subr.mxu0 0.0
    %3657 = vmatpush1.msra.mxu0 0.0
    %3658 = vmatprep.subr.mxu0 0.0
    %3659 = vmatpush1.msra.mxu0 0.0
    %3660 = vmatprep.subr.mxu0 0.0
    %3661 = vmatpush1.msra.mxu0 0.0
    %3662 = vmatprep.subr.mxu0 0.0
    %3663 = vmatpush1.msra.mxu0 0.0
    %3664 = vmatprep.subr.mxu0 0.0
    %3665 = vmatpush1.msra.mxu0 0.0
    %3666 = vmatprep.subr.mxu0 0.0
    %3667 = vmatpush1.msra.mxu0 0.0
    %3668 = vmatprep.subr.mxu0 0.0
    %3669 = vmatpush1.msra.mxu0 0.0
    %3670 = vmatprep.subr.mxu0 0.0
    %3671 = vmatpush1.msra.mxu0 0.0
    %3672 = vmatprep.subr.mxu0 0.0
    %3673 = vmatpush1.msra.mxu0 0.0
    %3674 = vmatprep.subr.mxu0 0.0
    %3675 = vmatpush1.msra.mxu0 0.0
    %3676 = vmatprep.subr.mxu0 0.0
    %3677 = vmatpush1.msra.mxu0 0.0
    %3678 = vmatprep.subr.mxu0 0.0
    %3679 = vmatpush1.msra.mxu0 0.0
    %v3680 = vand.u32 %v3139, 4294901760
    %v3681 = vsub.f32 %v3139, %v3680
    %v3682 = vand.u32 %v3681, 4294901760
    %3683 = vmatprep.subr.mxu0 %v3682
    %v3684 = vand.u32 %v3138, 4294901760
    %v3685 = vsub.f32 %v3138, %v3684
    %v3686 = vand.u32 %v3685, 4294901760
    %3687 = vmatpush1.msra.mxu0 %v3686
    %v3688 = vand.u32 %v3135, 4294901760
    %v3689 = vsub.f32 %v3135, %v3688
    %v3690 = vand.u32 %v3689, 4294901760
    %3691 = vmatprep.subr.mxu0 %v3690
    %v3692 = vand.u32 %v3134, 4294901760
    %v3693 = vsub.f32 %v3134, %v3692
    %v3694 = vand.u32 %v3693, 4294901760
    %3695 = vmatpush1.msra.mxu0 %v3694
    %v3696 = vand.u32 %v3131, 4294901760
    %v3697 = vsub.f32 %v3131, %v3696
    %v3698 = vand.u32 %v3697, 4294901760
    %3699 = vmatprep.subr.mxu0 %v3698
    %v3700 = vand.u32 %v3130, 4294901760
    %v3701 = vsub.f32 %v3130, %v3700
    %v3702 = vand.u32 %v3701, 4294901760
    %3703 = vmatpush1.msra.mxu0 %v3702
    %v3704 = vand.u32 %v3127, 4294901760
    %v3705 = vsub.f32 %v3127, %v3704
    %v3706 = vand.u32 %v3705, 4294901760
    %3707 = vmatprep.subr.mxu0 %v3706
    %v3708 = vand.u32 %v3126, 4294901760
    %v3709 = vsub.f32 %v3126, %v3708
    %v3710 = vand.u32 %v3709, 4294901760
    %3711 = vmatpush1.msra.mxu0 %v3710
    %3712 = vmatprep.subr.mxu0 0.0
    %3713 = vmatpush2.msra.mxu0 0.0
    %3714 = vmatprep.subr.mxu0 0.0
    %3715 = vmatpush2.msra.mxu0 0.0
    %3716 = vmatprep.subr.mxu0 0.0
    %3717 = vmatpush2.msra.mxu0 0.0
    %3718 = vmatprep.subr.mxu0 0.0
    %3719 = vmatpush2.msra.mxu0 0.0
    %3720 = vmatprep.subr.mxu0 0.0
    %3721 = vmatpush2.msra.mxu0 0.0
    %3722 = vmatprep.subr.mxu0 0.0
    %3723 = vmatpush2.msra.mxu0 0.0
    %3724 = vmatprep.subr.mxu0 0.0
    %3725 = vmatpush2.msra.mxu0 0.0
    %3726 = vmatprep.subr.mxu0 0.0
    %3727 = vmatpush2.msra.mxu0 0.0
    %3728 = vmatprep.subr.mxu0 0.0
    %3729 = vmatpush2.msra.mxu0 0.0
    %3730 = vmatprep.subr.mxu0 0.0
    %3731 = vmatpush2.msra.mxu0 0.0
    %3732 = vmatprep.subr.mxu0 0.0
    %3733 = vmatpush2.msra.mxu0 0.0
    %3734 = vmatprep.subr.mxu0 0.0
    %3735 = vmatpush2.msra.mxu0 0.0
    %3736 = vmatprep.subr.mxu0 0.0
    %3737 = vmatpush2.msra.mxu0 0.0
    %3738 = vmatprep.subr.mxu0 0.0
    %3739 = vmatpush2.msra.mxu0 0.0
    %3740 = vmatprep.subr.mxu0 0.0
    %3741 = vmatpush2.msra.mxu0 0.0
    %3742 = vmatprep.subr.mxu0 0.0
    %3743 = vmatpush2.msra.mxu0 0.0
    %3744 = vmatprep.mubr.f32.mxu0 0.0
    %v3745 = vand.u32 %v3173, 4294901760
    %3746 = vmatmul.mubr.f32.gmra.mxu0 %v3745
    %v3747 = vpop.f32.mrf.mxu0
    %v3748 = vadd.f32 %v3625, %v3747
    %v3749 = vpop.f32.mrf.mxu0
    %v3750 = vadd.f32 %v3627, %v3749
    %3751 = vmatprep.mubr.f32.mxu0 0.0
    %v3752 = vand.u32 %v3176, 4294901760
    %3753 = vmatmul.mubr.f32.gmra.mxu0 %v3752
    %v3754 = vpop.f32.mrf.mxu0
    %v3755 = vadd.f32 %v3634, %v3754
    %v3756 = vpop.f32.mrf.mxu0
    %v3757 = vadd.f32 %v3636, %v3756
    %3758 = vmatprep.mubr.f32.mxu0 0.0
    %v3759 = vand.u32 %v3179, 4294901760
    %3760 = vmatmul.mubr.f32.gmra.mxu0 %v3759
    %v3761 = vpop.f32.mrf.mxu0
    %v3762 = vadd.f32 %v3643, %v3761
    %v3763 = vpop.f32.mrf.mxu0
    %v3764 = vadd.f32 %v3645, %v3763
    %3765 = vmatprep.mubr.f32.mxu0 0.0
    %v3766 = vand.u32 %v3182, 4294901760
    %3767 = vmatmul.mubr.f32.gmra.mxu0 %v3766
    %v3768 = vpop.f32.mrf.mxu0
    %v3769 = vadd.f32 %v3652, %v3768
    %v3770 = vpop.f32.mrf.mxu0
    %v3771 = vadd.f32 %v3654, %v3770
    %3772 = vdwg.mxu0
    %3773 = vmatprep.subr.mxu0 0.0
    %3774 = vmatpush1.msra.mxu0 0.0
    %3775 = vmatprep.subr.mxu0 0.0
    %3776 = vmatpush1.msra.mxu0 0.0
    %3777 = vmatprep.subr.mxu0 0.0
    %3778 = vmatpush1.msra.mxu0 0.0
    %3779 = vmatprep.subr.mxu0 0.0
    %3780 = vmatpush1.msra.mxu0 0.0
    %3781 = vmatprep.subr.mxu0 0.0
    %3782 = vmatpush1.msra.mxu0 0.0
    %3783 = vmatprep.subr.mxu0 0.0
    %3784 = vmatpush1.msra.mxu0 0.0
    %3785 = vmatprep.subr.mxu0 0.0
    %3786 = vmatpush1.msra.mxu0 0.0
    %3787 = vmatprep.subr.mxu0 0.0
    %3788 = vmatpush1.msra.mxu0 0.0
    %3789 = vmatprep.subr.mxu0 0.0
    %3790 = vmatpush1.msra.mxu0 0.0
    %3791 = vmatprep.subr.mxu0 0.0
    %3792 = vmatpush1.msra.mxu0 0.0
    %3793 = vmatprep.subr.mxu0 0.0
    %3794 = vmatpush1.msra.mxu0 0.0
    %3795 = vmatprep.subr.mxu0 0.0
    %3796 = vmatpush1.msra.mxu0 0.0
    %v3797 = vand.u32 %v3139, 4294901760
    %3798 = vmatprep.subr.mxu0 %v3797
    %v3799 = vand.u32 %v3138, 4294901760
    %3800 = vmatpush1.msra.mxu0 %v3799
    %v3801 = vand.u32 %v3135, 4294901760
    %3802 = vmatprep.subr.mxu0 %v3801
    %v3803 = vand.u32 %v3134, 4294901760
    %3804 = vmatpush1.msra.mxu0 %v3803
    %v3805 = vand.u32 %v3131, 4294901760
    %3806 = vmatprep.subr.mxu0 %v3805
    %v3807 = vand.u32 %v3130, 4294901760
    %3808 = vmatpush1.msra.mxu0 %v3807
    %v3809 = vand.u32 %v3127, 4294901760
    %3810 = vmatprep.subr.mxu0 %v3809
    %v3811 = vand.u32 %v3126, 4294901760
    %3812 = vmatpush1.msra.mxu0 %v3811
    %3813 = vmatprep.subr.mxu0 0.0
    %3814 = vmatpush2.msra.mxu0 0.0
    %3815 = vmatprep.subr.mxu0 0.0
    %3816 = vmatpush2.msra.mxu0 0.0
    %3817 = vmatprep.subr.mxu0 0.0
    %3818 = vmatpush2.msra.mxu0 0.0
    %3819 = vmatprep.subr.mxu0 0.0
    %3820 = vmatpush2.msra.mxu0 0.0
    %3821 = vmatprep.subr.mxu0 0.0
    %3822 = vmatpush2.msra.mxu0 0.0
    %3823 = vmatprep.subr.mxu0 0.0
    %3824 = vmatpush2.msra.mxu0 0.0
    %3825 = vmatprep.subr.mxu0 0.0
    %3826 = vmatpush2.msra.mxu0 0.0
    %3827 = vmatprep.subr.mxu0 0.0
    %3828 = vmatpush2.msra.mxu0 0.0
    %3829 = vmatprep.subr.mxu0 0.0
    %3830 = vmatpush2.msra.mxu0 0.0
    %3831 = vmatprep.subr.mxu0 0.0
    %3832 = vmatpush2.msra.mxu0 0.0
    %3833 = vmatprep.subr.mxu0 0.0
    %3834 = vmatpush2.msra.mxu0 0.0
    %3835 = vmatprep.subr.mxu0 0.0
    %3836 = vmatpush2.msra.mxu0 0.0
    %3837 = vmatprep.subr.mxu0 0.0
    %3838 = vmatpush2.msra.mxu0 0.0
    %3839 = vmatprep.subr.mxu0 0.0
    %3840 = vmatpush2.msra.mxu0 0.0
    %3841 = vmatprep.subr.mxu0 0.0
    %3842 = vmatpush2.msra.mxu0 0.0
    %3843 = vmatprep.subr.mxu0 0.0
    %3844 = vmatpush2.msra.mxu0 0.0
    %3845 = vmatprep.mubr.f32.mxu0 0.0
    %v3846 = vand.u32 %v3173, 4294901760
    %3847 = vmatmul.mubr.f32.gmra.mxu0 %v3846
    %v3848 = vpop.f32.mrf.mxu0
    %v3849 = vadd.f32 %v3748, %v3848
    %v3850 = vpop.f32.mrf.mxu0
    %v3851 = vadd.f32 %v3750, %v3850
    %3852 = vmatprep.mubr.f32.mxu0 0.0
    %v3853 = vand.u32 %v3176, 4294901760
    %3854 = vmatmul.mubr.f32.gmra.mxu0 %v3853
    %v3855 = vpop.f32.mrf.mxu0
    %v3856 = vadd.f32 %v3755, %v3855
    %v3857 = vpop.f32.mrf.mxu0
    %v3858 = vadd.f32 %v3757, %v3857
    %3859 = vmatprep.mubr.f32.mxu0 0.0
    %v3860 = vand.u32 %v3179, 4294901760
    %3861 = vmatmul.mubr.f32.gmra.mxu0 %v3860
    %v3862 = vpop.f32.mrf.mxu0
    %v3863 = vadd.f32 %v3762, %v3862
    %v3864 = vpop.f32.mrf.mxu0
    %v3865 = vadd.f32 %v3764, %v3864
    %3866 = vmatprep.mubr.f32.mxu0 0.0
    %v3867 = vand.u32 %v3182, 4294901760
    %3868 = vmatmul.mubr.f32.gmra.mxu0 %v3867
    %v3869 = vpop.f32.mrf.mxu0
    %v3870 = vadd.f32 %v3769, %v3869
    %v3871 = vpop.f32.mrf.mxu0
    %v3872 = vadd.f32 %v3771, %v3871
    %3873 = vdwg.mxu0
    %3874 = vmatprep.subr.mxu0 0.0
    %3875 = vmatpush1.msra.mxu0 0.0
    %3876 = vmatprep.subr.mxu0 0.0
    %3877 = vmatpush1.msra.mxu0 0.0
    %3878 = vmatprep.subr.mxu0 0.0
    %3879 = vmatpush1.msra.mxu0 0.0
    %3880 = vmatprep.subr.mxu0 0.0
    %3881 = vmatpush1.msra.mxu0 0.0
    %3882 = vmatprep.subr.mxu0 0.0
    %3883 = vmatpush1.msra.mxu0 0.0
    %3884 = vmatprep.subr.mxu0 0.0
    %3885 = vmatpush1.msra.mxu0 0.0
    %3886 = vmatprep.subr.mxu0 0.0
    %3887 = vmatpush1.msra.mxu0 0.0
    %3888 = vmatprep.subr.mxu0 0.0
    %3889 = vmatpush1.msra.mxu0 0.0
    %3890 = vmatprep.subr.mxu0 0.0
    %3891 = vmatpush1.msra.mxu0 0.0
    %3892 = vmatprep.subr.mxu0 0.0
    %3893 = vmatpush1.msra.mxu0 0.0
    %3894 = vmatprep.subr.mxu0 0.0
    %3895 = vmatpush1.msra.mxu0 0.0
    %3896 = vmatprep.subr.mxu0 0.0
    %3897 = vmatpush1.msra.mxu0 0.0
    %v3898 = vand.u32 %v3141, 4294901760
    %3899 = vmatprep.subr.mxu0 %v3898
    %v3900 = vand.u32 %v3140, 4294901760
    %3901 = vmatpush1.msra.mxu0 %v3900
    %v3902 = vand.u32 %v3137, 4294901760
    %3903 = vmatprep.subr.mxu0 %v3902
    %v3904 = vand.u32 %v3136, 4294901760
    %3905 = vmatpush1.msra.mxu0 %v3904
    %v3906 = vand.u32 %v3133, 4294901760
    %3907 = vmatprep.subr.mxu0 %v3906
    %v3908 = vand.u32 %v3132, 4294901760
    %3909 = vmatpush1.msra.mxu0 %v3908
    %v3910 = vand.u32 %v3129, 4294901760
    %3911 = vmatprep.subr.mxu0 %v3910
    %v3912 = vand.u32 %v3128, 4294901760
    %3913 = vmatpush1.msra.mxu0 %v3912
    %3914 = vmatprep.subr.mxu0 0.0
    %3915 = vmatpush2.msra.mxu0 0.0
    %3916 = vmatprep.subr.mxu0 0.0
    %3917 = vmatpush2.msra.mxu0 0.0
    %3918 = vmatprep.subr.mxu0 0.0
    %3919 = vmatpush2.msra.mxu0 0.0
    %3920 = vmatprep.subr.mxu0 0.0
    %3921 = vmatpush2.msra.mxu0 0.0
    %3922 = vmatprep.subr.mxu0 0.0
    %3923 = vmatpush2.msra.mxu0 0.0
    %3924 = vmatprep.subr.mxu0 0.0
    %3925 = vmatpush2.msra.mxu0 0.0
    %3926 = vmatprep.subr.mxu0 0.0
    %3927 = vmatpush2.msra.mxu0 0.0
    %3928 = vmatprep.subr.mxu0 0.0
    %3929 = vmatpush2.msra.mxu0 0.0
    %3930 = vmatprep.subr.mxu0 0.0
    %3931 = vmatpush2.msra.mxu0 0.0
    %3932 = vmatprep.subr.mxu0 0.0
    %3933 = vmatpush2.msra.mxu0 0.0
    %3934 = vmatprep.subr.mxu0 0.0
    %3935 = vmatpush2.msra.mxu0 0.0
    %3936 = vmatprep.subr.mxu0 0.0
    %3937 = vmatpush2.msra.mxu0 0.0
    %3938 = vmatprep.subr.mxu0 0.0
    %3939 = vmatpush2.msra.mxu0 0.0
    %3940 = vmatprep.subr.mxu0 0.0
    %3941 = vmatpush2.msra.mxu0 0.0
    %3942 = vmatprep.subr.mxu0 0.0
    %3943 = vmatpush2.msra.mxu0 0.0
    %3944 = vmatprep.subr.mxu0 0.0
    %3945 = vmatpush2.msra.mxu0 0.0
    %3946 = vmatprep.mubr.f32.mxu0 0.0
    %v3947 = vand.u32 %v3173, 4294901760
    %v3948 = vsub.f32 %v3173, %v3947
    %v3949 = vand.u32 %v3948, 4294901760
    %v3950 = vsub.f32 %v3948, %v3949
    %v3951 = vand.u32 %v3950, 4294901760
    %3952 = vmatmul.mubr.f32.gmra.mxu0 %v3951
    %v3953 = vpop.f32.mrf.mxu0
    %v3954 = vadd.f32 %v3155, %v3953
    %v3955 = vpop.f32.mrf.mxu0
    %v3956 = vadd.f32 %v3155, %v3955
    %3957 = vmatprep.mubr.f32.mxu0 0.0
    %v3958 = vand.u32 %v3176, 4294901760
    %v3959 = vsub.f32 %v3176, %v3958
    %v3960 = vand.u32 %v3959, 4294901760
    %v3961 = vsub.f32 %v3959, %v3960
    %v3962 = vand.u32 %v3961, 4294901760
    %3963 = vmatmul.mubr.f32.gmra.mxu0 %v3962
    %v3964 = vpop.f32.mrf.mxu0
    %v3965 = vadd.f32 %v3160, %v3964
    %v3966 = vpop.f32.mrf.mxu0
    %v3967 = vadd.f32 %v3160, %v3966
    %3968 = vmatprep.mubr.f32.mxu0 0.0
    %v3969 = vand.u32 %v3179, 4294901760
    %v3970 = vsub.f32 %v3179, %v3969
    %v3971 = vand.u32 %v3970, 4294901760
    %v3972 = vsub.f32 %v3970, %v3971
    %v3973 = vand.u32 %v3972, 4294901760
    %3974 = vmatmul.mubr.f32.gmra.mxu0 %v3973
    %v3975 = vpop.f32.mrf.mxu0
    %v3976 = vadd.f32 %v3165, %v3975
    %v3977 = vpop.f32.mrf.mxu0
    %v3978 = vadd.f32 %v3165, %v3977
    %3979 = vmatprep.mubr.f32.mxu0 0.0
    %v3980 = vand.u32 %v3182, 4294901760
    %v3981 = vsub.f32 %v3182, %v3980
    %v3982 = vand.u32 %v3981, 4294901760
    %v3983 = vsub.f32 %v3981, %v3982
    %v3984 = vand.u32 %v3983, 4294901760
    %3985 = vmatmul.mubr.f32.gmra.mxu0 %v3984
    %v3986 = vpop.f32.mrf.mxu0
    %v3987 = vadd.f32 %v3170, %v3986
    %v3988 = vpop.f32.mrf.mxu0
    %v3989 = vadd.f32 %v3170, %v3988
    %3990 = vdwg.mxu0
    %3991 = vmatprep.subr.mxu0 0.0
    %3992 = vmatpush1.msra.mxu0 0.0
    %3993 = vmatprep.subr.mxu0 0.0
    %3994 = vmatpush1.msra.mxu0 0.0
    %3995 = vmatprep.subr.mxu0 0.0
    %3996 = vmatpush1.msra.mxu0 0.0
    %3997 = vmatprep.subr.mxu0 0.0
    %3998 = vmatpush1.msra.mxu0 0.0
    %3999 = vmatprep.subr.mxu0 0.0
    %4000 = vmatpush1.msra.mxu0 0.0
    %4001 = vmatprep.subr.mxu0 0.0
    %4002 = vmatpush1.msra.mxu0 0.0
    %4003 = vmatprep.subr.mxu0 0.0
    %4004 = vmatpush1.msra.mxu0 0.0
    %4005 = vmatprep.subr.mxu0 0.0
    %4006 = vmatpush1.msra.mxu0 0.0
    %4007 = vmatprep.subr.mxu0 0.0
    %4008 = vmatpush1.msra.mxu0 0.0
    %4009 = vmatprep.subr.mxu0 0.0
    %4010 = vmatpush1.msra.mxu0 0.0
    %4011 = vmatprep.subr.mxu0 0.0
    %4012 = vmatpush1.msra.mxu0 0.0
    %4013 = vmatprep.subr.mxu0 0.0
    %4014 = vmatpush1.msra.mxu0 0.0
    %v4015 = vand.u32 %v3141, 4294901760
    %v4016 = vsub.f32 %v3141, %v4015
    %v4017 = vand.u32 %v4016, 4294901760
    %v4018 = vsub.f32 %v4016, %v4017
    %v4019 = vand.u32 %v4018, 4294901760
    %4020 = vmatprep.subr.mxu0 %v4019
    %v4021 = vand.u32 %v3140, 4294901760
    %v4022 = vsub.f32 %v3140, %v4021
    %v4023 = vand.u32 %v4022, 4294901760
    %v4024 = vsub.f32 %v4022, %v4023
    %v4025 = vand.u32 %v4024, 4294901760
    %4026 = vmatpush1.msra.mxu0 %v4025
    %v4027 = vand.u32 %v3137, 4294901760
    %v4028 = vsub.f32 %v3137, %v4027
    %v4029 = vand.u32 %v4028, 4294901760
    %v4030 = vsub.f32 %v4028, %v4029
    %v4031 = vand.u32 %v4030, 4294901760
    %4032 = vmatprep.subr.mxu0 %v4031
    %v4033 = vand.u32 %v3136, 4294901760
    %v4034 = vsub.f32 %v3136, %v4033
    %v4035 = vand.u32 %v4034, 4294901760
    %v4036 = vsub.f32 %v4034, %v4035
    %v4037 = vand.u32 %v4036, 4294901760
    %4038 = vmatpush1.msra.mxu0 %v4037
    %v4039 = vand.u32 %v3133, 4294901760
    %v4040 = vsub.f32 %v3133, %v4039
    %v4041 = vand.u32 %v4040, 4294901760
    %v4042 = vsub.f32 %v4040, %v4041
    %v4043 = vand.u32 %v4042, 4294901760
    %4044 = vmatprep.subr.mxu0 %v4043
    %v4045 = vand.u32 %v3132, 4294901760
    %v4046 = vsub.f32 %v3132, %v4045
    %v4047 = vand.u32 %v4046, 4294901760
    %v4048 = vsub.f32 %v4046, %v4047
    %v4049 = vand.u32 %v4048, 4294901760
    %4050 = vmatpush1.msra.mxu0 %v4049
    %v4051 = vand.u32 %v3129, 4294901760
    %v4052 = vsub.f32 %v3129, %v4051
    %v4053 = vand.u32 %v4052, 4294901760
    %v4054 = vsub.f32 %v4052, %v4053
    %v4055 = vand.u32 %v4054, 4294901760
    %4056 = vmatprep.subr.mxu0 %v4055
    %v4057 = vand.u32 %v3128, 4294901760
    %v4058 = vsub.f32 %v3128, %v4057
    %v4059 = vand.u32 %v4058, 4294901760
    %v4060 = vsub.f32 %v4058, %v4059
    %v4061 = vand.u32 %v4060, 4294901760
    %4062 = vmatpush1.msra.mxu0 %v4061
    %4063 = vmatprep.subr.mxu0 0.0
    %4064 = vmatpush2.msra.mxu0 0.0
    %4065 = vmatprep.subr.mxu0 0.0
    %4066 = vmatpush2.msra.mxu0 0.0
    %4067 = vmatprep.subr.mxu0 0.0
    %4068 = vmatpush2.msra.mxu0 0.0
    %4069 = vmatprep.subr.mxu0 0.0
    %4070 = vmatpush2.msra.mxu0 0.0
    %4071 = vmatprep.subr.mxu0 0.0
    %4072 = vmatpush2.msra.mxu0 0.0
    %4073 = vmatprep.subr.mxu0 0.0
    %4074 = vmatpush2.msra.mxu0 0.0
    %4075 = vmatprep.subr.mxu0 0.0
    %4076 = vmatpush2.msra.mxu0 0.0
    %4077 = vmatprep.subr.mxu0 0.0
    %4078 = vmatpush2.msra.mxu0 0.0
    %4079 = vmatprep.subr.mxu0 0.0
    %4080 = vmatpush2.msra.mxu0 0.0
    %4081 = vmatprep.subr.mxu0 0.0
    %4082 = vmatpush2.msra.mxu0 0.0
    %4083 = vmatprep.subr.mxu0 0.0
    %4084 = vmatpush2.msra.mxu0 0.0
    %4085 = vmatprep.subr.mxu0 0.0
    %4086 = vmatpush2.msra.mxu0 0.0
    %4087 = vmatprep.subr.mxu0 0.0
    %4088 = vmatpush2.msra.mxu0 0.0
    %4089 = vmatprep.subr.mxu0 0.0
    %4090 = vmatpush2.msra.mxu0 0.0
    %4091 = vmatprep.subr.mxu0 0.0
    %4092 = vmatpush2.msra.mxu0 0.0
    %4093 = vmatprep.subr.mxu0 0.0
    %4094 = vmatpush2.msra.mxu0 0.0
    %4095 = vmatprep.mubr.f32.mxu0 0.0
    %v4096 = vand.u32 %v3173, 4294901760
    %4097 = vmatmul.mubr.f32.gmra.mxu0 %v4096
    %v4098 = vpop.f32.mrf.mxu0
    %v4099 = vadd.f32 %v3954, %v4098
    %v4100 = vpop.f32.mrf.mxu0
    %v4101 = vadd.f32 %v3956, %v4100
    %4102 = vmatprep.mubr.f32.mxu0 0.0
    %v4103 = vand.u32 %v3176, 4294901760
    %4104 = vmatmul.mubr.f32.gmra.mxu0 %v4103
    %v4105 = vpop.f32.mrf.mxu0
    %v4106 = vadd.f32 %v3965, %v4105
    %v4107 = vpop.f32.mrf.mxu0
    %v4108 = vadd.f32 %v3967, %v4107
    %4109 = vmatprep.mubr.f32.mxu0 0.0
    %v4110 = vand.u32 %v3179, 4294901760
    %4111 = vmatmul.mubr.f32.gmra.mxu0 %v4110
    %v4112 = vpop.f32.mrf.mxu0
    %v4113 = vadd.f32 %v3976, %v4112
    %v4114 = vpop.f32.mrf.mxu0
    %v4115 = vadd.f32 %v3978, %v4114
    %4116 = vmatprep.mubr.f32.mxu0 0.0
    %v4117 = vand.u32 %v3182, 4294901760
    %4118 = vmatmul.mubr.f32.gmra.mxu0 %v4117
    %v4119 = vpop.f32.mrf.mxu0
    %v4120 = vadd.f32 %v3987, %v4119
    %v4121 = vpop.f32.mrf.mxu0
    %v4122 = vadd.f32 %v3989, %v4121
    %4123 = vdwg.mxu0
    %4124 = vmatprep.subr.mxu0 0.0
    %4125 = vmatpush1.msra.mxu0 0.0
    %4126 = vmatprep.subr.mxu0 0.0
    %4127 = vmatpush1.msra.mxu0 0.0
    %4128 = vmatprep.subr.mxu0 0.0
    %4129 = vmatpush1.msra.mxu0 0.0
    %4130 = vmatprep.subr.mxu0 0.0
    %4131 = vmatpush1.msra.mxu0 0.0
    %4132 = vmatprep.subr.mxu0 0.0
    %4133 = vmatpush1.msra.mxu0 0.0
    %4134 = vmatprep.subr.mxu0 0.0
    %4135 = vmatpush1.msra.mxu0 0.0
    %4136 = vmatprep.subr.mxu0 0.0
    %4137 = vmatpush1.msra.mxu0 0.0
    %4138 = vmatprep.subr.mxu0 0.0
    %4139 = vmatpush1.msra.mxu0 0.0
    %4140 = vmatprep.subr.mxu0 0.0
    %4141 = vmatpush1.msra.mxu0 0.0
    %4142 = vmatprep.subr.mxu0 0.0
    %4143 = vmatpush1.msra.mxu0 0.0
    %4144 = vmatprep.subr.mxu0 0.0
    %4145 = vmatpush1.msra.mxu0 0.0
    %4146 = vmatprep.subr.mxu0 0.0
    %4147 = vmatpush1.msra.mxu0 0.0
    %v4148 = vand.u32 %v3141, 4294901760
    %v4149 = vsub.f32 %v3141, %v4148
    %4150 = vmatprep.subr.mxu0 %v4149
    %v4151 = vand.u32 %v3140, 4294901760
    %v4152 = vsub.f32 %v3140, %v4151
    %4153 = vmatpush1.msra.mxu0 %v4152
    %v4154 = vand.u32 %v3137, 4294901760
    %v4155 = vsub.f32 %v3137, %v4154
    %4156 = vmatprep.subr.mxu0 %v4155
    %v4157 = vand.u32 %v3136, 4294901760
    %v4158 = vsub.f32 %v3136, %v4157
    %4159 = vmatpush1.msra.mxu0 %v4158
    %v4160 = vand.u32 %v3133, 4294901760
    %v4161 = vsub.f32 %v3133, %v4160
    %4162 = vmatprep.subr.mxu0 %v4161
    %v4163 = vand.u32 %v3132, 4294901760
    %v4164 = vsub.f32 %v3132, %v4163
    %4165 = vmatpush1.msra.mxu0 %v4164
    %v4166 = vand.u32 %v3129, 4294901760
    %v4167 = vsub.f32 %v3129, %v4166
    %4168 = vmatprep.subr.mxu0 %v4167
    %v4169 = vand.u32 %v3128, 4294901760
    %v4170 = vsub.f32 %v3128, %v4169
    %4171 = vmatpush1.msra.mxu0 %v4170
    %4172 = vmatprep.subr.mxu0 0.0
    %4173 = vmatpush2.msra.mxu0 0.0
    %4174 = vmatprep.subr.mxu0 0.0
    %4175 = vmatpush2.msra.mxu0 0.0
    %4176 = vmatprep.subr.mxu0 0.0
    %4177 = vmatpush2.msra.mxu0 0.0
    %4178 = vmatprep.subr.mxu0 0.0
    %4179 = vmatpush2.msra.mxu0 0.0
    %4180 = vmatprep.subr.mxu0 0.0
    %4181 = vmatpush2.msra.mxu0 0.0
    %4182 = vmatprep.subr.mxu0 0.0
    %4183 = vmatpush2.msra.mxu0 0.0
    %4184 = vmatprep.subr.mxu0 0.0
    %4185 = vmatpush2.msra.mxu0 0.0
    %4186 = vmatprep.subr.mxu0 0.0
    %4187 = vmatpush2.msra.mxu0 0.0
    %4188 = vmatprep.subr.mxu0 0.0
    %4189 = vmatpush2.msra.mxu0 0.0
    %4190 = vmatprep.subr.mxu0 0.0
    %4191 = vmatpush2.msra.mxu0 0.0
    %4192 = vmatprep.subr.mxu0 0.0
    %4193 = vmatpush2.msra.mxu0 0.0
    %4194 = vmatprep.subr.mxu0 0.0
    %4195 = vmatpush2.msra.mxu0 0.0
    %4196 = vmatprep.subr.mxu0 0.0
    %4197 = vmatpush2.msra.mxu0 0.0
    %4198 = vmatprep.subr.mxu0 0.0
    %4199 = vmatpush2.msra.mxu0 0.0
    %4200 = vmatprep.subr.mxu0 0.0
    %4201 = vmatpush2.msra.mxu0 0.0
    %4202 = vmatprep.subr.mxu0 0.0
    %4203 = vmatpush2.msra.mxu0 0.0
    %4204 = vmatprep.mubr.f32.mxu0 0.0
    %v4205 = vand.u32 %v3173, 4294901760
    %v4206 = vsub.f32 %v3173, %v4205
    %4207 = vmatmul.mubr.f32.gmra.mxu0 %v4206
    %v4208 = vpop.f32.mrf.mxu0
    %v4209 = vadd.f32 %v4099, %v4208
    %v4210 = vpop.f32.mrf.mxu0
    %v4211 = vadd.f32 %v4101, %v4210
    %4212 = vmatprep.mubr.f32.mxu0 0.0
    %v4213 = vand.u32 %v3176, 4294901760
    %v4214 = vsub.f32 %v3176, %v4213
    %4215 = vmatmul.mubr.f32.gmra.mxu0 %v4214
    %v4216 = vpop.f32.mrf.mxu0
    %v4217 = vadd.f32 %v4106, %v4216
    %v4218 = vpop.f32.mrf.mxu0
    %v4219 = vadd.f32 %v4108, %v4218
    %4220 = vmatprep.mubr.f32.mxu0 0.0
    %v4221 = vand.u32 %v3179, 4294901760
    %v4222 = vsub.f32 %v3179, %v4221
    %4223 = vmatmul.mubr.f32.gmra.mxu0 %v4222
    %v4224 = vpop.f32.mrf.mxu0
    %v4225 = vadd.f32 %v4113, %v4224
    %v4226 = vpop.f32.mrf.mxu0
    %v4227 = vadd.f32 %v4115, %v4226
    %4228 = vmatprep.mubr.f32.mxu0 0.0
    %v4229 = vand.u32 %v3182, 4294901760
    %v4230 = vsub.f32 %v3182, %v4229
    %4231 = vmatmul.mubr.f32.gmra.mxu0 %v4230
    %v4232 = vpop.f32.mrf.mxu0
    %v4233 = vadd.f32 %v4120, %v4232
    %v4234 = vpop.f32.mrf.mxu0
    %v4235 = vadd.f32 %v4122, %v4234
    %4236 = vdwg.mxu0
    %4237 = vmatprep.subr.mxu0 0.0
    %4238 = vmatpush1.msra.mxu0 0.0
    %4239 = vmatprep.subr.mxu0 0.0
    %4240 = vmatpush1.msra.mxu0 0.0
    %4241 = vmatprep.subr.mxu0 0.0
    %4242 = vmatpush1.msra.mxu0 0.0
    %4243 = vmatprep.subr.mxu0 0.0
    %4244 = vmatpush1.msra.mxu0 0.0
    %4245 = vmatprep.subr.mxu0 0.0
    %4246 = vmatpush1.msra.mxu0 0.0
    %4247 = vmatprep.subr.mxu0 0.0
    %4248 = vmatpush1.msra.mxu0 0.0
    %4249 = vmatprep.subr.mxu0 0.0
    %4250 = vmatpush1.msra.mxu0 0.0
    %4251 = vmatprep.subr.mxu0 0.0
    %4252 = vmatpush1.msra.mxu0 0.0
    %4253 = vmatprep.subr.mxu0 0.0
    %4254 = vmatpush1.msra.mxu0 0.0
    %4255 = vmatprep.subr.mxu0 0.0
    %4256 = vmatpush1.msra.mxu0 0.0
    %4257 = vmatprep.subr.mxu0 0.0
    %4258 = vmatpush1.msra.mxu0 0.0
    %4259 = vmatprep.subr.mxu0 0.0
    %4260 = vmatpush1.msra.mxu0 0.0
    %v4261 = vand.u32 %v3141, 4294901760
    %4262 = vmatprep.subr.mxu0 %v4261
    %v4263 = vand.u32 %v3140, 4294901760
    %4264 = vmatpush1.msra.mxu0 %v4263
    %v4265 = vand.u32 %v3137, 4294901760
    %4266 = vmatprep.subr.mxu0 %v4265
    %v4267 = vand.u32 %v3136, 4294901760
    %4268 = vmatpush1.msra.mxu0 %v4267
    %v4269 = vand.u32 %v3133, 4294901760
    %4270 = vmatprep.subr.mxu0 %v4269
    %v4271 = vand.u32 %v3132, 4294901760
    %4272 = vmatpush1.msra.mxu0 %v4271
    %v4273 = vand.u32 %v3129, 4294901760
    %4274 = vmatprep.subr.mxu0 %v4273
    %v4275 = vand.u32 %v3128, 4294901760
    %4276 = vmatpush1.msra.mxu0 %v4275
    %4277 = vmatprep.subr.mxu0 0.0
    %4278 = vmatpush2.msra.mxu0 0.0
    %4279 = vmatprep.subr.mxu0 0.0
    %4280 = vmatpush2.msra.mxu0 0.0
    %4281 = vmatprep.subr.mxu0 0.0
    %4282 = vmatpush2.msra.mxu0 0.0
    %4283 = vmatprep.subr.mxu0 0.0
    %4284 = vmatpush2.msra.mxu0 0.0
    %4285 = vmatprep.subr.mxu0 0.0
    %4286 = vmatpush2.msra.mxu0 0.0
    %4287 = vmatprep.subr.mxu0 0.0
    %4288 = vmatpush2.msra.mxu0 0.0
    %4289 = vmatprep.subr.mxu0 0.0
    %4290 = vmatpush2.msra.mxu0 0.0
    %4291 = vmatprep.subr.mxu0 0.0
    %4292 = vmatpush2.msra.mxu0 0.0
    %4293 = vmatprep.subr.mxu0 0.0
    %4294 = vmatpush2.msra.mxu0 0.0
    %4295 = vmatprep.subr.mxu0 0.0
    %4296 = vmatpush2.msra.mxu0 0.0
    %4297 = vmatprep.subr.mxu0 0.0
    %4298 = vmatpush2.msra.mxu0 0.0
    %4299 = vmatprep.subr.mxu0 0.0
    %4300 = vmatpush2.msra.mxu0 0.0
    %4301 = vmatprep.subr.mxu0 0.0
    %4302 = vmatpush2.msra.mxu0 0.0
    %4303 = vmatprep.subr.mxu0 0.0
    %4304 = vmatpush2.msra.mxu0 0.0
    %4305 = vmatprep.subr.mxu0 0.0
    %4306 = vmatpush2.msra.mxu0 0.0
    %4307 = vmatprep.subr.mxu0 0.0
    %4308 = vmatpush2.msra.mxu0 0.0
    %4309 = vmatprep.mubr.f32.mxu0 0.0
    %v4310 = vand.u32 %v3173, 4294901760
    %v4311 = vsub.f32 %v3173, %v4310
    %v4312 = vand.u32 %v4311, 4294901760
    %4313 = vmatmul.mubr.f32.gmra.mxu0 %v4312
    %v4314 = vpop.f32.mrf.mxu0
    %v4315 = vadd.f32 %v4209, %v4314
    %v4316 = vpop.f32.mrf.mxu0
    %v4317 = vadd.f32 %v4211, %v4316
    %4318 = vmatprep.mubr.f32.mxu0 0.0
    %v4319 = vand.u32 %v3176, 4294901760
    %v4320 = vsub.f32 %v3176, %v4319
    %v4321 = vand.u32 %v4320, 4294901760
    %4322 = vmatmul.mubr.f32.gmra.mxu0 %v4321
    %v4323 = vpop.f32.mrf.mxu0
    %v4324 = vadd.f32 %v4217, %v4323
    %v4325 = vpop.f32.mrf.mxu0
    %v4326 = vadd.f32 %v4219, %v4325
    %4327 = vmatprep.mubr.f32.mxu0 0.0
    %v4328 = vand.u32 %v3179, 4294901760
    %v4329 = vsub.f32 %v3179, %v4328
    %v4330 = vand.u32 %v4329, 4294901760
    %4331 = vmatmul.mubr.f32.gmra.mxu0 %v4330
    %v4332 = vpop.f32.mrf.mxu0
    %v4333 = vadd.f32 %v4225, %v4332
    %v4334 = vpop.f32.mrf.mxu0
    %v4335 = vadd.f32 %v4227, %v4334
    %4336 = vmatprep.mubr.f32.mxu0 0.0
    %v4337 = vand.u32 %v3182, 4294901760
    %v4338 = vsub.f32 %v3182, %v4337
    %v4339 = vand.u32 %v4338, 4294901760
    %4340 = vmatmul.mubr.f32.gmra.mxu0 %v4339
    %v4341 = vpop.f32.mrf.mxu0
    %v4342 = vadd.f32 %v4233, %v4341
    %v4343 = vpop.f32.mrf.mxu0
    %v4344 = vadd.f32 %v4235, %v4343
    %4345 = vdwg.mxu0
    %4346 = vmatprep.subr.mxu0 0.0
    %4347 = vmatpush1.msra.mxu0 0.0
    %4348 = vmatprep.subr.mxu0 0.0
    %4349 = vmatpush1.msra.mxu0 0.0
    %4350 = vmatprep.subr.mxu0 0.0
    %4351 = vmatpush1.msra.mxu0 0.0
    %4352 = vmatprep.subr.mxu0 0.0
    %4353 = vmatpush1.msra.mxu0 0.0
    %4354 = vmatprep.subr.mxu0 0.0
    %4355 = vmatpush1.msra.mxu0 0.0
    %4356 = vmatprep.subr.mxu0 0.0
    %4357 = vmatpush1.msra.mxu0 0.0
    %4358 = vmatprep.subr.mxu0 0.0
    %4359 = vmatpush1.msra.mxu0 0.0
    %4360 = vmatprep.subr.mxu0 0.0
    %4361 = vmatpush1.msra.mxu0 0.0
    %4362 = vmatprep.subr.mxu0 0.0
    %4363 = vmatpush1.msra.mxu0 0.0
    %4364 = vmatprep.subr.mxu0 0.0
    %4365 = vmatpush1.msra.mxu0 0.0
    %4366 = vmatprep.subr.mxu0 0.0
    %4367 = vmatpush1.msra.mxu0 0.0
    %4368 = vmatprep.subr.mxu0 0.0
    %4369 = vmatpush1.msra.mxu0 0.0
    %v4370 = vand.u32 %v3141, 4294901760
    %v4371 = vsub.f32 %v3141, %v4370
    %v4372 = vand.u32 %v4371, 4294901760
    %4373 = vmatprep.subr.mxu0 %v4372
    %v4374 = vand.u32 %v3140, 4294901760
    %v4375 = vsub.f32 %v3140, %v4374
    %v4376 = vand.u32 %v4375, 4294901760
    %4377 = vmatpush1.msra.mxu0 %v4376
    %v4378 = vand.u32 %v3137, 4294901760
    %v4379 = vsub.f32 %v3137, %v4378
    %v4380 = vand.u32 %v4379, 4294901760
    %4381 = vmatprep.subr.mxu0 %v4380
    %v4382 = vand.u32 %v3136, 4294901760
    %v4383 = vsub.f32 %v3136, %v4382
    %v4384 = vand.u32 %v4383, 4294901760
    %4385 = vmatpush1.msra.mxu0 %v4384
    %v4386 = vand.u32 %v3133, 4294901760
    %v4387 = vsub.f32 %v3133, %v4386
    %v4388 = vand.u32 %v4387, 4294901760
    %4389 = vmatprep.subr.mxu0 %v4388
    %v4390 = vand.u32 %v3132, 4294901760
    %v4391 = vsub.f32 %v3132, %v4390
    %v4392 = vand.u32 %v4391, 4294901760
    %4393 = vmatpush1.msra.mxu0 %v4392
    %v4394 = vand.u32 %v3129, 4294901760
    %v4395 = vsub.f32 %v3129, %v4394
    %v4396 = vand.u32 %v4395, 4294901760
    %4397 = vmatprep.subr.mxu0 %v4396
    %v4398 = vand.u32 %v3128, 4294901760
    %v4399 = vsub.f32 %v3128, %v4398
    %v4400 = vand.u32 %v4399, 4294901760
    %4401 = vmatpush1.msra.mxu0 %v4400
    %4402 = vmatprep.subr.mxu0 0.0
    %4403 = vmatpush2.msra.mxu0 0.0
    %4404 = vmatprep.subr.mxu0 0.0
    %4405 = vmatpush2.msra.mxu0 0.0
    %4406 = vmatprep.subr.mxu0 0.0
    %4407 = vmatpush2.msra.mxu0 0.0
    %4408 = vmatprep.subr.mxu0 0.0
    %4409 = vmatpush2.msra.mxu0 0.0
    %4410 = vmatprep.subr.mxu0 0.0
    %4411 = vmatpush2.msra.mxu0 0.0
    %4412 = vmatprep.subr.mxu0 0.0
    %4413 = vmatpush2.msra.mxu0 0.0
    %4414 = vmatprep.subr.mxu0 0.0
    %4415 = vmatpush2.msra.mxu0 0.0
    %4416 = vmatprep.subr.mxu0 0.0
    %4417 = vmatpush2.msra.mxu0 0.0
    %4418 = vmatprep.subr.mxu0 0.0
    %4419 = vmatpush2.msra.mxu0 0.0
    %4420 = vmatprep.subr.mxu0 0.0
    %4421 = vmatpush2.msra.mxu0 0.0
    %4422 = vmatprep.subr.mxu0 0.0
    %4423 = vmatpush2.msra.mxu0 0.0
    %4424 = vmatprep.subr.mxu0 0.0
    %4425 = vmatpush2.msra.mxu0 0.0
    %4426 = vmatprep.subr.mxu0 0.0
    %4427 = vmatpush2.msra.mxu0 0.0
    %4428 = vmatprep.subr.mxu0 0.0
    %4429 = vmatpush2.msra.mxu0 0.0
    %4430 = vmatprep.subr.mxu0 0.0
    %4431 = vmatpush2.msra.mxu0 0.0
    %4432 = vmatprep.subr.mxu0 0.0
    %4433 = vmatpush2.msra.mxu0 0.0
    %4434 = vmatprep.mubr.f32.mxu0 0.0
    %v4435 = vand.u32 %v3173, 4294901760
    %4436 = vmatmul.mubr.f32.gmra.mxu0 %v4435
    %v4437 = vpop.f32.mrf.mxu0
    %v4438 = vadd.f32 %v4315, %v4437
    %v4439 = vpop.f32.mrf.mxu0
    %v4440 = vadd.f32 %v4317, %v4439
    %4441 = vmatprep.mubr.f32.mxu0 0.0
    %v4442 = vand.u32 %v3176, 4294901760
    %4443 = vmatmul.mubr.f32.gmra.mxu0 %v4442
    %v4444 = vpop.f32.mrf.mxu0
    %v4445 = vadd.f32 %v4324, %v4444
    %v4446 = vpop.f32.mrf.mxu0
    %v4447 = vadd.f32 %v4326, %v4446
    %4448 = vmatprep.mubr.f32.mxu0 0.0
    %v4449 = vand.u32 %v3179, 4294901760
    %4450 = vmatmul.mubr.f32.gmra.mxu0 %v4449
    %v4451 = vpop.f32.mrf.mxu0
    %v4452 = vadd.f32 %v4333, %v4451
    %v4453 = vpop.f32.mrf.mxu0
    %v4454 = vadd.f32 %v4335, %v4453
    %4455 = vmatprep.mubr.f32.mxu0 0.0
    %v4456 = vand.u32 %v3182, 4294901760
    %4457 = vmatmul.mubr.f32.gmra.mxu0 %v4456
    %v4458 = vpop.f32.mrf.mxu0
    %v4459 = vadd.f32 %v4342, %v4458
    %v4460 = vpop.f32.mrf.mxu0
    %v4461 = vadd.f32 %v4344, %v4460
    %4462 = vdwg.mxu0
    %4463 = vmatprep.subr.mxu0 0.0
    %4464 = vmatpush1.msra.mxu0 0.0
    %4465 = vmatprep.subr.mxu0 0.0
    %4466 = vmatpush1.msra.mxu0 0.0
    %4467 = vmatprep.subr.mxu0 0.0
    %4468 = vmatpush1.msra.mxu0 0.0
    %4469 = vmatprep.subr.mxu0 0.0
    %4470 = vmatpush1.msra.mxu0 0.0
    %4471 = vmatprep.subr.mxu0 0.0
    %4472 = vmatpush1.msra.mxu0 0.0
    %4473 = vmatprep.subr.mxu0 0.0
    %4474 = vmatpush1.msra.mxu0 0.0
    %4475 = vmatprep.subr.mxu0 0.0
    %4476 = vmatpush1.msra.mxu0 0.0
    %4477 = vmatprep.subr.mxu0 0.0
    %4478 = vmatpush1.msra.mxu0 0.0
    %4479 = vmatprep.subr.mxu0 0.0
    %4480 = vmatpush1.msra.mxu0 0.0
    %4481 = vmatprep.subr.mxu0 0.0
    %4482 = vmatpush1.msra.mxu0 0.0
    %4483 = vmatprep.subr.mxu0 0.0
    %4484 = vmatpush1.msra.mxu0 0.0
    %4485 = vmatprep.subr.mxu0 0.0
    %4486 = vmatpush1.msra.mxu0 0.0
    %v4487 = vand.u32 %v3141, 4294901760
    %4488 = vmatprep.subr.mxu0 %v4487
    %v4489 = vand.u32 %v3140, 4294901760
    %4490 = vmatpush1.msra.mxu0 %v4489
    %v4491 = vand.u32 %v3137, 4294901760
    %4492 = vmatprep.subr.mxu0 %v4491
    %v4493 = vand.u32 %v3136, 4294901760
    %4494 = vmatpush1.msra.mxu0 %v4493
    %v4495 = vand.u32 %v3133, 4294901760
    %4496 = vmatprep.subr.mxu0 %v4495
    %v4497 = vand.u32 %v3132, 4294901760
    %4498 = vmatpush1.msra.mxu0 %v4497
    %v4499 = vand.u32 %v3129, 4294901760
    %4500 = vmatprep.subr.mxu0 %v4499
    %v4501 = vand.u32 %v3128, 4294901760
    %4502 = vmatpush1.msra.mxu0 %v4501
    %4503 = vmatprep.subr.mxu0 0.0
    %4504 = vmatpush2.msra.mxu0 0.0
    %4505 = vmatprep.subr.mxu0 0.0
    %4506 = vmatpush2.msra.mxu0 0.0
    %4507 = vmatprep.subr.mxu0 0.0
    %4508 = vmatpush2.msra.mxu0 0.0
    %4509 = vmatprep.subr.mxu0 0.0
    %4510 = vmatpush2.msra.mxu0 0.0
    %4511 = vmatprep.subr.mxu0 0.0
    %4512 = vmatpush2.msra.mxu0 0.0
    %4513 = vmatprep.subr.mxu0 0.0
    %4514 = vmatpush2.msra.mxu0 0.0
    %4515 = vmatprep.subr.mxu0 0.0
    %4516 = vmatpush2.msra.mxu0 0.0
    %4517 = vmatprep.subr.mxu0 0.0
    %4518 = vmatpush2.msra.mxu0 0.0
    %4519 = vmatprep.subr.mxu0 0.0
    %4520 = vmatpush2.msra.mxu0 0.0
    %4521 = vmatprep.subr.mxu0 0.0
    %4522 = vmatpush2.msra.mxu0 0.0
    %4523 = vmatprep.subr.mxu0 0.0
    %4524 = vmatpush2.msra.mxu0 0.0
    %4525 = vmatprep.subr.mxu0 0.0
    %4526 = vmatpush2.msra.mxu0 0.0
    %4527 = vmatprep.subr.mxu0 0.0
    %4528 = vmatpush2.msra.mxu0 0.0
    %4529 = vmatprep.subr.mxu0 0.0
    %4530 = vmatpush2.msra.mxu0 0.0
    %4531 = vmatprep.subr.mxu0 0.0
    %4532 = vmatpush2.msra.mxu0 0.0
    %4533 = vmatprep.subr.mxu0 0.0
    %4534 = vmatpush2.msra.mxu0 0.0
    %4535 = vmatprep.mubr.f32.mxu0 0.0
    %v4536 = vand.u32 %v3173, 4294901760
    %4537 = vmatmul.mubr.f32.gmra.mxu0 %v4536
    %v4538 = vpop.f32.mrf.mxu0
    %v4539 = vadd.f32 %v4438, %v4538
    %v4540 = vpop.f32.mrf.mxu0
    %v4541 = vadd.f32 %v4440, %v4540
    %4542 = vmatprep.mubr.f32.mxu0 0.0
    %v4543 = vand.u32 %v3176, 4294901760
    %4544 = vmatmul.mubr.f32.gmra.mxu0 %v4543
    %v4545 = vpop.f32.mrf.mxu0
    %v4546 = vadd.f32 %v4445, %v4545
    %v4547 = vpop.f32.mrf.mxu0
    %v4548 = vadd.f32 %v4447, %v4547
    %4549 = vmatprep.mubr.f32.mxu0 0.0
    %v4550 = vand.u32 %v3179, 4294901760
    %4551 = vmatmul.mubr.f32.gmra.mxu0 %v4550
    %v4552 = vpop.f32.mrf.mxu0
    %v4553 = vadd.f32 %v4452, %v4552
    %v4554 = vpop.f32.mrf.mxu0
    %v4555 = vadd.f32 %v4454, %v4554
    %4556 = vmatprep.mubr.f32.mxu0 0.0
    %v4557 = vand.u32 %v3182, 4294901760
    %4558 = vmatmul.mubr.f32.gmra.mxu0 %v4557
    %v4559 = vpop.f32.mrf.mxu0
    %v4560 = vadd.f32 %v4459, %v4559
    %v4561 = vpop.f32.mrf.mxu0
    %v4562 = vadd.f32 %v4461, %v4561
    %4563 = vdwg.mxu0
    %v4564 = vtanh.pop %v3849
    %v4565 = vtanh.pop %v3851
    %v4566 = vtanh.pop %v4539
    %v4567 = vtanh.pop %v4541
    %v4568 = vtanh.pop %v3856
    %v4569 = vtanh.pop %v3858
    %v4570 = vtanh.pop %v4546
    %v4571 = vtanh.pop %v4548
    %v4572 = vtanh.pop %v3863
    %v4573 = vtanh.pop %v3865
    %v4574 = vtanh.pop %v4553
    %v4575 = vtanh.pop %v4555
    %v4576 = vtanh.pop %v3870
    %v4577 = vtanh.pop %v3872
    %v4578 = vtanh.pop %v4560
    %v4579 = vtanh.pop %v4562
    %v4580 = vld [vmem:[%s3] sm:$0xff]
    %v4581 = vld [vmem:[%s3 + $0x8] sm:$0xff]
    %v4582 = vld [vmem:[%s3 + $0x10] sm:$0xff]
    %v4583 = vld [vmem:[%s3 + $0x18] sm:$0xff]
    %4585 = vset.pattern.permute.xlu0 0
    %4586 = vperm.xlu0 %4585, %v4580
    %v4587 = vpop.permute.xlu0 %4586
    %4590 = vset.pattern.permute.xlu0 0
    %4591 = vperm.xlu0 %4590, %v4581
    %v4592 = vpop.permute.xlu0 %4591
    %4595 = vset.pattern.permute.xlu0 0
    %4596 = vperm.xlu0 %4595, %v4582
    %v4597 = vpop.permute.xlu0 %4596
    %4600 = vset.pattern.permute.xlu0 0
    %4601 = vperm.xlu0 %4600, %v4583
    %v4602 = vpop.permute.xlu0 %4601
    %v4604 = vmul.f32 %v4564, %v4587
    %v4605 = vmul.f32 %v4565, %v4587
    %v4606 = vmul.f32 %v4566, %v4587
    %v4607 = vmul.f32 %v4567, %v4587
    %v4608 = vmul.f32 %v4568, %v4592
    %v4609 = vmul.f32 %v4569, %v4592
    %v4610 = vmul.f32 %v4570, %v4592
    %v4611 = vmul.f32 %v4571, %v4592
    %v4612 = vmul.f32 %v4572, %v4597
    %v4613 = vmul.f32 %v4573, %v4597
    %v4614 = vmul.f32 %v4574, %v4597
    %v4615 = vmul.f32 %v4575, %v4597
    %v4616 = vmul.f32 %v4576, %v4602
    %v4617 = vmul.f32 %v4577, %v4602
    %v4618 = vmul.f32 %v4578, %v4602
    %v4619 = vmul.f32 %v4579, %v4602
    %v4620 = vadd.f32 %v4604, %v4608
    %v4621 = vadd.f32 %v4620, %v4612
    %v4622 = vadd.f32 %v4621, %v4616
    %v4623 = vrot.slane %v4622, 4
    %v4624 = vadd.f32 %v4622, %v4623
    %v4625 = vrot.slane %v4624, 2
    %v4626 = vadd.f32 %v4624, %v4625
    %v4627 = vrot.slane %v4626, 1
    %v4628 = vadd.f32 %v4626, %v4627
    %v4629 = vadd.f32 %v4605, %v4609
    %v4630 = vadd.f32 %v4629, %v4613
    %v4631 = vadd.f32 %v4630, %v4617
    %v4632 = vrot.slane %v4631, 4
    %v4633 = vadd.f32 %v4631, %v4632
    %v4634 = vrot.slane %v4633, 2
    %v4635 = vadd.f32 %v4633, %v4634
    %v4636 = vrot.slane %v4635, 1
    %v4637 = vadd.f32 %v4635, %v4636
    %v4638 = vadd.f32 %v4606, %v4610
    %v4639 = vadd.f32 %v4638, %v4614
    %v4640 = vadd.f32 %v4639, %v4618
    %v4641 = vrot.slane %v4640, 4
    %v4642 = vadd.f32 %v4640, %v4641
    %v4643 = vrot.slane %v4642, 2
    %v4644 = vadd.f32 %v4642, %v4643
    %v4645 = vrot.slane %v4644, 1
    %v4646 = vadd.f32 %v4644, %v4645
    %v4647 = vadd.f32 %v4607, %v4611
    %v4648 = vadd.f32 %v4647, %v4615
    %v4649 = vadd.f32 %v4648, %v4619
    %v4650 = vrot.slane %v4649, 4
    %v4651 = vadd.f32 %v4649, %v4650
    %v4652 = vrot.slane %v4651, 2
    %v4653 = vadd.f32 %v4651, %v4652
    %v4654 = vrot.slane %v4653, 1
    %v4655 = vadd.f32 %v4653, %v4654
    %v4656 = vld [vmem:[#allocation2] sm:$0x1]
    %4658 = vset.pattern.permute.xlu0 0
    %4659 = vperm.xlu0 %4658, %v4656
    %v4660 = vpop.permute.xlu0 %4659
    %v4662 = vlaneseq
    %v4663 = vshrl.u32 %v4662, 7
    %v4664 = vsub.s32 0, %v4663
    %v4665 = vrot.slane %v4660, %v4664
    %v4666 = vadd.f32 %v4628, %v4665
    %v4667 = vadd.f32 %v4637, %v4665
    %v4668 = vadd.f32 %v4646, %v4665
    %v4669 = vadd.f32 %v4655, %v4665
    %v4674 = vcombine.low %v4666, %v4667
    %v4675 = vcombine.low %v4668, %v4669
    %v4677 = vunpack.c.l.s4 1966171168
    %v4678 = vunpack.c.0.s8 %v4677
    %v4679 = vlaneseq
    %v4680 = vshrl.u32 %v4679, 7
    %v4681 = vsub.s32 %v4678, %v4680
    %v4682 = vrot.slane %v4674, %v4681
    %v4684 = vunpack.c.l.s4 1966171168
    %v4685 = vunpack.c.0.s8 %v4684
    %v4686 = vlaneseq
    %v4687 = vshrl.u32 %v4686, 7
    %v4688 = vsub.s32 %v4685, %v4687
    %v4689 = vrot.slane %v4675, %v4688
    %v4690 = vcombine.low %v4682, %v4689
    %v4692 = vunpack.c.l.s4 1966171168
    %v4693 = vunpack.c.0.s8 %v4692
    %v4694 = vlaneseq
    %v4695 = vshrl.u32 %v4694, 7
    %v4696 = vsub.s32 %v4693, %v4695
    %v4697 = vrot.slane %v4690, %v4696
    %v4699 = vlaneseq
    %vm4700 = vcmp.ge.s32.totalorder %v4699, 0
    %vm4701 = vcmp.lt.s32.totalorder %v4699, 512
    %vm4702 = vmand %vm4700, %vm4701
    %4703 = vst.msk [vmem:[#allocation3] sm:$0xf] %vm4702, %v4697
    // Predicated region
    $region26: #{drrnn_forward.2} parent=1 // pred_check
      _
    $region27: #{drrnn_forward.2} parent=1 // pred_check_branch
      %4705 = sbr.rel (0) target = $region29
    $region28: #{drrnn_forward.2} parent=1 // pred_region
      %s4707 = ssub.s32 64, 64
      %4708 = vsyncadd [#allocation4], %s4707
      %s4710 = sshll.u32 [#allocation3], 4
      %s4711 = int_to_ptr.vmem [resolvable:$true] %s4710
      %4713 = dma.vmem_to_hbm [thread:$0]  %s4711, 64, %s6, [#allocation4]
    $region29: #{drrnn_forward.2} parent=1 // pred_fallthru
      _
    // Predicated region
    $region30: #{drrnn_forward.2} parent=1 // pred_check
      _
    $region31: #{drrnn_forward.2} parent=1 // pred_check_branch
      %4715 = sbr.rel (0) target = $region33
    $region32: #{drrnn_forward.2} parent=1 // pred_region
      %4716 = dma.done [#allocation4], 64
    $region33: #{drrnn_forward.2} parent=1 // pred_fallthru
      _
    %4717 = vsyncpa [#allocation4], 1

</llo_original>
